<compile_context>
chip_gen: v7x
topology: tpu7x:2x2x1
jax: 0.10.0
libtpu: 0.0.40
codegen_flags: <defaults>
</compile_context>

<pallas_src>
import functools

import jax
import jax.numpy as jnp
from jax.experimental import pallas as pl
from jax.experimental.pallas import tpu as pltpu


def _dense_gnn_kernel(x_ref, adj_ref, w1_ref, b1_ref, wm1_ref, bm1_ref,
                      w2_ref, b2_ref, wm2_ref, bm2_ref, out_ref, cat_ref,
                      *, fuse_mlp2):
    bt, n, f_in = x_ref.shape
    h = w1_ref.shape[1]

    x = x_ref[...]            # (BT, N, F_in) bf16
    adj = adj_ref[...]        # (BT, N, N)    bf16 (binary entries -> exact)

    # Symmetric-normalization factors: f32 degree accumulation from the bf16
    # adjacency (exact for 0/1 entries), clamp(min=1)^-1/2.
    deg = jnp.sum(adj.astype(jnp.float32), axis=-1, keepdims=True)   # (BT, N, 1)
    dinv = jax.lax.rsqrt(jnp.maximum(deg, 1.0))                      # (BT, N, 1)

    def relu(a):
        return jnp.maximum(a, 0.0)

    def aggregate(v3d_f32):
        """adj_n @ v  ==  dinv * (A @ (dinv * v))  (no in-kernel transpose)."""
        vv = (dinv * v3d_f32).astype(jnp.bfloat16)
        return dinv * jnp.einsum("bij,bjm->bim", adj, vv,
                                 preferred_element_type=jnp.float32)

    def flat(a3d):
        return a3d.reshape(bt * n, a3d.shape[-1])

    def unflat(a2d):
        return a2d.reshape(bt, n, a2d.shape[-1])

    # Node features flattened to (bt*N, F) so the MXU M-dim is large.
    x2d = flat(x)                                                    # bf16

    # ---- conv1: DenseGCNConv(dim_in -> hidden), add_loop=False ----
    xw1 = unflat(jnp.dot(x2d, w1_ref[...],
                         preferred_element_type=jnp.float32))        # (BT,N,h) f32
    x1 = aggregate(xw1) + b1_ref[...]                                # (BT,N,h) f32

    # ---- mlp1: ReLU -> Linear(hidden + dim_in -> hidden) -> ReLU ----
    # Linear(cat[x1, x]) as two K-blocks of Wm1 (f_in is not lane-aligned).
    x1r_bf = relu(flat(x1)).astype(jnp.bfloat16)
    xr_bf = relu(x2d)                                                # bf16 already
    x2_flat = (jnp.dot(x1r_bf, wm1_ref[0:h, :],
                       preferred_element_type=jnp.float32)
               + jnp.dot(xr_bf, wm1_ref[h:h + f_in, :],
                         preferred_element_type=jnp.float32)
               + bm1_ref[...])
    x2_bf = relu(x2_flat).astype(jnp.bfloat16)      # cast once; reused twice

    # ---- conv2: DenseGCNConv(hidden -> hidden), add_loop=False ----
    x2w2 = unflat(jnp.dot(x2_bf, w2_ref[...],
                          preferred_element_type=jnp.float32))
    x3 = aggregate(x2w2) + b2_ref[...]

    # ---- mlp2: ReLU -> Linear(2*hidden -> dim_out) ----
    x3r_bf = relu(flat(x3)).astype(jnp.bfloat16)
    if fuse_mlp2:
        # Lane-aligned "concat": two plain stores into the (bt*N, 2h) scratch,
        # then one K=2h matmul (full MXU contraction depth on v6e/v7x).
        cat_ref[:, 0:h] = x3r_bf
        cat_ref[:, h:2 * h] = x2_bf
        out2d = (jnp.dot(cat_ref[...], wm2_ref[...],
                         preferred_element_type=jnp.float32)
                 + bm2_ref[...])
    else:
        out2d = (jnp.dot(x3r_bf, wm2_ref[0:h, :],
                         preferred_element_type=jnp.float32)
                 + jnp.dot(x2_bf, wm2_ref[h:2 * h, :],
                           preferred_element_type=jnp.float32)
                 + bm2_ref[...])

    out_ref[...] = out2d.reshape(bt, n, -1).astype(out_ref.dtype)


def _vmem_capacity_bytes():
    try:
        cap = getattr(pltpu.get_tpu_info(), "vmem_capacity_bytes", None)
        if cap:
            return int(cap)
    except Exception:
        pass
    return 64 * 1024 * 1024   # conservative fallback (v7x per-core VMEM)


def dense_gnn_forward(x, adj, params, *, block_b):
    B, N, f_in = x.shape
    h = params["w1"].shape[1]
    f_out = params["wm2"].shape[1]
    assert params["wm1"].shape == (h + f_in, h)
    assert params["w2"].shape == (h, h)
    assert params["wm2"].shape == (2 * h, f_out)
    assert B % block_b == 0, "batch must be divisible by block_b"

    bt = block_b
    grid = (B // bt,)
    fuse_mlp2 = (h % 128 == 0)

    # Reduced-precision operands for HBM traffic / MXU (binary adj -> exact).
    x_bf = x.astype(jnp.bfloat16)
    adj_bf = adj.astype(jnp.bfloat16)
    w1 = params["w1"].astype(jnp.bfloat16)
    wm1 = params["wm1"].astype(jnp.bfloat16)
    w2 = params["w2"].astype(jnp.bfloat16)
    wm2 = params["wm2"].astype(jnp.bfloat16)
    b1 = params["b1"].astype(jnp.float32)
    bm1 = params["bm1"].astype(jnp.float32)
    b2 = params["b2"].astype(jnp.float32)
    bm2 = params["bm2"].astype(jnp.float32)

    # Advisory cost estimate so XLA schedules surrounding ops sensibly.
    flops_per_graph = 2 * N * (f_in * h + N * h + (h + f_in) * h
                               + h * h + N * h + 2 * h * f_out)
    weight_elems = f_in * h + (h + f_in) * h + h * h + 2 * h * f_out
    bias_elems = 3 * h + f_out
    bytes_accessed = (2 * B * N * (f_in + N)            # bf16 x + adj
                      + 4 * B * N * f_out               # f32 output
                      + 2 * weight_elems + 4 * bias_elems)
    cost = pl.CostEstimate(flops=B * flops_per_graph,
                           transcendentals=B * N,
                           bytes_accessed=bytes_accessed)

    # Explicit VMEM accounting: double-buffered bf16 in/out blocks, resident
    # weights, live f32 intermediates, concat scratch; cap per-generation.
    bpe16, bpe32 = 2, 4
    weight_bytes = bpe16 * weight_elems + bpe32 * bias_elems
    in_block = bt * N * (f_in + N) * bpe16
    out_block = bt * N * f_out * bpe32
    interm = (bpe32 * (bt * N * N + 6 * bt * N * h)     # deg cast + x1/x2/x3/temps
              + bpe16 * (bt * N * 2 * h))               # concat scratch
    vmem_needed = 2 * (in_block + out_block) + 2 * weight_bytes + interm
    vmem_cap = _vmem_capacity_bytes()
    vmem_limit = int(min(max(int(1.5 * vmem_needed), 32 * 1024 * 1024),
                         int(0.85 * vmem_cap)))

    kernel = functools.partial(_dense_gnn_kernel, fuse_mlp2=fuse_mlp2)

    return pl.pallas_call(
        kernel,
        out_shape=jax.ShapeDtypeStruct((B, N, f_out), jnp.float32),
        grid_spec=pltpu.PrefetchScalarGridSpec(
            num_scalar_prefetch=0,
            grid=grid,
            in_specs=[
                pl.BlockSpec((bt, N, f_in), lambda b: (b, 0, 0)),     # x (bf16)
                pl.BlockSpec((bt, N, N),    lambda b: (b, 0, 0)),     # adj (bf16)
                pl.BlockSpec((f_in, h),     lambda b: (0, 0)),        # W1
                pl.BlockSpec((1, h),        lambda b: (0, 0)),        # b1
                pl.BlockSpec((h + f_in, h), lambda b: (0, 0)),        # Wm1
                pl.BlockSpec((1, h),        lambda b: (0, 0)),        # bm1
                pl.BlockSpec((h, h),        lambda b: (0, 0)),        # W2
                pl.BlockSpec((1, h),        lambda b: (0, 0)),        # b2
                pl.BlockSpec((2 * h, f_out), lambda b: (0, 0)),       # Wm2
                pl.BlockSpec((1, f_out),    lambda b: (0, 0)),        # bm2
            ],
            out_specs=pl.BlockSpec((bt, N, f_out), lambda b: (b, 0, 0)),
            scratch_shapes=[pltpu.VMEM((bt * N, 2 * h), jnp.bfloat16)],
        ),
        compiler_params=pltpu.CompilerParams(
            dimension_semantics=("parallel",),
            vmem_limit_bytes=vmem_limit),
        cost_estimate=cost,
    )(x_bf, adj_bf, w1, b1, wm1, bm1, w2, b2, wm2, bm2)


def dense_gnn_reference(x, adj, params):
    """Pure-JAX (f32) reference mirroring the PyTorch forward."""
    def gcn(feat, w, b):
        deg = jnp.maximum(adj.sum(-1), 1.0)          # clamp(min=1)
        dinv = deg ** -0.5
        adj_n = dinv[..., :, None] * adj * dinv[..., None, :]
        return adj_n @ (feat @ w) + b

    relu = jax.nn.relu
    x1 = gcn(x, params["w1"], params["b1"])
    x2 = relu(relu(jnp.concatenate([x1, x], -1)) @ params["wm1"] + params["bm1"])
    x3 = gcn(x2, params["w2"], params["b2"])
    return relu(jnp.concatenate([x3, x2], -1)) @ params["wm2"] + params["bm2"]


def _glorot(key, shape):
    fan_in, fan_out = shape
    lim = (6.0 / (fan_in + fan_out)) ** 0.5
    return jax.random.uniform(key, shape, jnp.float32, -lim, lim)


if __name__ == "__main__":
    # Small demo shapes.  Feature dims are 128-multiples (lane-dense matmuls and
    # stores); BLOCK_B=16 graphs/step gives a flattened MXU M-dim of bt*N = 256
    # and grid=(2,), so both v7x TensorCores get work.
    B, N = 32, 16
    DIM_IN, DIM_HIDDEN, DIM_OUT = 16, 128, 128
    BLOCK_B = 16

    key = jax.random.PRNGKey(0)
    kx, ka, k1, k2, k3, k4, k5, k6 = jax.random.split(key, 8)

    x = jax.random.normal(kx, (B, N, DIM_IN), jnp.float32)
    adj = (jax.random.uniform(ka, (B, N, N)) > 0.5).astype(jnp.float32)
    adj = jnp.maximum(adj, jnp.swapaxes(adj, -1, -2))   # symmetric binary adjacency

    params = {
        "w1":  _glorot(k1, (DIM_IN, DIM_HIDDEN)),
        "b1":  jnp.zeros((1, DIM_HIDDEN), jnp.float32),       # DenseGCNConv bias (zeros init)
        "wm1": _glorot(k2, (DIM_HIDDEN + DIM_IN, DIM_HIDDEN)),
        "bm1": 0.05 * jax.random.normal(k5, (1, DIM_HIDDEN), jnp.float32),
        "w2":  _glorot(k3, (DIM_HIDDEN, DIM_HIDDEN)),
        "b2":  jnp.zeros((1, DIM_HIDDEN), jnp.float32),
        "wm2": _glorot(k4, (2 * DIM_HIDDEN, DIM_OUT)),
        "bm2": 0.05 * jax.random.normal(k6, (1, DIM_OUT), jnp.float32),
    }

    out = dense_gnn_forward(x, adj, params, block_b=BLOCK_B)
    out = jax.block_until_ready(out)

    ref = dense_gnn_reference(x, adj, params)
    assert out.shape == (B, N, DIM_OUT)
    # Kernel uses bf16 inputs/weights on the MXU (f32 accumulation) vs. an f32
    # reference, so the tolerance is loosened accordingly.
    max_err = float(jnp.max(jnp.abs(out - ref)))
    assert jnp.allclose(out, ref, atol=5e-2, rtol=5e-2), f"mismatch, max abs err {max_err}"

    print("KERNEL_OK")
</pallas_src>

<mosaic_0001>
module attributes {stable_mosaic.version = 11 : i64} {
  func.func @_dense_gnn_kernel(%arg0: i32, %arg1: memref<16x16x16xbf16, #tpu.memory_space<vmem>>, %arg2: memref<16x16x16xbf16, #tpu.memory_space<vmem>>, %arg3: memref<16x128xbf16, #tpu.memory_space<vmem>>, %arg4: memref<1x128xf32, #tpu.memory_space<vmem>>, %arg5: memref<144x128xbf16, #tpu.memory_space<vmem>>, %arg6: memref<1x128xf32, #tpu.memory_space<vmem>>, %arg7: memref<128x128xbf16, #tpu.memory_space<vmem>>, %arg8: memref<1x128xf32, #tpu.memory_space<vmem>>, %arg9: memref<256x128xbf16, #tpu.memory_space<vmem>>, %arg10: memref<1x128xf32, #tpu.memory_space<vmem>>, %arg11: memref<16x16x128xf32, #tpu.memory_space<vmem>>, %arg12: memref<256x256xbf16, #tpu.memory_space<vmem>>) attributes {dimension_semantics = [#tpu.dimension_semantics<parallel>], iteration_bounds = array<i64: 2>, scalar_prefetch = 0 : i64, scratch_operands = 1 : i64, tpu.core_type = #tpu.core_type<tc>, window_params = [{transform_indices = @transform_0, window_bounds = array<i64: 16, 16, 16>}, {transform_indices = @transform_1, window_bounds = array<i64: 16, 16, 16>}, {pipeline_mode = #tpu.pipeline_mode<synchronous>, transform_indices = @transform_2, window_bounds = array<i64: 16, 128>}, {pipeline_mode = #tpu.pipeline_mode<synchronous>, transform_indices = @transform_3, window_bounds = array<i64: 1, 128>}, {pipeline_mode = #tpu.pipeline_mode<synchronous>, transform_indices = @transform_4, window_bounds = array<i64: 144, 128>}, {pipeline_mode = #tpu.pipeline_mode<synchronous>, transform_indices = @transform_5, window_bounds = array<i64: 1, 128>}, {pipeline_mode = #tpu.pipeline_mode<synchronous>, transform_indices = @transform_6, window_bounds = array<i64: 128, 128>}, {pipeline_mode = #tpu.pipeline_mode<synchronous>, transform_indices = @transform_7, window_bounds = array<i64: 1, 128>}, {pipeline_mode = #tpu.pipeline_mode<synchronous>, transform_indices = @transform_8, window_bounds = array<i64: 256, 128>}, {pipeline_mode = #tpu.pipeline_mode<synchronous>, transform_indices = @transform_9, window_bounds = array<i64: 1, 128>}, {transform_indices = @transform_10, window_bounds = array<i64: 16, 16, 128>}]} {
    %c0 = arith.constant 0 : index
    %c0_0 = arith.constant 0 : index
    %c0_1 = arith.constant 0 : index
    %0 = vector.load %arg1[%c0, %c0_0, %c0_1] : memref<16x16x16xbf16, #tpu.memory_space<vmem>>, vector<16x16x16xbf16>
    %c0_2 = arith.constant 0 : index
    %c0_3 = arith.constant 0 : index
    %c0_4 = arith.constant 0 : index
    %1 = vector.load %arg2[%c0_2, %c0_3, %c0_4] : memref<16x16x16xbf16, #tpu.memory_space<vmem>>, vector<16x16x16xbf16>
    %2 = arith.extf %1 : vector<16x16x16xbf16> to vector<16x16x16xf32>
    %cst = arith.constant dense<0.000000e+00> : vector<16x16xf32>
    %3 = vector.multi_reduction <add>, %2, %cst [2] : vector<16x16x16xf32> to vector<16x16xf32>
    %4 = vector.shape_cast %3 : vector<16x16xf32> to vector<16x16x1xf32>
    %cst_5 = arith.constant 1.000000e+00 : f32
    %5 = vector.broadcast %cst_5 : f32 to vector<16x16x1xf32>
    %6 = arith.maximumf %4, %5 : vector<16x16x1xf32>
    %7 = math.rsqrt %6 : vector<16x16x1xf32>
    %8 = vector.shape_cast %0 : vector<16x16x16xbf16> to vector<256x16xbf16>
    %c0_6 = arith.constant 0 : index
    %c0_7 = arith.constant 0 : index
    %9 = vector.load %arg3[%c0_6, %c0_7] : memref<16x128xbf16, #tpu.memory_space<vmem>>, vector<16x128xbf16>
    %cst_8 = arith.constant dense<0.000000e+00> : vector<256x128xf32>
    %10 = tpu.matmul %8, %9, %cst_8 {dimension_numbers = #tpu.dot_dimension_numbers<[1], [0], [0], [1], [0, 0, 1, 1], [], []>} : vector<256x16xbf16>, vector<16x128xbf16>, vector<256x128xf32> -> vector<256x128xf32>
    %11 = vector.shape_cast %10 : vector<256x128xf32> to vector<16x16x128xf32>
    %12 = vector.broadcast %7 : vector<16x16x1xf32> to vector<16x16x128xf32>
    %13 = arith.mulf %12, %11 : vector<16x16x128xf32>
    %14 = arith.truncf %13 : vector<16x16x128xf32> to vector<16x16x128xbf16>
    "tpu.trace_start"() <{level = 10 : i32, message = "bij,bjm->bim"}> : () -> ()
    %cst_9 = arith.constant dense<0.000000e+00> : vector<16x16x128xf32>
    %15 = tpu.matmul %1, %14, %cst_9 {dimension_numbers = #tpu.dot_dimension_numbers<[2], [1], [1], [2], [0, 0, 0, 1, 1, 2], [0], [0]>} : vector<16x16x16xbf16>, vector<16x16x128xbf16>, vector<16x16x128xf32> -> vector<16x16x128xf32>
    "tpu.trace_stop"() : () -> ()
    %16 = vector.broadcast %7 : vector<16x16x1xf32> to vector<16x16x128xf32>
    %17 = arith.mulf %16, %15 : vector<16x16x128xf32>
    %c0_10 = arith.constant 0 : index
    %c0_11 = arith.constant 0 : index
    %18 = vector.load %arg4[%c0_10, %c0_11] : memref<1x128xf32, #tpu.memory_space<vmem>>, vector<1x128xf32>
    %19 = vector.shape_cast %18 : vector<1x128xf32> to vector<1x1x128xf32>
    %20 = vector.broadcast %19 : vector<1x1x128xf32> to vector<16x16x128xf32>
    %21 = arith.addf %17, %20 : vector<16x16x128xf32>
    %22 = vector.shape_cast %21 : vector<16x16x128xf32> to vector<256x128xf32>
    %cst_12 = arith.constant 0.000000e+00 : f32
    %23 = vector.broadcast %cst_12 : f32 to vector<256x128xf32>
    %24 = arith.maximumf %22, %23 : vector<256x128xf32>
    %25 = arith.truncf %24 : vector<256x128xf32> to vector<256x128xbf16>
    %cst_13 = arith.constant 0.000000e+00 : bf16
    %26 = vector.broadcast %cst_13 : bf16 to vector<256x16xbf16>
    %27 = arith.maximumf %8, %26 : vector<256x16xbf16>
    %c0_14 = arith.constant 0 : index
    %c0_15 = arith.constant 0 : index
    %28 = vector.load %arg5[%c0_14, %c0_15] : memref<144x128xbf16, #tpu.memory_space<vmem>>, vector<128x128xbf16>
    %cst_16 = arith.constant dense<0.000000e+00> : vector<256x128xf32>
    %29 = tpu.matmul %25, %28, %cst_16 {dimension_numbers = #tpu.dot_dimension_numbers<[1], [0], [0], [1], [0, 0, 1, 1], [], []>} : vector<256x128xbf16>, vector<128x128xbf16>, vector<256x128xf32> -> vector<256x128xf32>
    %c128 = arith.constant 128 : index
    %c0_17 = arith.constant 0 : index
    %30 = vector.load %arg5[%c128, %c0_17] : memref<144x128xbf16, #tpu.memory_space<vmem>>, vector<16x128xbf16>
    %cst_18 = arith.constant dense<0.000000e+00> : vector<256x128xf32>
    %31 = tpu.matmul %27, %30, %cst_18 {dimension_numbers = #tpu.dot_dimension_numbers<[1], [0], [0], [1], [0, 0, 1, 1], [], []>} : vector<256x16xbf16>, vector<16x128xbf16>, vector<256x128xf32> -> vector<256x128xf32>
    %32 = arith.addf %29, %31 : vector<256x128xf32>
    %c0_19 = arith.constant 0 : index
    %c0_20 = arith.constant 0 : index
    %33 = vector.load %arg6[%c0_19, %c0_20] : memref<1x128xf32, #tpu.memory_space<vmem>>, vector<1x128xf32>
    %34 = vector.broadcast %33 : vector<1x128xf32> to vector<256x128xf32>
    %35 = arith.addf %32, %34 : vector<256x128xf32>
    %cst_21 = arith.constant 0.000000e+00 : f32
    %36 = vector.broadcast %cst_21 : f32 to vector<256x128xf32>
    %37 = arith.maximumf %35, %36 : vector<256x128xf32>
    %38 = arith.truncf %37 : vector<256x128xf32> to vector<256x128xbf16>
    %c0_22 = arith.constant 0 : index
    %c0_23 = arith.constant 0 : index
    %39 = vector.load %arg7[%c0_22, %c0_23] : memref<128x128xbf16, #tpu.memory_space<vmem>>, vector<128x128xbf16>
    %cst_24 = arith.constant dense<0.000000e+00> : vector<256x128xf32>
    %40 = tpu.matmul %38, %39, %cst_24 {dimension_numbers = #tpu.dot_dimension_numbers<[1], [0], [0], [1], [0, 0, 1, 1], [], []>} : vector<256x128xbf16>, vector<128x128xbf16>, vector<256x128xf32> -> vector<256x128xf32>
    %41 = vector.shape_cast %40 : vector<256x128xf32> to vector<16x16x128xf32>
    %42 = vector.broadcast %7 : vector<16x16x1xf32> to vector<16x16x128xf32>
    %43 = arith.mulf %42, %41 : vector<16x16x128xf32>
    %44 = arith.truncf %43 : vector<16x16x128xf32> to vector<16x16x128xbf16>
    "tpu.trace_start"() <{level = 10 : i32, message = "bij,bjm->bim"}> : () -> ()
    %cst_25 = arith.constant dense<0.000000e+00> : vector<16x16x128xf32>
    %45 = tpu.matmul %1, %44, %cst_25 {dimension_numbers = #tpu.dot_dimension_numbers<[2], [1], [1], [2], [0, 0, 0, 1, 1, 2], [0], [0]>} : vector<16x16x16xbf16>, vector<16x16x128xbf16>, vector<16x16x128xf32> -> vector<16x16x128xf32>
    "tpu.trace_stop"() : () -> ()
    %46 = vector.broadcast %7 : vector<16x16x1xf32> to vector<16x16x128xf32>
    %47 = arith.mulf %46, %45 : vector<16x16x128xf32>
    %c0_26 = arith.constant 0 : index
    %c0_27 = arith.constant 0 : index
    %48 = vector.load %arg8[%c0_26, %c0_27] : memref<1x128xf32, #tpu.memory_space<vmem>>, vector<1x128xf32>
    %49 = vector.shape_cast %48 : vector<1x128xf32> to vector<1x1x128xf32>
    %50 = vector.broadcast %49 : vector<1x1x128xf32> to vector<16x16x128xf32>
    %51 = arith.addf %47, %50 : vector<16x16x128xf32>
    %52 = vector.shape_cast %51 : vector<16x16x128xf32> to vector<256x128xf32>
    %cst_28 = arith.constant 0.000000e+00 : f32
    %53 = vector.broadcast %cst_28 : f32 to vector<256x128xf32>
    %54 = arith.maximumf %52, %53 : vector<256x128xf32>
    %55 = arith.truncf %54 : vector<256x128xf32> to vector<256x128xbf16>
    %c0_29 = arith.constant 0 : index
    %c0_30 = arith.constant 0 : index
    %56 = vector.load %arg12[%c0_29, %c0_30] : memref<256x256xbf16, #tpu.memory_space<vmem>>, vector<256x128xbf16>
    tpu.vector_store %arg12[%c0_29, %c0_30], %55 {strides = array<i32>} : memref<256x256xbf16, #tpu.memory_space<vmem>>, vector<256x128xbf16>,
    %c0_31 = arith.constant 0 : index
    %c128_32 = arith.constant 128 : index
    %57 = vector.load %arg12[%c0_31, %c128_32] : memref<256x256xbf16, #tpu.memory_space<vmem>>, vector<256x128xbf16>
    tpu.vector_store %arg12[%c0_31, %c128_32], %38 {strides = array<i32>} : memref<256x256xbf16, #tpu.memory_space<vmem>>, vector<256x128xbf16>,
    %c0_33 = arith.constant 0 : index
    %c0_34 = arith.constant 0 : index
    %58 = vector.load %arg12[%c0_33, %c0_34] : memref<256x256xbf16, #tpu.memory_space<vmem>>, vector<256x256xbf16>
    %c0_35 = arith.constant 0 : index
    %c0_36 = arith.constant 0 : index
    %59 = vector.load %arg9[%c0_35, %c0_36] : memref<256x128xbf16, #tpu.memory_space<vmem>>, vector<256x128xbf16>
    %cst_37 = arith.constant dense<0.000000e+00> : vector<256x128xf32>
    %60 = tpu.matmul %58, %59, %cst_37 {dimension_numbers = #tpu.dot_dimension_numbers<[1], [0], [0], [1], [0, 0, 1, 1], [], []>} : vector<256x256xbf16>, vector<256x128xbf16>, vector<256x128xf32> -> vector<256x128xf32>
    %c0_38 = arith.constant 0 : index
    %c0_39 = arith.constant 0 : index
    %61 = vector.load %arg10[%c0_38, %c0_39] : memref<1x128xf32, #tpu.memory_space<vmem>>, vector<1x128xf32>
    %62 = vector.broadcast %61 : vector<1x128xf32> to vector<256x128xf32>
    %63 = arith.addf %60, %62 : vector<256x128xf32>
    %64 = vector.shape_cast %63 : vector<256x128xf32> to vector<16x16x128xf32>
    %c0_40 = arith.constant 0 : index
    %c0_41 = arith.constant 0 : index
    %c0_42 = arith.constant 0 : index
    %65 = vector.load %arg11[%c0_40, %c0_41, %c0_42] : memref<16x16x128xf32, #tpu.memory_space<vmem>>, vector<16x16x128xf32>
    tpu.vector_store %arg11[%c0_40, %c0_41, %c0_42], %64 {strides = array<i32>} : memref<16x16x128xf32, #tpu.memory_space<vmem>>, vector<16x16x128xf32>,
    return
  }
  func.func @transform_0(%arg0: i32) -> (i32, i32, i32) {
    %c0_i32 = arith.constant 0 : i32
    %c0_i32_0 = arith.constant 0 : i32
    %c0_i32_1 = arith.constant 0 : i32
    return %arg0, %c0_i32, %c0_i32_0 : i32, i32, i32
  }
  func.func @transform_1(%arg0: i32) -> (i32, i32, i32) {
    %c0_i32 = arith.constant 0 : i32
    %c0_i32_0 = arith.constant 0 : i32
    %c0_i32_1 = arith.constant 0 : i32
    return %arg0, %c0_i32, %c0_i32_0 : i32, i32, i32
  }
  func.func @transform_2(%arg0: i32) -> (i32, i32) {
    %c0_i32 = arith.constant 0 : i32
    %c0_i32_0 = arith.constant 0 : i32
    %c0_i32_1 = arith.constant 0 : i32
    return %c0_i32, %c0_i32_0 : i32, i32
  }
  func.func @transform_3(%arg0: i32) -> (i32, i32) {
    %c0_i32 = arith.constant 0 : i32
    %c0_i32_0 = arith.constant 0 : i32
    %c0_i32_1 = arith.constant 0 : i32
    return %c0_i32, %c0_i32_0 : i32, i32
  }
  func.func @transform_4(%arg0: i32) -> (i32, i32) {
    %c0_i32 = arith.constant 0 : i32
    %c0_i32_0 = arith.constant 0 : i32
    %c0_i32_1 = arith.constant 0 : i32
    return %c0_i32, %c0_i32_0 : i32, i32
  }
  func.func @transform_5(%arg0: i32) -> (i32, i32) {
    %c0_i32 = arith.constant 0 : i32
    %c0_i32_0 = arith.constant 0 : i32
    %c0_i32_1 = arith.constant 0 : i32
    return %c0_i32, %c0_i32_0 : i32, i32
  }
  func.func @transform_6(%arg0: i32) -> (i32, i32) {
    %c0_i32 = arith.constant 0 : i32
    %c0_i32_0 = arith.constant 0 : i32
    %c0_i32_1 = arith.constant 0 : i32
    return %c0_i32, %c0_i32_0 : i32, i32
  }
  func.func @transform_7(%arg0: i32) -> (i32, i32) {
    %c0_i32 = arith.constant 0 : i32
    %c0_i32_0 = arith.constant 0 : i32
    %c0_i32_1 = arith.constant 0 : i32
    return %c0_i32, %c0_i32_0 : i32, i32
  }
  func.func @transform_8(%arg0: i32) -> (i32, i32) {
    %c0_i32 = arith.constant 0 : i32
    %c0_i32_0 = arith.constant 0 : i32
    %c0_i32_1 = arith.constant 0 : i32
    return %c0_i32, %c0_i32_0 : i32, i32
  }
  func.func @transform_9(%arg0: i32) -> (i32, i32) {
    %c0_i32 = arith.constant 0 : i32
    %c0_i32_0 = arith.constant 0 : i32
    %c0_i32_1 = arith.constant 0 : i32
    return %c0_i32, %c0_i32_0 : i32, i32
  }
  func.func @transform_10(%arg0: i32) -> (i32, i32, i32) {
    %c0_i32 = arith.constant 0 : i32
    %c0_i32_0 = arith.constant 0 : i32
    %c0_i32_1 = arith.constant 0 : i32
    return %arg0, %c0_i32, %c0_i32_0 : i32, i32, i32
  }
}

</mosaic_0001>

<llo_original>
// kernel: tpu_custom_call.1
$region0: #{tpu_custom_call.1}
  #allocation0 [shape = 'u32[]', space=smem, size = 0x4, offset = 0x4, fixed_abs, tag = 'smem constant byte address 0x4 - core index']
  #allocation1 [shape = 'u32[144,128]{1,0:T(1,128)}', space=vmem, size = 0x12000, scoped, tag = 'internal scratch']
  #allocation2 [shape = 'bf16[256,256]{1,0:T(16,128)(2,1)}', space=vmem, size = 0x20000, scoped, tag = 'scratch operand']
  %s0 = inlined_call_operand.vmem [shape: bf16[32,16,16], index: 0, kind: input, shape index: {}]
  %s1 = inlined_call_operand.vmem [shape: bf16[32,16,16], index: 1, kind: input, shape index: {}]
  %s2 = inlined_call_operand.vmem [shape: bf16[16,128], index: 2, kind: input, shape index: {}]
  %s3 = inlined_call_operand.vmem [shape: f32[1,128], index: 3, kind: input, shape index: {}]
  %s4 = inlined_call_operand.vmem [shape: bf16[144,128], index: 4, kind: input, shape index: {}]
  %s5 = inlined_call_operand.vmem [shape: f32[1,128], index: 5, kind: input, shape index: {}]
  %s6 = inlined_call_operand.vmem [shape: bf16[128,128], index: 6, kind: input, shape index: {}]
  %s7 = inlined_call_operand.vmem [shape: f32[1,128], index: 7, kind: input, shape index: {}]
  %s8 = inlined_call_operand.vmem [shape: bf16[256,128], index: 8, kind: input, shape index: {}]
  %s9 = inlined_call_operand.vmem [shape: f32[1,128], index: 9, kind: input, shape index: {}]
  %s10 = inlined_call_operand.hbm [shape: f32[32,16,128], index: 10, kind: output, shape index: {}]
  %s11 = sld [smem:[#allocation0]]
  $region73: #{tpu_custom_call.1} parent=0
    _
  %s13 = ssub.s32 1, %s11
  %s14 = scalar_select 0, %s13, %s11
  $region1: #{tpu_custom_call.1} parent=0
    #allocation3 [shape = 'u8[262144]{0}', space=vmem, size = 0x40000, scoped, tag = 'output window, operand 0']
    #allocation4 [shape = 's32[2]{0}', space=sflag, size = 0x8, scoped, tag = 'scoped memory for tpu_custom_call.1']
    %15 = vsyncpa [#allocation4], 0
    %s16 = scalar_lea.sflag [#allocation4], 1
    %17 = vsyncpa %s16, 0
    loop: start=0, step=1, limit=4
    $region2: #{tpu_custom_call.1} parent=1 // loop_pre_header
      _
    $region3: #{tpu_custom_call.1} parent=1 // loop_header
      %s19 = sphi 0, %s23
      %p20 = scmp.ge.s32.totalorder %s19, 4
      %s29 = sphi 0, %s31
      %s32 = sphi 0, %s29
      %s33 = sphi 0, %s32
      %s49 = sphi 0, %s33
      %s55 = sphi 0, %s57
      %s58 = sphi 0, %s55
      %s59 = sphi 0, %s58
      %s75 = sphi 0, %s59
      %s79 = sphi 0, %s79
      %s81 = sphi 0, %s79
      %s82 = sphi 0, %s81
      %s96 = sphi 0, %s82
      %s100 = sphi 0, %s100
      %s102 = sphi 0, %s100
      %s103 = sphi 0, %s102
      %s117 = sphi 0, %s103
      %s121 = sphi 0, %s121
      %s123 = sphi 0, %s121
      %s124 = sphi 0, %s123
      %s138 = sphi 0, %s124
      %s142 = sphi 0, %s142
      %s144 = sphi 0, %s142
      %s145 = sphi 0, %s144
      %s159 = sphi 0, %s145
      %s163 = sphi 0, %s163
      %s165 = sphi 0, %s163
      %s166 = sphi 0, %s165
      %s180 = sphi 0, %s166
      %s184 = sphi 0, %s184
      %s186 = sphi 0, %s184
      %s187 = sphi 0, %s186
      %s201 = sphi 0, %s187
      %s205 = sphi 0, %s205
      %s207 = sphi 0, %s205
      %s208 = sphi 0, %s207
      %s222 = sphi 0, %s208
      %s226 = sphi 0, %s226
      %s228 = sphi 0, %s226
      %s229 = sphi 0, %s228
      %s243 = sphi 0, %s229
      %s249 = sphi 0, %s251
      %s252 = sphi 0, %s249
      %s253 = sphi 0, %s252
      %s269 = sphi 0, %s253
    $region4: #{tpu_custom_call.1} parent=1 // loop_header_branch
      %22 = sbr.rel (%p20) target = $region8
    $region5: #{tpu_custom_call.1} parent=1 // loop_body
      %s24 = ssub.s32 %s19, 1
      %s25 = ssub.s32 %s19, 2
      %s26 = sadd.s32 %s19, 1
      %s27 = ssub.s32 %s19, %s26
      %p28 = scmp.eq.s32.totalorder %s27, 0
      %s30 = sadd.s32 %s29, 1
      %s31 = scalar_select %p28, %s29, %s30
      %p34 = pneg %p28
      %p35 = scmp.eq.s32.totalorder %s19, 1
      %p36 = por %p34, %p35
      %p37 = scmp.ne.s32.totalorder %s29, %s32
      %p38 = scmp.eq.s32.totalorder %s19, 0
      %p39 = por %p37, %p38
      %p40 = scmp.ne.s32.totalorder %s29, %s32
      %p41 = scmp.eq.s32.totalorder %s24, 1
      %p42 = por %p40, %p41
      %p43 = scmp.ne.s32.totalorder %s32, %s33
      %p44 = scmp.eq.s32.totalorder %s24, 0
      %p45 = por %p43, %p44
      %p46 = scmp.ne.s32.totalorder %s32, %s33
      %p47 = scmp.eq.s32.totalorder %s25, 1
      %p48 = por %p46, %p47
      %p50 = scmp.ne.s32.totalorder %s33, %s49
      %p51 = scmp.eq.s32.totalorder %s25, 0
      %p52 = por %p50, %p51
      %s53 = ssub.s32 %s19, %s26
      %p54 = scmp.eq.s32.totalorder %s53, 0
      %s56 = sadd.s32 %s55, 1
      %s57 = scalar_select %p54, %s55, %s56
      %p60 = pneg %p54
      %p61 = scmp.eq.s32.totalorder %s19, 1
      %p62 = por %p60, %p61
      %p63 = scmp.ne.s32.totalorder %s55, %s58
      %p64 = scmp.eq.s32.totalorder %s19, 0
      %p65 = por %p63, %p64
      %p66 = scmp.ne.s32.totalorder %s55, %s58
      %p67 = scmp.eq.s32.totalorder %s24, 1
      %p68 = por %p66, %p67
      %p69 = scmp.ne.s32.totalorder %s58, %s59
      %p70 = scmp.eq.s32.totalorder %s24, 0
      %p71 = por %p69, %p70
      %p72 = scmp.ne.s32.totalorder %s58, %s59
      %p73 = scmp.eq.s32.totalorder %s25, 1
      %p74 = por %p72, %p73
      %p76 = scmp.ne.s32.totalorder %s59, %s75
      %p77 = scmp.eq.s32.totalorder %s25, 0
      %p78 = por %p76, %p77
      %s80 = sadd.s32 %s79, 1
      %p83 = scmp.eq.s32.totalorder %s19, 1
      %p84 = scmp.ne.s32.totalorder %s79, %s81
      %p85 = scmp.eq.s32.totalorder %s19, 0
      %p86 = por %p84, %p85
      %p87 = scmp.ne.s32.totalorder %s79, %s81
      %p88 = scmp.eq.s32.totalorder %s24, 1
      %p89 = por %p87, %p88
      %p90 = scmp.ne.s32.totalorder %s81, %s82
      %p91 = scmp.eq.s32.totalorder %s24, 0
      %p92 = por %p90, %p91
      %p93 = scmp.ne.s32.totalorder %s81, %s82
      %p94 = scmp.eq.s32.totalorder %s25, 1
      %p95 = por %p93, %p94
      %p97 = scmp.ne.s32.totalorder %s82, %s96
      %p98 = scmp.eq.s32.totalorder %s25, 0
      %p99 = por %p97, %p98
      %s101 = sadd.s32 %s100, 1
      %p104 = scmp.eq.s32.totalorder %s19, 1
      %p105 = scmp.ne.s32.totalorder %s100, %s102
      %p106 = scmp.eq.s32.totalorder %s19, 0
      %p107 = por %p105, %p106
      %p108 = scmp.ne.s32.totalorder %s100, %s102
      %p109 = scmp.eq.s32.totalorder %s24, 1
      %p110 = por %p108, %p109
      %p111 = scmp.ne.s32.totalorder %s102, %s103
      %p112 = scmp.eq.s32.totalorder %s24, 0
      %p113 = por %p111, %p112
      %p114 = scmp.ne.s32.totalorder %s102, %s103
      %p115 = scmp.eq.s32.totalorder %s25, 1
      %p116 = por %p114, %p115
      %p118 = scmp.ne.s32.totalorder %s103, %s117
      %p119 = scmp.eq.s32.totalorder %s25, 0
      %p120 = por %p118, %p119
      %s122 = sadd.s32 %s121, 1
      %p125 = scmp.eq.s32.totalorder %s19, 1
      %p126 = scmp.ne.s32.totalorder %s121, %s123
      %p127 = scmp.eq.s32.totalorder %s19, 0
      %p128 = por %p126, %p127
      %p129 = scmp.ne.s32.totalorder %s121, %s123
      %p130 = scmp.eq.s32.totalorder %s24, 1
      %p131 = por %p129, %p130
      %p132 = scmp.ne.s32.totalorder %s123, %s124
      %p133 = scmp.eq.s32.totalorder %s24, 0
      %p134 = por %p132, %p133
      %p135 = scmp.ne.s32.totalorder %s123, %s124
      %p136 = scmp.eq.s32.totalorder %s25, 1
      %p137 = por %p135, %p136
      %p139 = scmp.ne.s32.totalorder %s124, %s138
      %p140 = scmp.eq.s32.totalorder %s25, 0
      %p141 = por %p139, %p140
      %s143 = sadd.s32 %s142, 1
      %p146 = scmp.eq.s32.totalorder %s19, 1
      %p147 = scmp.ne.s32.totalorder %s142, %s144
      %p148 = scmp.eq.s32.totalorder %s19, 0
      %p149 = por %p147, %p148
      %p150 = scmp.ne.s32.totalorder %s142, %s144
      %p151 = scmp.eq.s32.totalorder %s24, 1
      %p152 = por %p150, %p151
      %p153 = scmp.ne.s32.totalorder %s144, %s145
      %p154 = scmp.eq.s32.totalorder %s24, 0
      %p155 = por %p153, %p154
      %p156 = scmp.ne.s32.totalorder %s144, %s145
      %p157 = scmp.eq.s32.totalorder %s25, 1
      %p158 = por %p156, %p157
      %p160 = scmp.ne.s32.totalorder %s145, %s159
      %p161 = scmp.eq.s32.totalorder %s25, 0
      %p162 = por %p160, %p161
      %s164 = sadd.s32 %s163, 1
      %p167 = scmp.eq.s32.totalorder %s19, 1
      %p168 = scmp.ne.s32.totalorder %s163, %s165
      %p169 = scmp.eq.s32.totalorder %s19, 0
      %p170 = por %p168, %p169
      %p171 = scmp.ne.s32.totalorder %s163, %s165
      %p172 = scmp.eq.s32.totalorder %s24, 1
      %p173 = por %p171, %p172
      %p174 = scmp.ne.s32.totalorder %s165, %s166
      %p175 = scmp.eq.s32.totalorder %s24, 0
      %p176 = por %p174, %p175
      %p177 = scmp.ne.s32.totalorder %s165, %s166
      %p178 = scmp.eq.s32.totalorder %s25, 1
      %p179 = por %p177, %p178
      %p181 = scmp.ne.s32.totalorder %s166, %s180
      %p182 = scmp.eq.s32.totalorder %s25, 0
      %p183 = por %p181, %p182
      %s185 = sadd.s32 %s184, 1
      %p188 = scmp.eq.s32.totalorder %s19, 1
      %p189 = scmp.ne.s32.totalorder %s184, %s186
      %p190 = scmp.eq.s32.totalorder %s19, 0
      %p191 = por %p189, %p190
      %p192 = scmp.ne.s32.totalorder %s184, %s186
      %p193 = scmp.eq.s32.totalorder %s24, 1
      %p194 = por %p192, %p193
      %p195 = scmp.ne.s32.totalorder %s186, %s187
      %p196 = scmp.eq.s32.totalorder %s24, 0
      %p197 = por %p195, %p196
      %p198 = scmp.ne.s32.totalorder %s186, %s187
      %p199 = scmp.eq.s32.totalorder %s25, 1
      %p200 = por %p198, %p199
      %p202 = scmp.ne.s32.totalorder %s187, %s201
      %p203 = scmp.eq.s32.totalorder %s25, 0
      %p204 = por %p202, %p203
      %s206 = sadd.s32 %s205, 1
      %p209 = scmp.eq.s32.totalorder %s19, 1
      %p210 = scmp.ne.s32.totalorder %s205, %s207
      %p211 = scmp.eq.s32.totalorder %s19, 0
      %p212 = por %p210, %p211
      %p213 = scmp.ne.s32.totalorder %s205, %s207
      %p214 = scmp.eq.s32.totalorder %s24, 1
      %p215 = por %p213, %p214
      %p216 = scmp.ne.s32.totalorder %s207, %s208
      %p217 = scmp.eq.s32.totalorder %s24, 0
      %p218 = por %p216, %p217
      %p219 = scmp.ne.s32.totalorder %s207, %s208
      %p220 = scmp.eq.s32.totalorder %s25, 1
      %p221 = por %p219, %p220
      %p223 = scmp.ne.s32.totalorder %s208, %s222
      %p224 = scmp.eq.s32.totalorder %s25, 0
      %p225 = por %p223, %p224
      %s227 = sadd.s32 %s226, 1
      %p230 = scmp.eq.s32.totalorder %s19, 1
      %p231 = scmp.ne.s32.totalorder %s226, %s228
      %p232 = scmp.eq.s32.totalorder %s19, 0
      %p233 = por %p231, %p232
      %p234 = scmp.ne.s32.totalorder %s226, %s228
      %p235 = scmp.eq.s32.totalorder %s24, 1
      %p236 = por %p234, %p235
      %p237 = scmp.ne.s32.totalorder %s228, %s229
      %p238 = scmp.eq.s32.totalorder %s24, 0
      %p239 = por %p237, %p238
      %p240 = scmp.ne.s32.totalorder %s228, %s229
      %p241 = scmp.eq.s32.totalorder %s25, 1
      %p242 = por %p240, %p241
      %p244 = scmp.ne.s32.totalorder %s229, %s243
      %p245 = scmp.eq.s32.totalorder %s25, 0
      %p246 = por %p244, %p245
      %s247 = ssub.s32 %s19, %s26
      %p248 = scmp.eq.s32.totalorder %s247, 0
      %s250 = sadd.s32 %s249, 1
      %s251 = scalar_select %p248, %s249, %s250
      %p254 = pneg %p248
      %p255 = scmp.eq.s32.totalorder %s19, 1
      %p256 = por %p254, %p255
      %p257 = scmp.ne.s32.totalorder %s249, %s252
      %p258 = scmp.eq.s32.totalorder %s19, 0
      %p259 = por %p257, %p258
      %p260 = scmp.ne.s32.totalorder %s249, %s252
      %p261 = scmp.eq.s32.totalorder %s24, 1
      %p262 = por %p260, %p261
      %p263 = scmp.ne.s32.totalorder %s252, %s253
      %p264 = scmp.eq.s32.totalorder %s24, 0
      %p265 = por %p263, %p264
      %p266 = scmp.ne.s32.totalorder %s252, %s253
      %p267 = scmp.eq.s32.totalorder %s25, 1
      %p268 = por %p266, %p267
      %p270 = scmp.ne.s32.totalorder %s253, %s269
      %p271 = scmp.eq.s32.totalorder %s25, 0
      %p272 = por %p270, %p271
      %p273 = scmp.le.s32.totalorder 1, %s19
      %p274 = scmp.lt.s32.totalorder %s19, 3
      %p275 = pnand %p273, %p274
      %p276 = pneg %p275
      // Predicated region
      $region9: #{tpu_custom_call.1} parent=5 // pred_check
        _
      $region10: #{tpu_custom_call.1} parent=5 // pred_check_branch
        %278 = sbr.rel (%p275) target = $region12
      $region11: #{tpu_custom_call.1} parent=5 // pred_region
        %s279 = ssub.s32 %s19, 1
        // Predicated region
        $region13: #{tpu_custom_call.1} parent=11 // pred_check
          %p280 = pneg %p92
        $region14: #{tpu_custom_call.1} parent=11 // pred_check_branch
          %282 = sbr.rel (%p280) target = $region16
        $region15: #{tpu_custom_call.1} parent=11 // pred_region
          _
        $region16: #{tpu_custom_call.1} parent=11 // pred_fallthru
          _
        // Predicated region
        $region17: #{tpu_custom_call.1} parent=11 // pred_check
          %p283 = pneg %p113
        $region18: #{tpu_custom_call.1} parent=11 // pred_check_branch
          %285 = sbr.rel (%p283) target = $region20
        $region19: #{tpu_custom_call.1} parent=11 // pred_region
          _
        $region20: #{tpu_custom_call.1} parent=11 // pred_fallthru
          _
        // Predicated region
        $region21: #{tpu_custom_call.1} parent=11 // pred_check
          %p286 = pneg %p134
        $region22: #{tpu_custom_call.1} parent=11 // pred_check_branch
          %288 = sbr.rel (%p286) target = $region24
        $region23: #{tpu_custom_call.1} parent=11 // pred_region
          _
        $region24: #{tpu_custom_call.1} parent=11 // pred_fallthru
          _
        // Predicated region
        $region25: #{tpu_custom_call.1} parent=11 // pred_check
          %p289 = pneg %p155
        $region26: #{tpu_custom_call.1} parent=11 // pred_check_branch
          %291 = sbr.rel (%p289) target = $region28
        $region27: #{tpu_custom_call.1} parent=11 // pred_region
          _
        $region28: #{tpu_custom_call.1} parent=11 // pred_fallthru
          _
        // Predicated region
        $region29: #{tpu_custom_call.1} parent=11 // pred_check
          %p292 = pneg %p176
        $region30: #{tpu_custom_call.1} parent=11 // pred_check_branch
          %294 = sbr.rel (%p292) target = $region32
        $region31: #{tpu_custom_call.1} parent=11 // pred_region
          _
        $region32: #{tpu_custom_call.1} parent=11 // pred_fallthru
          _
        // Predicated region
        $region33: #{tpu_custom_call.1} parent=11 // pred_check
          %p295 = pneg %p197
        $region34: #{tpu_custom_call.1} parent=11 // pred_check_branch
          %297 = sbr.rel (%p295) target = $region36
        $region35: #{tpu_custom_call.1} parent=11 // pred_region
          _
        $region36: #{tpu_custom_call.1} parent=11 // pred_fallthru
          _
        // Predicated region
        $region37: #{tpu_custom_call.1} parent=11 // pred_check
          %p298 = pneg %p218
        $region38: #{tpu_custom_call.1} parent=11 // pred_check_branch
          %300 = sbr.rel (%p298) target = $region40
        $region39: #{tpu_custom_call.1} parent=11 // pred_region
          _
        $region40: #{tpu_custom_call.1} parent=11 // pred_fallthru
          _
        // Predicated region
        $region41: #{tpu_custom_call.1} parent=11 // pred_check
          %p301 = pneg %p239
        $region42: #{tpu_custom_call.1} parent=11 // pred_check_branch
          %303 = sbr.rel (%p301) target = $region44
        $region43: #{tpu_custom_call.1} parent=11 // pred_region
          _
        $region44: #{tpu_custom_call.1} parent=11 // pred_fallthru
          _
      $region12: #{tpu_custom_call.1} parent=5 // pred_fallthru
        _
      %p304 = scmp.lt.s32.totalorder %s19, 2
      // Predicated region
      $region45: #{tpu_custom_call.1} parent=5 // pred_check
        %p305 = pneg %p304
      $region46: #{tpu_custom_call.1} parent=5 // pred_check_branch
        %307 = sbr.rel (%p305) target = $region48
      $region47: #{tpu_custom_call.1} parent=5 // pred_region
        // Predicated region
        $region49: #{tpu_custom_call.1} parent=47 // pred_check
          %p308 = pneg %p39
        $region50: #{tpu_custom_call.1} parent=47 // pred_check_branch
          %310 = sbr.rel (%p308) target = $region52
        $region51: #{tpu_custom_call.1} parent=47 // pred_region
          %s311 = smul.u32 16, %s19
          %p312 = scmp.lt.s32.totalorder %s311, 31
          %s313 = scalar_select %p312, %s311, 31
          %s314 = smul.addr %s313, 2
          %s315 = smul.addr %s314, 4
          %s316 = scalar_lea.vmem %s0, %s315
          %s317 = smul.u32 16, %s19
        $region52: #{tpu_custom_call.1} parent=47 // pred_fallthru
          _
        // Predicated region
        $region53: #{tpu_custom_call.1} parent=47 // pred_check
          %p318 = pneg %p65
        $region54: #{tpu_custom_call.1} parent=47 // pred_check_branch
          %320 = sbr.rel (%p318) target = $region56
        $region55: #{tpu_custom_call.1} parent=47 // pred_region
          %s321 = smul.u32 16, %s19
          %p322 = scmp.lt.s32.totalorder %s321, 31
          %s323 = scalar_select %p322, %s321, 31
          %s324 = smul.addr %s323, 2
          %s325 = smul.addr %s324, 4
          %s326 = scalar_lea.vmem %s1, %s325
          %s327 = smul.u32 16, %s19
        $region56: #{tpu_custom_call.1} parent=47 // pred_fallthru
          _
      $region48: #{tpu_custom_call.1} parent=5 // pred_fallthru
        _
      %p328 = scmp.le.s32.totalorder 1, %s19
      %p329 = scmp.lt.s32.totalorder %s19, 3
      %p330 = pnand %p328, %p329
      %p331 = pneg %p330
      // Predicated region
      $region57: #{tpu_custom_call.1} parent=5 // pred_check
        _
      $region58: #{tpu_custom_call.1} parent=5 // pred_check_branch
        %333 = sbr.rel (%p330) target = $region60
      $region59: #{tpu_custom_call.1} parent=5 // pred_region
        %s334 = ssub.s32 %s19, 1
        %s335 = smul.u32 16, %s24
        %p336 = scmp.lt.s32.totalorder %s335, 31
        %s337 = scalar_select %p336, %s335, 31
        %s338 = smul.addr %s337, 2
        %s339 = smul.addr %s338, 4
        %s340 = scalar_lea.vmem %s0, %s339
        %p341 = pneg %p45
        %p342 = pneg %p42
        %s343 = smul.u32 16, %s24
        %p344 = scmp.lt.s32.totalorder %s343, 31
        %s345 = scalar_select %p344, %s343, 31
        %s346 = smul.addr %s345, 2
        %s347 = smul.addr %s346, 4
        %s348 = scalar_lea.vmem %s1, %s347
        %p349 = pneg %p71
        %p350 = pneg %p68
        %p351 = pneg %p92
        %p352 = pneg %p89
        %p353 = pneg %p113
        %p354 = pneg %p110
        %p355 = pneg %p134
        %p356 = pneg %p131
        %p357 = pneg %p155
        %p358 = pneg %p152
        %p359 = pneg %p176
        %p360 = pneg %p173
        %p361 = pneg %p197
        %p362 = pneg %p194
        %p363 = pneg %p218
        %p364 = pneg %p215
        %p365 = pneg %p239
        %p366 = pneg %p236
        %p367 = pneg %p265
        %p368 = pneg %p262
        %s369 = sand.u32 %s252, 1
        %s370 = scalar_lea.sflag [#allocation4], %s369
        %s371 = sand.u32 %s252, 1
        %s372 = smul.addr %s371, 256
        %s373 = scalar_lea.vmem [#allocation3], %s372
        %s374 = smul.u32 16, %s24
        %p375 = scmp.lt.s32.totalorder %s374, 31
        %s376 = scalar_select %p375, %s374, 31
        %s377 = smul.addr %s376, 2
        %s378 = smul.addr %s377, 4
        %s379 = scalar_lea.vmem %s0, %s378
        %s380 = smul.u32 16, %s24
        %s381 = smul.u32 16, %s24
        %p382 = scmp.lt.s32.totalorder %s381, 31
        %s383 = scalar_select %p382, %s381, 31
        %s384 = smul.addr %s383, 2
        %s385 = smul.addr %s384, 4
        %s386 = scalar_lea.vmem %s1, %s385
        %s387 = smul.u32 16, %s24
        %s388 = smul.u32 16, %s24
        %v390 = vld [vmem:[%s379] sm:$0xf]
        %v391 = vld [vmem:[%s379 + $0x4] sm:$0xf]
        %v392 = vld [vmem:[%s379 + $0x8] sm:$0xf]
        %v393 = vld [vmem:[%s379 + $0xc] sm:$0xf]
        %v394 = vld [vmem:[%s379 + $0x10] sm:$0xf]
        %v395 = vld [vmem:[%s379 + $0x14] sm:$0xf]
        %v396 = vld [vmem:[%s379 + $0x18] sm:$0xf]
        %v397 = vld [vmem:[%s379 + $0x1c] sm:$0xf]
        %v398 = vld [vmem:[%s379 + $0x20] sm:$0xf]
        %v399 = vld [vmem:[%s379 + $0x24] sm:$0xf]
        %v400 = vld [vmem:[%s379 + $0x28] sm:$0xf]
        %v401 = vld [vmem:[%s379 + $0x2c] sm:$0xf]
        %v402 = vld [vmem:[%s379 + $0x30] sm:$0xf]
        %v403 = vld [vmem:[%s379 + $0x34] sm:$0xf]
        %v404 = vld [vmem:[%s379 + $0x38] sm:$0xf]
        %v405 = vld [vmem:[%s379 + $0x3c] sm:$0xf]
        %v406 = vld [vmem:[%s379 + $0x40] sm:$0xf]
        %v407 = vld [vmem:[%s379 + $0x44] sm:$0xf]
        %v408 = vld [vmem:[%s379 + $0x48] sm:$0xf]
        %v409 = vld [vmem:[%s379 + $0x4c] sm:$0xf]
        %v410 = vld [vmem:[%s379 + $0x50] sm:$0xf]
        %v411 = vld [vmem:[%s379 + $0x54] sm:$0xf]
        %v412 = vld [vmem:[%s379 + $0x58] sm:$0xf]
        %v413 = vld [vmem:[%s379 + $0x5c] sm:$0xf]
        %v414 = vld [vmem:[%s379 + $0x60] sm:$0xf]
        %v415 = vld [vmem:[%s379 + $0x64] sm:$0xf]
        %v416 = vld [vmem:[%s379 + $0x68] sm:$0xf]
        %v417 = vld [vmem:[%s379 + $0x6c] sm:$0xf]
        %v418 = vld [vmem:[%s379 + $0x70] sm:$0xf]
        %v419 = vld [vmem:[%s379 + $0x74] sm:$0xf]
        %v420 = vld [vmem:[%s379 + $0x78] sm:$0xf]
        %v421 = vld [vmem:[%s379 + $0x7c] sm:$0xf]
        %v422 = vld [vmem:[%s386] sm:$0xf]
        %v423 = vld [vmem:[%s386 + $0x4] sm:$0xf]
        %v424 = vld [vmem:[%s386 + $0x8] sm:$0xf]
        %v425 = vld [vmem:[%s386 + $0xc] sm:$0xf]
        %v426 = vld [vmem:[%s386 + $0x10] sm:$0xf]
        %v427 = vld [vmem:[%s386 + $0x14] sm:$0xf]
        %v428 = vld [vmem:[%s386 + $0x18] sm:$0xf]
        %v429 = vld [vmem:[%s386 + $0x1c] sm:$0xf]
        %v430 = vld [vmem:[%s386 + $0x20] sm:$0xf]
        %v431 = vld [vmem:[%s386 + $0x24] sm:$0xf]
        %v432 = vld [vmem:[%s386 + $0x28] sm:$0xf]
        %v433 = vld [vmem:[%s386 + $0x2c] sm:$0xf]
        %v434 = vld [vmem:[%s386 + $0x30] sm:$0xf]
        %v435 = vld [vmem:[%s386 + $0x34] sm:$0xf]
        %v436 = vld [vmem:[%s386 + $0x38] sm:$0xf]
        %v437 = vld [vmem:[%s386 + $0x3c] sm:$0xf]
        %v438 = vld [vmem:[%s386 + $0x40] sm:$0xf]
        %v439 = vld [vmem:[%s386 + $0x44] sm:$0xf]
        %v440 = vld [vmem:[%s386 + $0x48] sm:$0xf]
        %v441 = vld [vmem:[%s386 + $0x4c] sm:$0xf]
        %v442 = vld [vmem:[%s386 + $0x50] sm:$0xf]
        %v443 = vld [vmem:[%s386 + $0x54] sm:$0xf]
        %v444 = vld [vmem:[%s386 + $0x58] sm:$0xf]
        %v445 = vld [vmem:[%s386 + $0x5c] sm:$0xf]
        %v446 = vld [vmem:[%s386 + $0x60] sm:$0xf]
        %v447 = vld [vmem:[%s386 + $0x64] sm:$0xf]
        %v448 = vld [vmem:[%s386 + $0x68] sm:$0xf]
        %v449 = vld [vmem:[%s386 + $0x6c] sm:$0xf]
        %v450 = vld [vmem:[%s386 + $0x70] sm:$0xf]
        %v451 = vld [vmem:[%s386 + $0x74] sm:$0xf]
        %v452 = vld [vmem:[%s386 + $0x78] sm:$0xf]
        %v453 = vld [vmem:[%s386 + $0x7c] sm:$0xf]
        %v454 = vunpack.c.l.bf16 %v422
        %v455 = vunpack.c.l.bf16 %v423
        %v456 = vunpack.c.l.bf16 %v424
        %v457 = vunpack.c.l.bf16 %v425
        %v458 = vunpack.c.l.bf16 %v426
        %v459 = vunpack.c.l.bf16 %v427
        %v460 = vunpack.c.l.bf16 %v428
        %v461 = vunpack.c.l.bf16 %v429
        %v462 = vunpack.c.l.bf16 %v430
        %v463 = vunpack.c.l.bf16 %v431
        %v464 = vunpack.c.l.bf16 %v432
        %v465 = vunpack.c.l.bf16 %v433
        %v466 = vunpack.c.l.bf16 %v434
        %v467 = vunpack.c.l.bf16 %v435
        %v468 = vunpack.c.l.bf16 %v436
        %v469 = vunpack.c.l.bf16 %v437
        %v470 = vunpack.c.l.bf16 %v438
        %v471 = vunpack.c.l.bf16 %v439
        %v472 = vunpack.c.l.bf16 %v440
        %v473 = vunpack.c.l.bf16 %v441
        %v474 = vunpack.c.l.bf16 %v442
        %v475 = vunpack.c.l.bf16 %v443
        %v476 = vunpack.c.l.bf16 %v444
        %v477 = vunpack.c.l.bf16 %v445
        %v478 = vunpack.c.l.bf16 %v446
        %v479 = vunpack.c.l.bf16 %v447
        %v480 = vunpack.c.l.bf16 %v448
        %v481 = vunpack.c.l.bf16 %v449
        %v482 = vunpack.c.l.bf16 %v450
        %v483 = vunpack.c.l.bf16 %v451
        %v484 = vunpack.c.l.bf16 %v452
        %v485 = vunpack.c.l.bf16 %v453
        %vm486 = vcmask 130048
        %v487 = vsel %vm486, %v454, 0.0
        %488 = vadd.xlane.f32.xlu0 %v487
        %v489 = vpop.xlane.xlu0 %488
        %v490 = vsel %vm486, %v455, 0.0
        %491 = vadd.xlane.f32.xlu0 %v490
        %v492 = vpop.xlane.xlu0 %491
        %v493 = vsel %vm486, %v456, 0.0
        %494 = vadd.xlane.f32.xlu0 %v493
        %v495 = vpop.xlane.xlu0 %494
        %v496 = vsel %vm486, %v457, 0.0
        %497 = vadd.xlane.f32.xlu0 %v496
        %v498 = vpop.xlane.xlu0 %497
        %v499 = vsel %vm486, %v458, 0.0
        %500 = vadd.xlane.f32.xlu0 %v499
        %v501 = vpop.xlane.xlu0 %500
        %v502 = vsel %vm486, %v459, 0.0
        %503 = vadd.xlane.f32.xlu0 %v502
        %v504 = vpop.xlane.xlu0 %503
        %v505 = vsel %vm486, %v460, 0.0
        %506 = vadd.xlane.f32.xlu0 %v505
        %v507 = vpop.xlane.xlu0 %506
        %v508 = vsel %vm486, %v461, 0.0
        %509 = vadd.xlane.f32.xlu0 %v508
        %v510 = vpop.xlane.xlu0 %509
        %v511 = vsel %vm486, %v462, 0.0
        %512 = vadd.xlane.f32.xlu0 %v511
        %v513 = vpop.xlane.xlu0 %512
        %v514 = vsel %vm486, %v463, 0.0
        %515 = vadd.xlane.f32.xlu0 %v514
        %v516 = vpop.xlane.xlu0 %515
        %v517 = vsel %vm486, %v464, 0.0
        %518 = vadd.xlane.f32.xlu0 %v517
        %v519 = vpop.xlane.xlu0 %518
        %v520 = vsel %vm486, %v465, 0.0
        %521 = vadd.xlane.f32.xlu0 %v520
        %v522 = vpop.xlane.xlu0 %521
        %v523 = vsel %vm486, %v466, 0.0
        %524 = vadd.xlane.f32.xlu0 %v523
        %v525 = vpop.xlane.xlu0 %524
        %v526 = vsel %vm486, %v467, 0.0
        %527 = vadd.xlane.f32.xlu0 %v526
        %v528 = vpop.xlane.xlu0 %527
        %v529 = vsel %vm486, %v468, 0.0
        %530 = vadd.xlane.f32.xlu0 %v529
        %v531 = vpop.xlane.xlu0 %530
        %v532 = vsel %vm486, %v469, 0.0
        %533 = vadd.xlane.f32.xlu0 %v532
        %v534 = vpop.xlane.xlu0 %533
        %v535 = vsel %vm486, %v470, 0.0
        %536 = vadd.xlane.f32.xlu0 %v535
        %v537 = vpop.xlane.xlu0 %536
        %v538 = vsel %vm486, %v471, 0.0
        %539 = vadd.xlane.f32.xlu0 %v538
        %v540 = vpop.xlane.xlu0 %539
        %v541 = vsel %vm486, %v472, 0.0
        %542 = vadd.xlane.f32.xlu0 %v541
        %v543 = vpop.xlane.xlu0 %542
        %v544 = vsel %vm486, %v473, 0.0
        %545 = vadd.xlane.f32.xlu0 %v544
        %v546 = vpop.xlane.xlu0 %545
        %v547 = vsel %vm486, %v474, 0.0
        %548 = vadd.xlane.f32.xlu0 %v547
        %v549 = vpop.xlane.xlu0 %548
        %v550 = vsel %vm486, %v475, 0.0
        %551 = vadd.xlane.f32.xlu0 %v550
        %v552 = vpop.xlane.xlu0 %551
        %v553 = vsel %vm486, %v476, 0.0
        %554 = vadd.xlane.f32.xlu0 %v553
        %v555 = vpop.xlane.xlu0 %554
        %v556 = vsel %vm486, %v477, 0.0
        %557 = vadd.xlane.f32.xlu0 %v556
        %v558 = vpop.xlane.xlu0 %557
        %v559 = vsel %vm486, %v478, 0.0
        %560 = vadd.xlane.f32.xlu0 %v559
        %v561 = vpop.xlane.xlu0 %560
        %v562 = vsel %vm486, %v479, 0.0
        %563 = vadd.xlane.f32.xlu0 %v562
        %v564 = vpop.xlane.xlu0 %563
        %v565 = vsel %vm486, %v480, 0.0
        %566 = vadd.xlane.f32.xlu0 %v565
        %v567 = vpop.xlane.xlu0 %566
        %v568 = vsel %vm486, %v481, 0.0
        %569 = vadd.xlane.f32.xlu0 %v568
        %v570 = vpop.xlane.xlu0 %569
        %v571 = vsel %vm486, %v482, 0.0
        %572 = vadd.xlane.f32.xlu0 %v571
        %v573 = vpop.xlane.xlu0 %572
        %v574 = vsel %vm486, %v483, 0.0
        %575 = vadd.xlane.f32.xlu0 %v574
        %v576 = vpop.xlane.xlu0 %575
        %v577 = vsel %vm486, %v484, 0.0
        %578 = vadd.xlane.f32.xlu0 %v577
        %v579 = vpop.xlane.xlu0 %578
        %v580 = vsel %vm486, %v485, 0.0
        %581 = vadd.xlane.f32.xlu0 %v580
        %v582 = vpop.xlane.xlu0 %581
        %v583 = vmax.f32 %v489, 1.0
        %v584 = vmax.f32 %v492, 1.0
        %v585 = vmax.f32 %v495, 1.0
        %v586 = vmax.f32 %v498, 1.0
        %v587 = vmax.f32 %v501, 1.0
        %v588 = vmax.f32 %v504, 1.0
        %v589 = vmax.f32 %v507, 1.0
        %v590 = vmax.f32 %v510, 1.0
        %v591 = vmax.f32 %v513, 1.0
        %v592 = vmax.f32 %v516, 1.0
        %v593 = vmax.f32 %v519, 1.0
        %v594 = vmax.f32 %v522, 1.0
        %v595 = vmax.f32 %v525, 1.0
        %v596 = vmax.f32 %v528, 1.0
        %v597 = vmax.f32 %v531, 1.0
        %v598 = vmax.f32 %v534, 1.0
        %v599 = vmax.f32 %v537, 1.0
        %v600 = vmax.f32 %v540, 1.0
        %v601 = vmax.f32 %v543, 1.0
        %v602 = vmax.f32 %v546, 1.0
        %v603 = vmax.f32 %v549, 1.0
        %v604 = vmax.f32 %v552, 1.0
        %v605 = vmax.f32 %v555, 1.0
        %v606 = vmax.f32 %v558, 1.0
        %v607 = vmax.f32 %v561, 1.0
        %v608 = vmax.f32 %v564, 1.0
        %v609 = vmax.f32 %v567, 1.0
        %v610 = vmax.f32 %v570, 1.0
        %v611 = vmax.f32 %v573, 1.0
        %v612 = vmax.f32 %v576, 1.0
        %v613 = vmax.f32 %v579, 1.0
        %v614 = vmax.f32 %v582, 1.0
        %v615 = vrsqrt.pop %v583
        %v616 = vrsqrt.pop %v584
        %v617 = vrsqrt.pop %v585
        %v618 = vrsqrt.pop %v586
        %v619 = vrsqrt.pop %v587
        %v620 = vrsqrt.pop %v588
        %v621 = vrsqrt.pop %v589
        %v622 = vrsqrt.pop %v590
        %v623 = vrsqrt.pop %v591
        %v624 = vrsqrt.pop %v592
        %v625 = vrsqrt.pop %v593
        %v626 = vrsqrt.pop %v594
        %v627 = vrsqrt.pop %v595
        %v628 = vrsqrt.pop %v596
        %v629 = vrsqrt.pop %v597
        %v630 = vrsqrt.pop %v598
        %v631 = vrsqrt.pop %v599
        %v632 = vrsqrt.pop %v600
        %v633 = vrsqrt.pop %v601
        %v634 = vrsqrt.pop %v602
        %v635 = vrsqrt.pop %v603
        %v636 = vrsqrt.pop %v604
        %v637 = vrsqrt.pop %v605
        %v638 = vrsqrt.pop %v606
        %v639 = vrsqrt.pop %v607
        %v640 = vrsqrt.pop %v608
        %v641 = vrsqrt.pop %v609
        %v642 = vrsqrt.pop %v610
        %v643 = vrsqrt.pop %v611
        %v644 = vrsqrt.pop %v612
        %v645 = vrsqrt.pop %v613
        %v646 = vrsqrt.pop %v614
        %v647 = vld [vmem:[%s2] sm:$0xf]
        %v648 = vld [vmem:[%s2 + $0x4] sm:$0xf]
        %v681 = vunpack.c.l.b16 %v390
        %v682 = vunpack.c.l.b16 %v391
        %v683 = vunpack.c.l.b16 %v392
        %v684 = vunpack.c.l.b16 %v393
        %v685 = vunpack.c.l.b16 %v394
        %v686 = vunpack.c.l.b16 %v395
        %v687 = vunpack.c.l.b16 %v396
        %v688 = vunpack.c.l.b16 %v397
        %v689 = vunpack.c.l.b16 %v398
        %v690 = vunpack.c.l.b16 %v399
        %v691 = vunpack.c.l.b16 %v400
        %v692 = vunpack.c.l.b16 %v401
        %v693 = vunpack.c.l.b16 %v402
        %v694 = vunpack.c.l.b16 %v403
        %v695 = vunpack.c.l.b16 %v404
        %v696 = vunpack.c.l.b16 %v405
        %v697 = vunpack.c.l.b16 %v406
        %v698 = vunpack.c.l.b16 %v407
        %v699 = vunpack.c.l.b16 %v408
        %v700 = vunpack.c.l.b16 %v409
        %v701 = vunpack.c.l.b16 %v410
        %v702 = vunpack.c.l.b16 %v411
        %v703 = vunpack.c.l.b16 %v412
        %v704 = vunpack.c.l.b16 %v413
        %v705 = vunpack.c.l.b16 %v414
        %v706 = vunpack.c.l.b16 %v415
        %v707 = vunpack.c.l.b16 %v416
        %v708 = vunpack.c.l.b16 %v417
        %v709 = vunpack.c.l.b16 %v418
        %v710 = vunpack.c.l.b16 %v419
        %v711 = vunpack.c.l.b16 %v420
        %v712 = vunpack.c.l.b16 %v421
        %v713 = vpack.c.b16 %v682, %v681
        %v714 = vpack.c.b16 %v684, %v683
        %v715 = vpack.c.b16 %v686, %v685
        %v716 = vpack.c.b16 %v688, %v687
        %v717 = vpack.c.b16 %v690, %v689
        %v718 = vpack.c.b16 %v692, %v691
        %v719 = vpack.c.b16 %v694, %v693
        %v720 = vpack.c.b16 %v696, %v695
        %v721 = vpack.c.b16 %v698, %v697
        %v722 = vpack.c.b16 %v700, %v699
        %v723 = vpack.c.b16 %v702, %v701
        %v724 = vpack.c.b16 %v704, %v703
        %v725 = vpack.c.b16 %v706, %v705
        %v726 = vpack.c.b16 %v708, %v707
        %v727 = vpack.c.b16 %v710, %v709
        %v728 = vpack.c.b16 %v712, %v711
        %v731 = vunpack.c.l.b16 %v647
        %v732 = vunpack.c.l.b16 %v648
        %v733 = vpack.c.b16 %v732, %v731
        %v736 = vsel %vm486, %v713, 0
        %v739 = vsel %vm486, %v714, 0
        %v742 = vsel %vm486, %v715, 0
        %v745 = vsel %vm486, %v716, 0
        %v748 = vsel %vm486, %v717, 0
        %v751 = vsel %vm486, %v718, 0
        %v754 = vsel %vm486, %v719, 0
        %v757 = vsel %vm486, %v720, 0
        %v760 = vsel %vm486, %v721, 0
        %v763 = vsel %vm486, %v722, 0
        %v766 = vsel %vm486, %v723, 0
        %v769 = vsel %vm486, %v724, 0
        %v772 = vsel %vm486, %v725, 0
        %v775 = vsel %vm486, %v726, 0
        %v778 = vsel %vm486, %v727, 0
        %v781 = vsel %vm486, %v728, 0
        %783 = vmatprep.subr.bf16.mxu0 0
        %784 = vmatpush1.bf16.msra.mxu0 %v733
        %785 = vmatprep.subr.bf16.mxu0 0
        %786 = vmatpush1.bf16.msra.mxu0 0
        %787 = vmatprep.subr.bf16.mxu0 0
        %788 = vmatpush1.bf16.msra.mxu0 0
        %789 = vmatprep.subr.bf16.mxu0 0
        %790 = vmatpush1.bf16.msra.mxu0 0
        %791 = vmatprep.subr.bf16.mxu0 0
        %792 = vmatpush1.bf16.msra.mxu0 0
        %793 = vmatprep.subr.bf16.mxu0 0
        %794 = vmatpush1.bf16.msra.mxu0 0
        %795 = vmatprep.subr.bf16.mxu0 0
        %796 = vmatpush1.bf16.msra.mxu0 0
        %797 = vmatprep.subr.bf16.mxu0 0
        %798 = vmatpush1.bf16.msra.mxu0 0
        %799 = vmatprep.subr.bf16.mxu0 0
        %800 = vmatpush1.bf16.msra.mxu0 0
        %801 = vmatprep.subr.bf16.mxu0 0
        %802 = vmatpush1.bf16.msra.mxu0 0
        %803 = vmatprep.subr.bf16.mxu0 0
        %804 = vmatpush1.bf16.msra.mxu0 0
        %805 = vmatprep.subr.bf16.mxu0 0
        %806 = vmatpush1.bf16.msra.mxu0 0
        %807 = vmatprep.subr.bf16.mxu0 0
        %808 = vmatpush1.bf16.msra.mxu0 0
        %809 = vmatprep.subr.bf16.mxu0 0
        %810 = vmatpush1.bf16.msra.mxu0 0
        %811 = vmatprep.subr.bf16.mxu0 0
        %812 = vmatpush1.bf16.msra.mxu0 0
        %813 = vmatprep.subr.bf16.mxu0 0
        %814 = vmatpush1.bf16.msra.mxu0 0
        %815 = vmatprep.mubr.bf16.mxu0 0
        %816 = vmatmul.mubr.bf16.gmra.mrb[0].mxu0 %v736
        %v817 = vpop.f32.mrb[0].mxu0
        %v818 = vadd.f32 0.0, %v817
        %v819 = vpop.f32.mrb[0].mxu0
        %v820 = vpop.f32.mrb[0].mxu0
        %v821 = vadd.f32 0.0, %v820
        %v822 = vpop.f32.mrb[0].mxu0
        %823 = vmatprep.mubr.bf16.mxu0 0
        %824 = vmatmul.mubr.bf16.gmra.mrb[0].mxu0 %v739
        %v825 = vpop.f32.mrb[0].mxu0
        %v826 = vadd.f32 0.0, %v825
        %v827 = vpop.f32.mrb[0].mxu0
        %v828 = vpop.f32.mrb[0].mxu0
        %v829 = vadd.f32 0.0, %v828
        %v830 = vpop.f32.mrb[0].mxu0
        %831 = vmatprep.mubr.bf16.mxu0 0
        %832 = vmatmul.mubr.bf16.gmra.mrb[0].mxu0 %v742
        %v833 = vpop.f32.mrb[0].mxu0
        %v834 = vadd.f32 0.0, %v833
        %v835 = vpop.f32.mrb[0].mxu0
        %v836 = vpop.f32.mrb[0].mxu0
        %v837 = vadd.f32 0.0, %v836
        %v838 = vpop.f32.mrb[0].mxu0
        %839 = vmatprep.mubr.bf16.mxu0 0
        %840 = vmatmul.mubr.bf16.gmra.mrb[0].mxu0 %v745
        %v841 = vpop.f32.mrb[0].mxu0
        %v842 = vadd.f32 0.0, %v841
        %v843 = vpop.f32.mrb[0].mxu0
        %v844 = vpop.f32.mrb[0].mxu0
        %v845 = vadd.f32 0.0, %v844
        %v846 = vpop.f32.mrb[0].mxu0
        %847 = vmatprep.mubr.bf16.mxu0 0
        %848 = vmatmul.mubr.bf16.gmra.mrb[0].mxu0 %v748
        %v849 = vpop.f32.mrb[0].mxu0
        %v850 = vadd.f32 0.0, %v849
        %v851 = vpop.f32.mrb[0].mxu0
        %v852 = vpop.f32.mrb[0].mxu0
        %v853 = vadd.f32 0.0, %v852
        %v854 = vpop.f32.mrb[0].mxu0
        %855 = vmatprep.mubr.bf16.mxu0 0
        %856 = vmatmul.mubr.bf16.gmra.mrb[0].mxu0 %v751
        %v857 = vpop.f32.mrb[0].mxu0
        %v858 = vadd.f32 0.0, %v857
        %v859 = vpop.f32.mrb[0].mxu0
        %v860 = vpop.f32.mrb[0].mxu0
        %v861 = vadd.f32 0.0, %v860
        %v862 = vpop.f32.mrb[0].mxu0
        %863 = vmatprep.mubr.bf16.mxu0 0
        %864 = vmatmul.mubr.bf16.gmra.mrb[0].mxu0 %v754
        %v865 = vpop.f32.mrb[0].mxu0
        %v866 = vadd.f32 0.0, %v865
        %v867 = vpop.f32.mrb[0].mxu0
        %v868 = vpop.f32.mrb[0].mxu0
        %v869 = vadd.f32 0.0, %v868
        %v870 = vpop.f32.mrb[0].mxu0
        %871 = vmatprep.mubr.bf16.mxu0 0
        %872 = vmatmul.mubr.bf16.gmra.mrb[0].mxu0 %v757
        %v873 = vpop.f32.mrb[0].mxu0
        %v874 = vadd.f32 0.0, %v873
        %v875 = vpop.f32.mrb[0].mxu0
        %v876 = vpop.f32.mrb[0].mxu0
        %v877 = vadd.f32 0.0, %v876
        %v878 = vpop.f32.mrb[0].mxu0
        %879 = vmatprep.mubr.bf16.mxu0 0
        %880 = vmatmul.mubr.bf16.gmra.mrb[0].mxu0 %v760
        %v881 = vpop.f32.mrb[0].mxu0
        %v882 = vadd.f32 0.0, %v881
        %v883 = vpop.f32.mrb[0].mxu0
        %v884 = vpop.f32.mrb[0].mxu0
        %v885 = vadd.f32 0.0, %v884
        %v886 = vpop.f32.mrb[0].mxu0
        %887 = vmatprep.mubr.bf16.mxu0 0
        %888 = vmatmul.mubr.bf16.gmra.mrb[0].mxu0 %v763
        %v889 = vpop.f32.mrb[0].mxu0
        %v890 = vadd.f32 0.0, %v889
        %v891 = vpop.f32.mrb[0].mxu0
        %v892 = vpop.f32.mrb[0].mxu0
        %v893 = vadd.f32 0.0, %v892
        %v894 = vpop.f32.mrb[0].mxu0
        %895 = vmatprep.mubr.bf16.mxu0 0
        %896 = vmatmul.mubr.bf16.gmra.mrb[0].mxu0 %v766
        %v897 = vpop.f32.mrb[0].mxu0
        %v898 = vadd.f32 0.0, %v897
        %v899 = vpop.f32.mrb[0].mxu0
        %v900 = vpop.f32.mrb[0].mxu0
        %v901 = vadd.f32 0.0, %v900
        %v902 = vpop.f32.mrb[0].mxu0
        %903 = vmatprep.mubr.bf16.mxu0 0
        %904 = vmatmul.mubr.bf16.gmra.mrb[0].mxu0 %v769
        %v905 = vpop.f32.mrb[0].mxu0
        %v906 = vadd.f32 0.0, %v905
        %v907 = vpop.f32.mrb[0].mxu0
        %v908 = vpop.f32.mrb[0].mxu0
        %v909 = vadd.f32 0.0, %v908
        %v910 = vpop.f32.mrb[0].mxu0
        %911 = vmatprep.mubr.bf16.mxu0 0
        %912 = vmatmul.mubr.bf16.gmra.mrb[0].mxu0 %v772
        %v913 = vpop.f32.mrb[0].mxu0
        %v914 = vadd.f32 0.0, %v913
        %v915 = vpop.f32.mrb[0].mxu0
        %v916 = vpop.f32.mrb[0].mxu0
        %v917 = vadd.f32 0.0, %v916
        %v918 = vpop.f32.mrb[0].mxu0
        %919 = vmatprep.mubr.bf16.mxu0 0
        %920 = vmatmul.mubr.bf16.gmra.mrb[0].mxu0 %v775
        %v921 = vpop.f32.mrb[0].mxu0
        %v922 = vadd.f32 0.0, %v921
        %v923 = vpop.f32.mrb[0].mxu0
        %v924 = vpop.f32.mrb[0].mxu0
        %v925 = vadd.f32 0.0, %v924
        %v926 = vpop.f32.mrb[0].mxu0
        %927 = vmatprep.mubr.bf16.mxu0 0
        %928 = vmatmul.mubr.bf16.gmra.mrb[0].mxu0 %v778
        %v929 = vpop.f32.mrb[0].mxu0
        %v930 = vadd.f32 0.0, %v929
        %v931 = vpop.f32.mrb[0].mxu0
        %v932 = vpop.f32.mrb[0].mxu0
        %v933 = vadd.f32 0.0, %v932
        %v934 = vpop.f32.mrb[0].mxu0
        %935 = vmatprep.mubr.bf16.mxu0 0
        %936 = vmatmul.mubr.bf16.gmra.mrb[0].mxu0 %v781
        %v937 = vpop.f32.mrb[0].mxu0
        %v938 = vadd.f32 0.0, %v937
        %v939 = vpop.f32.mrb[0].mxu0
        %v940 = vpop.f32.mrb[0].mxu0
        %v941 = vadd.f32 0.0, %v940
        %v942 = vpop.f32.mrb[0].mxu0
        %943 = vdwg.mxu0
        %v944 = vmul.f32 %v615, %v818
        %v945 = vmul.f32 %v616, %v821
        %v946 = vmul.f32 %v617, %v826
        %v947 = vmul.f32 %v618, %v829
        %v948 = vmul.f32 %v619, %v834
        %v949 = vmul.f32 %v620, %v837
        %v950 = vmul.f32 %v621, %v842
        %v951 = vmul.f32 %v622, %v845
        %v952 = vmul.f32 %v623, %v850
        %v953 = vmul.f32 %v624, %v853
        %v954 = vmul.f32 %v625, %v858
        %v955 = vmul.f32 %v626, %v861
        %v956 = vmul.f32 %v627, %v866
        %v957 = vmul.f32 %v628, %v869
        %v958 = vmul.f32 %v629, %v874
        %v959 = vmul.f32 %v630, %v877
        %v960 = vmul.f32 %v631, %v882
        %v961 = vmul.f32 %v632, %v885
        %v962 = vmul.f32 %v633, %v890
        %v963 = vmul.f32 %v634, %v893
        %v964 = vmul.f32 %v635, %v898
        %v965 = vmul.f32 %v636, %v901
        %v966 = vmul.f32 %v637, %v906
        %v967 = vmul.f32 %v638, %v909
        %v968 = vmul.f32 %v639, %v914
        %v969 = vmul.f32 %v640, %v917
        %v970 = vmul.f32 %v641, %v922
        %v971 = vmul.f32 %v642, %v925
        %v972 = vmul.f32 %v643, %v930
        %v973 = vmul.f32 %v644, %v933
        %v974 = vmul.f32 %v645, %v938
        %v975 = vmul.f32 %v646, %v941
        %v976 = vpack.c.bf16 %v945, %v944
        %v977 = vpack.c.bf16 %v947, %v946
        %v978 = vpack.c.bf16 %v949, %v948
        %v979 = vpack.c.bf16 %v951, %v950
        %v980 = vpack.c.bf16 %v953, %v952
        %v981 = vpack.c.bf16 %v955, %v954
        %v982 = vpack.c.bf16 %v957, %v956
        %v983 = vpack.c.bf16 %v959, %v958
        %v984 = vpack.c.bf16 %v961, %v960
        %v985 = vpack.c.bf16 %v963, %v962
        %v986 = vpack.c.bf16 %v965, %v964
        %v987 = vpack.c.bf16 %v967, %v966
        %v988 = vpack.c.bf16 %v969, %v968
        %v989 = vpack.c.bf16 %v971, %v970
        %v990 = vpack.c.bf16 %v973, %v972
        %v991 = vpack.c.bf16 %v975, %v974
        %v994 = vunpack.c.l.b16 %v422
        %v995 = vunpack.c.l.b16 %v423
        %v996 = vpack.c.b16 %v995, %v994
        %v998 = vsel %vm486, %v996, 0
        %1000 = vmatprep.subr.bf16.mxu0 0
        %1001 = vmatpush1.bf16.msra.mxu0 %v976
        %1002 = vmatprep.subr.bf16.mxu0 0
        %1003 = vmatpush1.bf16.msra.mxu0 0
        %1004 = vmatprep.subr.bf16.mxu0 0
        %1005 = vmatpush1.bf16.msra.mxu0 0
        %1006 = vmatprep.subr.bf16.mxu0 0
        %1007 = vmatpush1.bf16.msra.mxu0 0
        %1008 = vmatprep.subr.bf16.mxu0 0
        %1009 = vmatpush1.bf16.msra.mxu0 0
        %1010 = vmatprep.subr.bf16.mxu0 0
        %1011 = vmatpush1.bf16.msra.mxu0 0
        %1012 = vmatprep.subr.bf16.mxu0 0
        %1013 = vmatpush1.bf16.msra.mxu0 0
        %1014 = vmatprep.subr.bf16.mxu0 0
        %1015 = vmatpush1.bf16.msra.mxu0 0
        %1016 = vmatprep.subr.bf16.mxu0 0
        %1017 = vmatpush1.bf16.msra.mxu0 0
        %1018 = vmatprep.subr.bf16.mxu0 0
        %1019 = vmatpush1.bf16.msra.mxu0 0
        %1020 = vmatprep.subr.bf16.mxu0 0
        %1021 = vmatpush1.bf16.msra.mxu0 0
        %1022 = vmatprep.subr.bf16.mxu0 0
        %1023 = vmatpush1.bf16.msra.mxu0 0
        %1024 = vmatprep.subr.bf16.mxu0 0
        %1025 = vmatpush1.bf16.msra.mxu0 0
        %1026 = vmatprep.subr.bf16.mxu0 0
        %1027 = vmatpush1.bf16.msra.mxu0 0
        %1028 = vmatprep.subr.bf16.mxu0 0
        %1029 = vmatpush1.bf16.msra.mxu0 0
        %1030 = vmatprep.subr.bf16.mxu0 0
        %1031 = vmatpush1.bf16.msra.mxu0 0
        %1032 = vmatprep.mubr.bf16.mxu0 0
        %1033 = vmatmul.mubr.bf16.gmra.mrb[0].mxu0 %v998
        %v1034 = vpop.f32.mrb[0].mxu0
        %v1035 = vadd.f32 0.0, %v1034
        %v1036 = vpop.f32.mrb[0].mxu0
        %v1037 = vpop.f32.mrb[0].mxu0
        %v1038 = vadd.f32 0.0, %v1037
        %v1039 = vpop.f32.mrb[0].mxu0
        %1040 = vdwg.mxu0
        %v1043 = vunpack.c.l.b16 %v424
        %v1044 = vunpack.c.l.b16 %v425
        %v1045 = vpack.c.b16 %v1044, %v1043
        %v1047 = vsel %vm486, %v1045, 0
        %1049 = vmatprep.subr.bf16.mxu0 0
        %1050 = vmatpush1.bf16.msra.mxu0 %v977
        %1051 = vmatprep.subr.bf16.mxu0 0
        %1052 = vmatpush1.bf16.msra.mxu0 0
        %1053 = vmatprep.subr.bf16.mxu0 0
        %1054 = vmatpush1.bf16.msra.mxu0 0
        %1055 = vmatprep.subr.bf16.mxu0 0
        %1056 = vmatpush1.bf16.msra.mxu0 0
        %1057 = vmatprep.subr.bf16.mxu0 0
        %1058 = vmatpush1.bf16.msra.mxu0 0
        %1059 = vmatprep.subr.bf16.mxu0 0
        %1060 = vmatpush1.bf16.msra.mxu0 0
        %1061 = vmatprep.subr.bf16.mxu0 0
        %1062 = vmatpush1.bf16.msra.mxu0 0
        %1063 = vmatprep.subr.bf16.mxu0 0
        %1064 = vmatpush1.bf16.msra.mxu0 0
        %1065 = vmatprep.subr.bf16.mxu0 0
        %1066 = vmatpush1.bf16.msra.mxu0 0
        %1067 = vmatprep.subr.bf16.mxu0 0
        %1068 = vmatpush1.bf16.msra.mxu0 0
        %1069 = vmatprep.subr.bf16.mxu0 0
        %1070 = vmatpush1.bf16.msra.mxu0 0
        %1071 = vmatprep.subr.bf16.mxu0 0
        %1072 = vmatpush1.bf16.msra.mxu0 0
        %1073 = vmatprep.subr.bf16.mxu0 0
        %1074 = vmatpush1.bf16.msra.mxu0 0
        %1075 = vmatprep.subr.bf16.mxu0 0
        %1076 = vmatpush1.bf16.msra.mxu0 0
        %1077 = vmatprep.subr.bf16.mxu0 0
        %1078 = vmatpush1.bf16.msra.mxu0 0
        %1079 = vmatprep.subr.bf16.mxu0 0
        %1080 = vmatpush1.bf16.msra.mxu0 0
        %1081 = vmatprep.mubr.bf16.mxu0 0
        %1082 = vmatmul.mubr.bf16.gmra.mrb[0].mxu0 %v1047
        %v1083 = vpop.f32.mrb[0].mxu0
        %v1084 = vadd.f32 0.0, %v1083
        %v1085 = vpop.f32.mrb[0].mxu0
        %v1086 = vpop.f32.mrb[0].mxu0
        %v1087 = vadd.f32 0.0, %v1086
        %v1088 = vpop.f32.mrb[0].mxu0
        %1089 = vdwg.mxu0
        %v1092 = vunpack.c.l.b16 %v426
        %v1093 = vunpack.c.l.b16 %v427
        %v1094 = vpack.c.b16 %v1093, %v1092
        %v1096 = vsel %vm486, %v1094, 0
        %1098 = vmatprep.subr.bf16.mxu0 0
        %1099 = vmatpush1.bf16.msra.mxu0 %v978
        %1100 = vmatprep.subr.bf16.mxu0 0
        %1101 = vmatpush1.bf16.msra.mxu0 0
        %1102 = vmatprep.subr.bf16.mxu0 0
        %1103 = vmatpush1.bf16.msra.mxu0 0
        %1104 = vmatprep.subr.bf16.mxu0 0
        %1105 = vmatpush1.bf16.msra.mxu0 0
        %1106 = vmatprep.subr.bf16.mxu0 0
        %1107 = vmatpush1.bf16.msra.mxu0 0
        %1108 = vmatprep.subr.bf16.mxu0 0
        %1109 = vmatpush1.bf16.msra.mxu0 0
        %1110 = vmatprep.subr.bf16.mxu0 0
        %1111 = vmatpush1.bf16.msra.mxu0 0
        %1112 = vmatprep.subr.bf16.mxu0 0
        %1113 = vmatpush1.bf16.msra.mxu0 0
        %1114 = vmatprep.subr.bf16.mxu0 0
        %1115 = vmatpush1.bf16.msra.mxu0 0
        %1116 = vmatprep.subr.bf16.mxu0 0
        %1117 = vmatpush1.bf16.msra.mxu0 0
        %1118 = vmatprep.subr.bf16.mxu0 0
        %1119 = vmatpush1.bf16.msra.mxu0 0
        %1120 = vmatprep.subr.bf16.mxu0 0
        %1121 = vmatpush1.bf16.msra.mxu0 0
        %1122 = vmatprep.subr.bf16.mxu0 0
        %1123 = vmatpush1.bf16.msra.mxu0 0
        %1124 = vmatprep.subr.bf16.mxu0 0
        %1125 = vmatpush1.bf16.msra.mxu0 0
        %1126 = vmatprep.subr.bf16.mxu0 0
        %1127 = vmatpush1.bf16.msra.mxu0 0
        %1128 = vmatprep.subr.bf16.mxu0 0
        %1129 = vmatpush1.bf16.msra.mxu0 0
        %1130 = vmatprep.mubr.bf16.mxu0 0
        %1131 = vmatmul.mubr.bf16.gmra.mrb[0].mxu0 %v1096
        %v1132 = vpop.f32.mrb[0].mxu0
        %v1133 = vadd.f32 0.0, %v1132
        %v1134 = vpop.f32.mrb[0].mxu0
        %v1135 = vpop.f32.mrb[0].mxu0
        %v1136 = vadd.f32 0.0, %v1135
        %v1137 = vpop.f32.mrb[0].mxu0
        %1138 = vdwg.mxu0
        %v1141 = vunpack.c.l.b16 %v428
        %v1142 = vunpack.c.l.b16 %v429
        %v1143 = vpack.c.b16 %v1142, %v1141
        %v1145 = vsel %vm486, %v1143, 0
        %1147 = vmatprep.subr.bf16.mxu0 0
        %1148 = vmatpush1.bf16.msra.mxu0 %v979
        %1149 = vmatprep.subr.bf16.mxu0 0
        %1150 = vmatpush1.bf16.msra.mxu0 0
        %1151 = vmatprep.subr.bf16.mxu0 0
        %1152 = vmatpush1.bf16.msra.mxu0 0
        %1153 = vmatprep.subr.bf16.mxu0 0
        %1154 = vmatpush1.bf16.msra.mxu0 0
        %1155 = vmatprep.subr.bf16.mxu0 0
        %1156 = vmatpush1.bf16.msra.mxu0 0
        %1157 = vmatprep.subr.bf16.mxu0 0
        %1158 = vmatpush1.bf16.msra.mxu0 0
        %1159 = vmatprep.subr.bf16.mxu0 0
        %1160 = vmatpush1.bf16.msra.mxu0 0
        %1161 = vmatprep.subr.bf16.mxu0 0
        %1162 = vmatpush1.bf16.msra.mxu0 0
        %1163 = vmatprep.subr.bf16.mxu0 0
        %1164 = vmatpush1.bf16.msra.mxu0 0
        %1165 = vmatprep.subr.bf16.mxu0 0
        %1166 = vmatpush1.bf16.msra.mxu0 0
        %1167 = vmatprep.subr.bf16.mxu0 0
        %1168 = vmatpush1.bf16.msra.mxu0 0
        %1169 = vmatprep.subr.bf16.mxu0 0
        %1170 = vmatpush1.bf16.msra.mxu0 0
        %1171 = vmatprep.subr.bf16.mxu0 0
        %1172 = vmatpush1.bf16.msra.mxu0 0
        %1173 = vmatprep.subr.bf16.mxu0 0
        %1174 = vmatpush1.bf16.msra.mxu0 0
        %1175 = vmatprep.subr.bf16.mxu0 0
        %1176 = vmatpush1.bf16.msra.mxu0 0
        %1177 = vmatprep.subr.bf16.mxu0 0
        %1178 = vmatpush1.bf16.msra.mxu0 0
        %1179 = vmatprep.mubr.bf16.mxu0 0
        %1180 = vmatmul.mubr.bf16.gmra.mrb[0].mxu0 %v1145
        %v1181 = vpop.f32.mrb[0].mxu0
        %v1182 = vadd.f32 0.0, %v1181
        %v1183 = vpop.f32.mrb[0].mxu0
        %v1184 = vpop.f32.mrb[0].mxu0
        %v1185 = vadd.f32 0.0, %v1184
        %v1186 = vpop.f32.mrb[0].mxu0
        %1187 = vdwg.mxu0
        %v1190 = vunpack.c.l.b16 %v430
        %v1191 = vunpack.c.l.b16 %v431
        %v1192 = vpack.c.b16 %v1191, %v1190
        %v1194 = vsel %vm486, %v1192, 0
        %1196 = vmatprep.subr.bf16.mxu0 0
        %1197 = vmatpush1.bf16.msra.mxu0 %v980
        %1198 = vmatprep.subr.bf16.mxu0 0
        %1199 = vmatpush1.bf16.msra.mxu0 0
        %1200 = vmatprep.subr.bf16.mxu0 0
        %1201 = vmatpush1.bf16.msra.mxu0 0
        %1202 = vmatprep.subr.bf16.mxu0 0
        %1203 = vmatpush1.bf16.msra.mxu0 0
        %1204 = vmatprep.subr.bf16.mxu0 0
        %1205 = vmatpush1.bf16.msra.mxu0 0
        %1206 = vmatprep.subr.bf16.mxu0 0
        %1207 = vmatpush1.bf16.msra.mxu0 0
        %1208 = vmatprep.subr.bf16.mxu0 0
        %1209 = vmatpush1.bf16.msra.mxu0 0
        %1210 = vmatprep.subr.bf16.mxu0 0
        %1211 = vmatpush1.bf16.msra.mxu0 0
        %1212 = vmatprep.subr.bf16.mxu0 0
        %1213 = vmatpush1.bf16.msra.mxu0 0
        %1214 = vmatprep.subr.bf16.mxu0 0
        %1215 = vmatpush1.bf16.msra.mxu0 0
        %1216 = vmatprep.subr.bf16.mxu0 0
        %1217 = vmatpush1.bf16.msra.mxu0 0
        %1218 = vmatprep.subr.bf16.mxu0 0
        %1219 = vmatpush1.bf16.msra.mxu0 0
        %1220 = vmatprep.subr.bf16.mxu0 0
        %1221 = vmatpush1.bf16.msra.mxu0 0
        %1222 = vmatprep.subr.bf16.mxu0 0
        %1223 = vmatpush1.bf16.msra.mxu0 0
        %1224 = vmatprep.subr.bf16.mxu0 0
        %1225 = vmatpush1.bf16.msra.mxu0 0
        %1226 = vmatprep.subr.bf16.mxu0 0
        %1227 = vmatpush1.bf16.msra.mxu0 0
        %1228 = vmatprep.mubr.bf16.mxu0 0
        %1229 = vmatmul.mubr.bf16.gmra.mrb[0].mxu0 %v1194
        %v1230 = vpop.f32.mrb[0].mxu0
        %v1231 = vadd.f32 0.0, %v1230
        %v1232 = vpop.f32.mrb[0].mxu0
        %v1233 = vpop.f32.mrb[0].mxu0
        %v1234 = vadd.f32 0.0, %v1233
        %v1235 = vpop.f32.mrb[0].mxu0
        %1236 = vdwg.mxu0
        %v1239 = vunpack.c.l.b16 %v432
        %v1240 = vunpack.c.l.b16 %v433
        %v1241 = vpack.c.b16 %v1240, %v1239
        %v1243 = vsel %vm486, %v1241, 0
        %1245 = vmatprep.subr.bf16.mxu0 0
        %1246 = vmatpush1.bf16.msra.mxu0 %v981
        %1247 = vmatprep.subr.bf16.mxu0 0
        %1248 = vmatpush1.bf16.msra.mxu0 0
        %1249 = vmatprep.subr.bf16.mxu0 0
        %1250 = vmatpush1.bf16.msra.mxu0 0
        %1251 = vmatprep.subr.bf16.mxu0 0
        %1252 = vmatpush1.bf16.msra.mxu0 0
        %1253 = vmatprep.subr.bf16.mxu0 0
        %1254 = vmatpush1.bf16.msra.mxu0 0
        %1255 = vmatprep.subr.bf16.mxu0 0
        %1256 = vmatpush1.bf16.msra.mxu0 0
        %1257 = vmatprep.subr.bf16.mxu0 0
        %1258 = vmatpush1.bf16.msra.mxu0 0
        %1259 = vmatprep.subr.bf16.mxu0 0
        %1260 = vmatpush1.bf16.msra.mxu0 0
        %1261 = vmatprep.subr.bf16.mxu0 0
        %1262 = vmatpush1.bf16.msra.mxu0 0
        %1263 = vmatprep.subr.bf16.mxu0 0
        %1264 = vmatpush1.bf16.msra.mxu0 0
        %1265 = vmatprep.subr.bf16.mxu0 0
        %1266 = vmatpush1.bf16.msra.mxu0 0
        %1267 = vmatprep.subr.bf16.mxu0 0
        %1268 = vmatpush1.bf16.msra.mxu0 0
        %1269 = vmatprep.subr.bf16.mxu0 0
        %1270 = vmatpush1.bf16.msra.mxu0 0
        %1271 = vmatprep.subr.bf16.mxu0 0
        %1272 = vmatpush1.bf16.msra.mxu0 0
        %1273 = vmatprep.subr.bf16.mxu0 0
        %1274 = vmatpush1.bf16.msra.mxu0 0
        %1275 = vmatprep.subr.bf16.mxu0 0
        %1276 = vmatpush1.bf16.msra.mxu0 0
        %1277 = vmatprep.mubr.bf16.mxu0 0
        %1278 = vmatmul.mubr.bf16.gmra.mrb[0].mxu0 %v1243
        %v1279 = vpop.f32.mrb[0].mxu0
        %v1280 = vadd.f32 0.0, %v1279
        %v1281 = vpop.f32.mrb[0].mxu0
        %v1282 = vpop.f32.mrb[0].mxu0
        %v1283 = vadd.f32 0.0, %v1282
        %v1284 = vpop.f32.mrb[0].mxu0
        %1285 = vdwg.mxu0
        %v1288 = vunpack.c.l.b16 %v434
        %v1289 = vunpack.c.l.b16 %v435
        %v1290 = vpack.c.b16 %v1289, %v1288
        %v1292 = vsel %vm486, %v1290, 0
        %1294 = vmatprep.subr.bf16.mxu0 0
        %1295 = vmatpush1.bf16.msra.mxu0 %v982
        %1296 = vmatprep.subr.bf16.mxu0 0
        %1297 = vmatpush1.bf16.msra.mxu0 0
        %1298 = vmatprep.subr.bf16.mxu0 0
        %1299 = vmatpush1.bf16.msra.mxu0 0
        %1300 = vmatprep.subr.bf16.mxu0 0
        %1301 = vmatpush1.bf16.msra.mxu0 0
        %1302 = vmatprep.subr.bf16.mxu0 0
        %1303 = vmatpush1.bf16.msra.mxu0 0
        %1304 = vmatprep.subr.bf16.mxu0 0
        %1305 = vmatpush1.bf16.msra.mxu0 0
        %1306 = vmatprep.subr.bf16.mxu0 0
        %1307 = vmatpush1.bf16.msra.mxu0 0
        %1308 = vmatprep.subr.bf16.mxu0 0
        %1309 = vmatpush1.bf16.msra.mxu0 0
        %1310 = vmatprep.subr.bf16.mxu0 0
        %1311 = vmatpush1.bf16.msra.mxu0 0
        %1312 = vmatprep.subr.bf16.mxu0 0
        %1313 = vmatpush1.bf16.msra.mxu0 0
        %1314 = vmatprep.subr.bf16.mxu0 0
        %1315 = vmatpush1.bf16.msra.mxu0 0
        %1316 = vmatprep.subr.bf16.mxu0 0
        %1317 = vmatpush1.bf16.msra.mxu0 0
        %1318 = vmatprep.subr.bf16.mxu0 0
        %1319 = vmatpush1.bf16.msra.mxu0 0
        %1320 = vmatprep.subr.bf16.mxu0 0
        %1321 = vmatpush1.bf16.msra.mxu0 0
        %1322 = vmatprep.subr.bf16.mxu0 0
        %1323 = vmatpush1.bf16.msra.mxu0 0
        %1324 = vmatprep.subr.bf16.mxu0 0
        %1325 = vmatpush1.bf16.msra.mxu0 0
        %1326 = vmatprep.mubr.bf16.mxu0 0
        %1327 = vmatmul.mubr.bf16.gmra.mrb[0].mxu0 %v1292
        %v1328 = vpop.f32.mrb[0].mxu0
        %v1329 = vadd.f32 0.0, %v1328
        %v1330 = vpop.f32.mrb[0].mxu0
        %v1331 = vpop.f32.mrb[0].mxu0
        %v1332 = vadd.f32 0.0, %v1331
        %v1333 = vpop.f32.mrb[0].mxu0
        %1334 = vdwg.mxu0
        %v1337 = vunpack.c.l.b16 %v436
        %v1338 = vunpack.c.l.b16 %v437
        %v1339 = vpack.c.b16 %v1338, %v1337
        %v1341 = vsel %vm486, %v1339, 0
        %1343 = vmatprep.subr.bf16.mxu0 0
        %1344 = vmatpush1.bf16.msra.mxu0 %v983
        %1345 = vmatprep.subr.bf16.mxu0 0
        %1346 = vmatpush1.bf16.msra.mxu0 0
        %1347 = vmatprep.subr.bf16.mxu0 0
        %1348 = vmatpush1.bf16.msra.mxu0 0
        %1349 = vmatprep.subr.bf16.mxu0 0
        %1350 = vmatpush1.bf16.msra.mxu0 0
        %1351 = vmatprep.subr.bf16.mxu0 0
        %1352 = vmatpush1.bf16.msra.mxu0 0
        %1353 = vmatprep.subr.bf16.mxu0 0
        %1354 = vmatpush1.bf16.msra.mxu0 0
        %1355 = vmatprep.subr.bf16.mxu0 0
        %1356 = vmatpush1.bf16.msra.mxu0 0
        %1357 = vmatprep.subr.bf16.mxu0 0
        %1358 = vmatpush1.bf16.msra.mxu0 0
        %1359 = vmatprep.subr.bf16.mxu0 0
        %1360 = vmatpush1.bf16.msra.mxu0 0
        %1361 = vmatprep.subr.bf16.mxu0 0
        %1362 = vmatpush1.bf16.msra.mxu0 0
        %1363 = vmatprep.subr.bf16.mxu0 0
        %1364 = vmatpush1.bf16.msra.mxu0 0
        %1365 = vmatprep.subr.bf16.mxu0 0
        %1366 = vmatpush1.bf16.msra.mxu0 0
        %1367 = vmatprep.subr.bf16.mxu0 0
        %1368 = vmatpush1.bf16.msra.mxu0 0
        %1369 = vmatprep.subr.bf16.mxu0 0
        %1370 = vmatpush1.bf16.msra.mxu0 0
        %1371 = vmatprep.subr.bf16.mxu0 0
        %1372 = vmatpush1.bf16.msra.mxu0 0
        %1373 = vmatprep.subr.bf16.mxu0 0
        %1374 = vmatpush1.bf16.msra.mxu0 0
        %1375 = vmatprep.mubr.bf16.mxu0 0
        %1376 = vmatmul.mubr.bf16.gmra.mrb[0].mxu0 %v1341
        %v1377 = vpop.f32.mrb[0].mxu0
        %v1378 = vadd.f32 0.0, %v1377
        %v1379 = vpop.f32.mrb[0].mxu0
        %v1380 = vpop.f32.mrb[0].mxu0
        %v1381 = vadd.f32 0.0, %v1380
        %v1382 = vpop.f32.mrb[0].mxu0
        %1383 = vdwg.mxu0
        %v1386 = vunpack.c.l.b16 %v438
        %v1387 = vunpack.c.l.b16 %v439
        %v1388 = vpack.c.b16 %v1387, %v1386
        %v1390 = vsel %vm486, %v1388, 0
        %1392 = vmatprep.subr.bf16.mxu0 0
        %1393 = vmatpush1.bf16.msra.mxu0 %v984
        %1394 = vmatprep.subr.bf16.mxu0 0
        %1395 = vmatpush1.bf16.msra.mxu0 0
        %1396 = vmatprep.subr.bf16.mxu0 0
        %1397 = vmatpush1.bf16.msra.mxu0 0
        %1398 = vmatprep.subr.bf16.mxu0 0
        %1399 = vmatpush1.bf16.msra.mxu0 0
        %1400 = vmatprep.subr.bf16.mxu0 0
        %1401 = vmatpush1.bf16.msra.mxu0 0
        %1402 = vmatprep.subr.bf16.mxu0 0
        %1403 = vmatpush1.bf16.msra.mxu0 0
        %1404 = vmatprep.subr.bf16.mxu0 0
        %1405 = vmatpush1.bf16.msra.mxu0 0
        %1406 = vmatprep.subr.bf16.mxu0 0
        %1407 = vmatpush1.bf16.msra.mxu0 0
        %1408 = vmatprep.subr.bf16.mxu0 0
        %1409 = vmatpush1.bf16.msra.mxu0 0
        %1410 = vmatprep.subr.bf16.mxu0 0
        %1411 = vmatpush1.bf16.msra.mxu0 0
        %1412 = vmatprep.subr.bf16.mxu0 0
        %1413 = vmatpush1.bf16.msra.mxu0 0
        %1414 = vmatprep.subr.bf16.mxu0 0
        %1415 = vmatpush1.bf16.msra.mxu0 0
        %1416 = vmatprep.subr.bf16.mxu0 0
        %1417 = vmatpush1.bf16.msra.mxu0 0
        %1418 = vmatprep.subr.bf16.mxu0 0
        %1419 = vmatpush1.bf16.msra.mxu0 0
        %1420 = vmatprep.subr.bf16.mxu0 0
        %1421 = vmatpush1.bf16.msra.mxu0 0
        %1422 = vmatprep.subr.bf16.mxu0 0
        %1423 = vmatpush1.bf16.msra.mxu0 0
        %1424 = vmatprep.mubr.bf16.mxu0 0
        %1425 = vmatmul.mubr.bf16.gmra.mrb[0].mxu0 %v1390
        %v1426 = vpop.f32.mrb[0].mxu0
        %v1427 = vadd.f32 0.0, %v1426
        %v1428 = vpop.f32.mrb[0].mxu0
        %v1429 = vpop.f32.mrb[0].mxu0
        %v1430 = vadd.f32 0.0, %v1429
        %v1431 = vpop.f32.mrb[0].mxu0
        %1432 = vdwg.mxu0
        %v1435 = vunpack.c.l.b16 %v440
        %v1436 = vunpack.c.l.b16 %v441
        %v1437 = vpack.c.b16 %v1436, %v1435
        %v1439 = vsel %vm486, %v1437, 0
        %1441 = vmatprep.subr.bf16.mxu0 0
        %1442 = vmatpush1.bf16.msra.mxu0 %v985
        %1443 = vmatprep.subr.bf16.mxu0 0
        %1444 = vmatpush1.bf16.msra.mxu0 0
        %1445 = vmatprep.subr.bf16.mxu0 0
        %1446 = vmatpush1.bf16.msra.mxu0 0
        %1447 = vmatprep.subr.bf16.mxu0 0
        %1448 = vmatpush1.bf16.msra.mxu0 0
        %1449 = vmatprep.subr.bf16.mxu0 0
        %1450 = vmatpush1.bf16.msra.mxu0 0
        %1451 = vmatprep.subr.bf16.mxu0 0
        %1452 = vmatpush1.bf16.msra.mxu0 0
        %1453 = vmatprep.subr.bf16.mxu0 0
        %1454 = vmatpush1.bf16.msra.mxu0 0
        %1455 = vmatprep.subr.bf16.mxu0 0
        %1456 = vmatpush1.bf16.msra.mxu0 0
        %1457 = vmatprep.subr.bf16.mxu0 0
        %1458 = vmatpush1.bf16.msra.mxu0 0
        %1459 = vmatprep.subr.bf16.mxu0 0
        %1460 = vmatpush1.bf16.msra.mxu0 0
        %1461 = vmatprep.subr.bf16.mxu0 0
        %1462 = vmatpush1.bf16.msra.mxu0 0
        %1463 = vmatprep.subr.bf16.mxu0 0
        %1464 = vmatpush1.bf16.msra.mxu0 0
        %1465 = vmatprep.subr.bf16.mxu0 0
        %1466 = vmatpush1.bf16.msra.mxu0 0
        %1467 = vmatprep.subr.bf16.mxu0 0
        %1468 = vmatpush1.bf16.msra.mxu0 0
        %1469 = vmatprep.subr.bf16.mxu0 0
        %1470 = vmatpush1.bf16.msra.mxu0 0
        %1471 = vmatprep.subr.bf16.mxu0 0
        %1472 = vmatpush1.bf16.msra.mxu0 0
        %1473 = vmatprep.mubr.bf16.mxu0 0
        %1474 = vmatmul.mubr.bf16.gmra.mrb[0].mxu0 %v1439
        %v1475 = vpop.f32.mrb[0].mxu0
        %v1476 = vadd.f32 0.0, %v1475
        %v1477 = vpop.f32.mrb[0].mxu0
        %v1478 = vpop.f32.mrb[0].mxu0
        %v1479 = vadd.f32 0.0, %v1478
        %v1480 = vpop.f32.mrb[0].mxu0
        %1481 = vdwg.mxu0
        %v1484 = vunpack.c.l.b16 %v442
        %v1485 = vunpack.c.l.b16 %v443
        %v1486 = vpack.c.b16 %v1485, %v1484
        %v1488 = vsel %vm486, %v1486, 0
        %1490 = vmatprep.subr.bf16.mxu0 0
        %1491 = vmatpush1.bf16.msra.mxu0 %v986
        %1492 = vmatprep.subr.bf16.mxu0 0
        %1493 = vmatpush1.bf16.msra.mxu0 0
        %1494 = vmatprep.subr.bf16.mxu0 0
        %1495 = vmatpush1.bf16.msra.mxu0 0
        %1496 = vmatprep.subr.bf16.mxu0 0
        %1497 = vmatpush1.bf16.msra.mxu0 0
        %1498 = vmatprep.subr.bf16.mxu0 0
        %1499 = vmatpush1.bf16.msra.mxu0 0
        %1500 = vmatprep.subr.bf16.mxu0 0
        %1501 = vmatpush1.bf16.msra.mxu0 0
        %1502 = vmatprep.subr.bf16.mxu0 0
        %1503 = vmatpush1.bf16.msra.mxu0 0
        %1504 = vmatprep.subr.bf16.mxu0 0
        %1505 = vmatpush1.bf16.msra.mxu0 0
        %1506 = vmatprep.subr.bf16.mxu0 0
        %1507 = vmatpush1.bf16.msra.mxu0 0
        %1508 = vmatprep.subr.bf16.mxu0 0
        %1509 = vmatpush1.bf16.msra.mxu0 0
        %1510 = vmatprep.subr.bf16.mxu0 0
        %1511 = vmatpush1.bf16.msra.mxu0 0
        %1512 = vmatprep.subr.bf16.mxu0 0
        %1513 = vmatpush1.bf16.msra.mxu0 0
        %1514 = vmatprep.subr.bf16.mxu0 0
        %1515 = vmatpush1.bf16.msra.mxu0 0
        %1516 = vmatprep.subr.bf16.mxu0 0
        %1517 = vmatpush1.bf16.msra.mxu0 0
        %1518 = vmatprep.subr.bf16.mxu0 0
        %1519 = vmatpush1.bf16.msra.mxu0 0
        %1520 = vmatprep.subr.bf16.mxu0 0
        %1521 = vmatpush1.bf16.msra.mxu0 0
        %1522 = vmatprep.mubr.bf16.mxu0 0
        %1523 = vmatmul.mubr.bf16.gmra.mrb[0].mxu0 %v1488
        %v1524 = vpop.f32.mrb[0].mxu0
        %v1525 = vadd.f32 0.0, %v1524
        %v1526 = vpop.f32.mrb[0].mxu0
        %v1527 = vpop.f32.mrb[0].mxu0
        %v1528 = vadd.f32 0.0, %v1527
        %v1529 = vpop.f32.mrb[0].mxu0
        %1530 = vdwg.mxu0
        %v1533 = vunpack.c.l.b16 %v444
        %v1534 = vunpack.c.l.b16 %v445
        %v1535 = vpack.c.b16 %v1534, %v1533
        %v1537 = vsel %vm486, %v1535, 0
        %1539 = vmatprep.subr.bf16.mxu0 0
        %1540 = vmatpush1.bf16.msra.mxu0 %v987
        %1541 = vmatprep.subr.bf16.mxu0 0
        %1542 = vmatpush1.bf16.msra.mxu0 0
        %1543 = vmatprep.subr.bf16.mxu0 0
        %1544 = vmatpush1.bf16.msra.mxu0 0
        %1545 = vmatprep.subr.bf16.mxu0 0
        %1546 = vmatpush1.bf16.msra.mxu0 0
        %1547 = vmatprep.subr.bf16.mxu0 0
        %1548 = vmatpush1.bf16.msra.mxu0 0
        %1549 = vmatprep.subr.bf16.mxu0 0
        %1550 = vmatpush1.bf16.msra.mxu0 0
        %1551 = vmatprep.subr.bf16.mxu0 0
        %1552 = vmatpush1.bf16.msra.mxu0 0
        %1553 = vmatprep.subr.bf16.mxu0 0
        %1554 = vmatpush1.bf16.msra.mxu0 0
        %1555 = vmatprep.subr.bf16.mxu0 0
        %1556 = vmatpush1.bf16.msra.mxu0 0
        %1557 = vmatprep.subr.bf16.mxu0 0
        %1558 = vmatpush1.bf16.msra.mxu0 0
        %1559 = vmatprep.subr.bf16.mxu0 0
        %1560 = vmatpush1.bf16.msra.mxu0 0
        %1561 = vmatprep.subr.bf16.mxu0 0
        %1562 = vmatpush1.bf16.msra.mxu0 0
        %1563 = vmatprep.subr.bf16.mxu0 0
        %1564 = vmatpush1.bf16.msra.mxu0 0
        %1565 = vmatprep.subr.bf16.mxu0 0
        %1566 = vmatpush1.bf16.msra.mxu0 0
        %1567 = vmatprep.subr.bf16.mxu0 0
        %1568 = vmatpush1.bf16.msra.mxu0 0
        %1569 = vmatprep.subr.bf16.mxu0 0
        %1570 = vmatpush1.bf16.msra.mxu0 0
        %1571 = vmatprep.mubr.bf16.mxu0 0
        %1572 = vmatmul.mubr.bf16.gmra.mrb[0].mxu0 %v1537
        %v1573 = vpop.f32.mrb[0].mxu0
        %v1574 = vadd.f32 0.0, %v1573
        %v1575 = vpop.f32.mrb[0].mxu0
        %v1576 = vpop.f32.mrb[0].mxu0
        %v1577 = vadd.f32 0.0, %v1576
        %v1578 = vpop.f32.mrb[0].mxu0
        %1579 = vdwg.mxu0
        %v1582 = vunpack.c.l.b16 %v446
        %v1583 = vunpack.c.l.b16 %v447
        %v1584 = vpack.c.b16 %v1583, %v1582
        %v1586 = vsel %vm486, %v1584, 0
        %1588 = vmatprep.subr.bf16.mxu0 0
        %1589 = vmatpush1.bf16.msra.mxu0 %v988
        %1590 = vmatprep.subr.bf16.mxu0 0
        %1591 = vmatpush1.bf16.msra.mxu0 0
        %1592 = vmatprep.subr.bf16.mxu0 0
        %1593 = vmatpush1.bf16.msra.mxu0 0
        %1594 = vmatprep.subr.bf16.mxu0 0
        %1595 = vmatpush1.bf16.msra.mxu0 0
        %1596 = vmatprep.subr.bf16.mxu0 0
        %1597 = vmatpush1.bf16.msra.mxu0 0
        %1598 = vmatprep.subr.bf16.mxu0 0
        %1599 = vmatpush1.bf16.msra.mxu0 0
        %1600 = vmatprep.subr.bf16.mxu0 0
        %1601 = vmatpush1.bf16.msra.mxu0 0
        %1602 = vmatprep.subr.bf16.mxu0 0
        %1603 = vmatpush1.bf16.msra.mxu0 0
        %1604 = vmatprep.subr.bf16.mxu0 0
        %1605 = vmatpush1.bf16.msra.mxu0 0
        %1606 = vmatprep.subr.bf16.mxu0 0
        %1607 = vmatpush1.bf16.msra.mxu0 0
        %1608 = vmatprep.subr.bf16.mxu0 0
        %1609 = vmatpush1.bf16.msra.mxu0 0
        %1610 = vmatprep.subr.bf16.mxu0 0
        %1611 = vmatpush1.bf16.msra.mxu0 0
        %1612 = vmatprep.subr.bf16.mxu0 0
        %1613 = vmatpush1.bf16.msra.mxu0 0
        %1614 = vmatprep.subr.bf16.mxu0 0
        %1615 = vmatpush1.bf16.msra.mxu0 0
        %1616 = vmatprep.subr.bf16.mxu0 0
        %1617 = vmatpush1.bf16.msra.mxu0 0
        %1618 = vmatprep.subr.bf16.mxu0 0
        %1619 = vmatpush1.bf16.msra.mxu0 0
        %1620 = vmatprep.mubr.bf16.mxu0 0
        %1621 = vmatmul.mubr.bf16.gmra.mrb[0].mxu0 %v1586
        %v1622 = vpop.f32.mrb[0].mxu0
        %v1623 = vadd.f32 0.0, %v1622
        %v1624 = vpop.f32.mrb[0].mxu0
        %v1625 = vpop.f32.mrb[0].mxu0
        %v1626 = vadd.f32 0.0, %v1625
        %v1627 = vpop.f32.mrb[0].mxu0
        %1628 = vdwg.mxu0
        %v1631 = vunpack.c.l.b16 %v448
        %v1632 = vunpack.c.l.b16 %v449
        %v1633 = vpack.c.b16 %v1632, %v1631
        %v1635 = vsel %vm486, %v1633, 0
        %1637 = vmatprep.subr.bf16.mxu0 0
        %1638 = vmatpush1.bf16.msra.mxu0 %v989
        %1639 = vmatprep.subr.bf16.mxu0 0
        %1640 = vmatpush1.bf16.msra.mxu0 0
        %1641 = vmatprep.subr.bf16.mxu0 0
        %1642 = vmatpush1.bf16.msra.mxu0 0
        %1643 = vmatprep.subr.bf16.mxu0 0
        %1644 = vmatpush1.bf16.msra.mxu0 0
        %1645 = vmatprep.subr.bf16.mxu0 0
        %1646 = vmatpush1.bf16.msra.mxu0 0
        %1647 = vmatprep.subr.bf16.mxu0 0
        %1648 = vmatpush1.bf16.msra.mxu0 0
        %1649 = vmatprep.subr.bf16.mxu0 0
        %1650 = vmatpush1.bf16.msra.mxu0 0
        %1651 = vmatprep.subr.bf16.mxu0 0
        %1652 = vmatpush1.bf16.msra.mxu0 0
        %1653 = vmatprep.subr.bf16.mxu0 0
        %1654 = vmatpush1.bf16.msra.mxu0 0
        %1655 = vmatprep.subr.bf16.mxu0 0
        %1656 = vmatpush1.bf16.msra.mxu0 0
        %1657 = vmatprep.subr.bf16.mxu0 0
        %1658 = vmatpush1.bf16.msra.mxu0 0
        %1659 = vmatprep.subr.bf16.mxu0 0
        %1660 = vmatpush1.bf16.msra.mxu0 0
        %1661 = vmatprep.subr.bf16.mxu0 0
        %1662 = vmatpush1.bf16.msra.mxu0 0
        %1663 = vmatprep.subr.bf16.mxu0 0
        %1664 = vmatpush1.bf16.msra.mxu0 0
        %1665 = vmatprep.subr.bf16.mxu0 0
        %1666 = vmatpush1.bf16.msra.mxu0 0
        %1667 = vmatprep.subr.bf16.mxu0 0
        %1668 = vmatpush1.bf16.msra.mxu0 0
        %1669 = vmatprep.mubr.bf16.mxu0 0
        %1670 = vmatmul.mubr.bf16.gmra.mrb[0].mxu0 %v1635
        %v1671 = vpop.f32.mrb[0].mxu0
        %v1672 = vadd.f32 0.0, %v1671
        %v1673 = vpop.f32.mrb[0].mxu0
        %v1674 = vpop.f32.mrb[0].mxu0
        %v1675 = vadd.f32 0.0, %v1674
        %v1676 = vpop.f32.mrb[0].mxu0
        %1677 = vdwg.mxu0
        %v1680 = vunpack.c.l.b16 %v450
        %v1681 = vunpack.c.l.b16 %v451
        %v1682 = vpack.c.b16 %v1681, %v1680
        %v1684 = vsel %vm486, %v1682, 0
        %1686 = vmatprep.subr.bf16.mxu0 0
        %1687 = vmatpush1.bf16.msra.mxu0 %v990
        %1688 = vmatprep.subr.bf16.mxu0 0
        %1689 = vmatpush1.bf16.msra.mxu0 0
        %1690 = vmatprep.subr.bf16.mxu0 0
        %1691 = vmatpush1.bf16.msra.mxu0 0
        %1692 = vmatprep.subr.bf16.mxu0 0
        %1693 = vmatpush1.bf16.msra.mxu0 0
        %1694 = vmatprep.subr.bf16.mxu0 0
        %1695 = vmatpush1.bf16.msra.mxu0 0
        %1696 = vmatprep.subr.bf16.mxu0 0
        %1697 = vmatpush1.bf16.msra.mxu0 0
        %1698 = vmatprep.subr.bf16.mxu0 0
        %1699 = vmatpush1.bf16.msra.mxu0 0
        %1700 = vmatprep.subr.bf16.mxu0 0
        %1701 = vmatpush1.bf16.msra.mxu0 0
        %1702 = vmatprep.subr.bf16.mxu0 0
        %1703 = vmatpush1.bf16.msra.mxu0 0
        %1704 = vmatprep.subr.bf16.mxu0 0
        %1705 = vmatpush1.bf16.msra.mxu0 0
        %1706 = vmatprep.subr.bf16.mxu0 0
        %1707 = vmatpush1.bf16.msra.mxu0 0
        %1708 = vmatprep.subr.bf16.mxu0 0
        %1709 = vmatpush1.bf16.msra.mxu0 0
        %1710 = vmatprep.subr.bf16.mxu0 0
        %1711 = vmatpush1.bf16.msra.mxu0 0
        %1712 = vmatprep.subr.bf16.mxu0 0
        %1713 = vmatpush1.bf16.msra.mxu0 0
        %1714 = vmatprep.subr.bf16.mxu0 0
        %1715 = vmatpush1.bf16.msra.mxu0 0
        %1716 = vmatprep.subr.bf16.mxu0 0
        %1717 = vmatpush1.bf16.msra.mxu0 0
        %1718 = vmatprep.mubr.bf16.mxu0 0
        %1719 = vmatmul.mubr.bf16.gmra.mrb[0].mxu0 %v1684
        %v1720 = vpop.f32.mrb[0].mxu0
        %v1721 = vadd.f32 0.0, %v1720
        %v1722 = vpop.f32.mrb[0].mxu0
        %v1723 = vpop.f32.mrb[0].mxu0
        %v1724 = vadd.f32 0.0, %v1723
        %v1725 = vpop.f32.mrb[0].mxu0
        %1726 = vdwg.mxu0
        %v1729 = vunpack.c.l.b16 %v452
        %v1730 = vunpack.c.l.b16 %v453
        %v1731 = vpack.c.b16 %v1730, %v1729
        %v1733 = vsel %vm486, %v1731, 0
        %1735 = vmatprep.subr.bf16.mxu0 0
        %1736 = vmatpush1.bf16.msra.mxu0 %v991
        %1737 = vmatprep.subr.bf16.mxu0 0
        %1738 = vmatpush1.bf16.msra.mxu0 0
        %1739 = vmatprep.subr.bf16.mxu0 0
        %1740 = vmatpush1.bf16.msra.mxu0 0
        %1741 = vmatprep.subr.bf16.mxu0 0
        %1742 = vmatpush1.bf16.msra.mxu0 0
        %1743 = vmatprep.subr.bf16.mxu0 0
        %1744 = vmatpush1.bf16.msra.mxu0 0
        %1745 = vmatprep.subr.bf16.mxu0 0
        %1746 = vmatpush1.bf16.msra.mxu0 0
        %1747 = vmatprep.subr.bf16.mxu0 0
        %1748 = vmatpush1.bf16.msra.mxu0 0
        %1749 = vmatprep.subr.bf16.mxu0 0
        %1750 = vmatpush1.bf16.msra.mxu0 0
        %1751 = vmatprep.subr.bf16.mxu0 0
        %1752 = vmatpush1.bf16.msra.mxu0 0
        %1753 = vmatprep.subr.bf16.mxu0 0
        %1754 = vmatpush1.bf16.msra.mxu0 0
        %1755 = vmatprep.subr.bf16.mxu0 0
        %1756 = vmatpush1.bf16.msra.mxu0 0
        %1757 = vmatprep.subr.bf16.mxu0 0
        %1758 = vmatpush1.bf16.msra.mxu0 0
        %1759 = vmatprep.subr.bf16.mxu0 0
        %1760 = vmatpush1.bf16.msra.mxu0 0
        %1761 = vmatprep.subr.bf16.mxu0 0
        %1762 = vmatpush1.bf16.msra.mxu0 0
        %1763 = vmatprep.subr.bf16.mxu0 0
        %1764 = vmatpush1.bf16.msra.mxu0 0
        %1765 = vmatprep.subr.bf16.mxu0 0
        %1766 = vmatpush1.bf16.msra.mxu0 0
        %1767 = vmatprep.mubr.bf16.mxu0 0
        %1768 = vmatmul.mubr.bf16.gmra.mrb[0].mxu0 %v1733
        %v1769 = vpop.f32.mrb[0].mxu0
        %v1770 = vadd.f32 0.0, %v1769
        %v1771 = vpop.f32.mrb[0].mxu0
        %v1772 = vpop.f32.mrb[0].mxu0
        %v1773 = vadd.f32 0.0, %v1772
        %v1774 = vpop.f32.mrb[0].mxu0
        %1775 = vdwg.mxu0
        %v1776 = vmul.f32 %v615, %v1035
        %v1777 = vmul.f32 %v616, %v1038
        %v1778 = vmul.f32 %v617, %v1084
        %v1779 = vmul.f32 %v618, %v1087
        %v1780 = vmul.f32 %v619, %v1133
        %v1781 = vmul.f32 %v620, %v1136
        %v1782 = vmul.f32 %v621, %v1182
        %v1783 = vmul.f32 %v622, %v1185
        %v1784 = vmul.f32 %v623, %v1231
        %v1785 = vmul.f32 %v624, %v1234
        %v1786 = vmul.f32 %v625, %v1280
        %v1787 = vmul.f32 %v626, %v1283
        %v1788 = vmul.f32 %v627, %v1329
        %v1789 = vmul.f32 %v628, %v1332
        %v1790 = vmul.f32 %v629, %v1378
        %v1791 = vmul.f32 %v630, %v1381
        %v1792 = vmul.f32 %v631, %v1427
        %v1793 = vmul.f32 %v632, %v1430
        %v1794 = vmul.f32 %v633, %v1476
        %v1795 = vmul.f32 %v634, %v1479
        %v1796 = vmul.f32 %v635, %v1525
        %v1797 = vmul.f32 %v636, %v1528
        %v1798 = vmul.f32 %v637, %v1574
        %v1799 = vmul.f32 %v638, %v1577
        %v1800 = vmul.f32 %v639, %v1623
        %v1801 = vmul.f32 %v640, %v1626
        %v1802 = vmul.f32 %v641, %v1672
        %v1803 = vmul.f32 %v642, %v1675
        %v1804 = vmul.f32 %v643, %v1721
        %v1805 = vmul.f32 %v644, %v1724
        %v1806 = vmul.f32 %v645, %v1770
        %v1807 = vmul.f32 %v646, %v1773
        %v1808 = vld [vmem:[%s3] sm:$0x1]
        %v1810 = vlaneseq
        %v1811 = vshrl.u32 %v1810, 7
        %v1812 = vsub.s32 0, %v1811
        %v1813 = vrot.slane %v1808, %v1812
        %v1815 = vadd.f32 %v1776, %v1813
        %v1816 = vadd.f32 %v1777, %v1813
        %v1817 = vadd.f32 %v1778, %v1813
        %v1818 = vadd.f32 %v1779, %v1813
        %v1819 = vadd.f32 %v1780, %v1813
        %v1820 = vadd.f32 %v1781, %v1813
        %v1821 = vadd.f32 %v1782, %v1813
        %v1822 = vadd.f32 %v1783, %v1813
        %v1823 = vadd.f32 %v1784, %v1813
        %v1824 = vadd.f32 %v1785, %v1813
        %v1825 = vadd.f32 %v1786, %v1813
        %v1826 = vadd.f32 %v1787, %v1813
        %v1827 = vadd.f32 %v1788, %v1813
        %v1828 = vadd.f32 %v1789, %v1813
        %v1829 = vadd.f32 %v1790, %v1813
        %v1830 = vadd.f32 %v1791, %v1813
        %v1831 = vadd.f32 %v1792, %v1813
        %v1832 = vadd.f32 %v1793, %v1813
        %v1833 = vadd.f32 %v1794, %v1813
        %v1834 = vadd.f32 %v1795, %v1813
        %v1835 = vadd.f32 %v1796, %v1813
        %v1836 = vadd.f32 %v1797, %v1813
        %v1837 = vadd.f32 %v1798, %v1813
        %v1838 = vadd.f32 %v1799, %v1813
        %v1839 = vadd.f32 %v1800, %v1813
        %v1840 = vadd.f32 %v1801, %v1813
        %v1841 = vadd.f32 %v1802, %v1813
        %v1842 = vadd.f32 %v1803, %v1813
        %v1843 = vadd.f32 %v1804, %v1813
        %v1844 = vadd.f32 %v1805, %v1813
        %v1845 = vadd.f32 %v1806, %v1813
        %v1846 = vadd.f32 %v1807, %v1813
        %v1847 = vmax.f32 %v1815, 0.0
        %v1848 = vmax.f32 %v1816, 0.0
        %v1849 = vmax.f32 %v1817, 0.0
        %v1850 = vmax.f32 %v1818, 0.0
        %v1851 = vmax.f32 %v1819, 0.0
        %v1852 = vmax.f32 %v1820, 0.0
        %v1853 = vmax.f32 %v1821, 0.0
        %v1854 = vmax.f32 %v1822, 0.0
        %v1855 = vmax.f32 %v1823, 0.0
        %v1856 = vmax.f32 %v1824, 0.0
        %v1857 = vmax.f32 %v1825, 0.0
        %v1858 = vmax.f32 %v1826, 0.0
        %v1859 = vmax.f32 %v1827, 0.0
        %v1860 = vmax.f32 %v1828, 0.0
        %v1861 = vmax.f32 %v1829, 0.0
        %v1862 = vmax.f32 %v1830, 0.0
        %v1863 = vmax.f32 %v1831, 0.0
        %v1864 = vmax.f32 %v1832, 0.0
        %v1865 = vmax.f32 %v1833, 0.0
        %v1866 = vmax.f32 %v1834, 0.0
        %v1867 = vmax.f32 %v1835, 0.0
        %v1868 = vmax.f32 %v1836, 0.0
        %v1869 = vmax.f32 %v1837, 0.0
        %v1870 = vmax.f32 %v1838, 0.0
        %v1871 = vmax.f32 %v1839, 0.0
        %v1872 = vmax.f32 %v1840, 0.0
        %v1873 = vmax.f32 %v1841, 0.0
        %v1874 = vmax.f32 %v1842, 0.0
        %v1875 = vmax.f32 %v1843, 0.0
        %v1876 = vmax.f32 %v1844, 0.0
        %v1877 = vmax.f32 %v1845, 0.0
        %v1878 = vmax.f32 %v1846, 0.0
        %v1879 = vpack.c.bf16 %v1848, %v1847
        %v1880 = vpack.c.bf16 %v1850, %v1849
        %v1881 = vpack.c.bf16 %v1852, %v1851
        %v1882 = vpack.c.bf16 %v1854, %v1853
        %v1883 = vpack.c.bf16 %v1856, %v1855
        %v1884 = vpack.c.bf16 %v1858, %v1857
        %v1885 = vpack.c.bf16 %v1860, %v1859
        %v1886 = vpack.c.bf16 %v1862, %v1861
        %v1887 = vpack.c.bf16 %v1864, %v1863
        %v1888 = vpack.c.bf16 %v1866, %v1865
        %v1889 = vpack.c.bf16 %v1868, %v1867
        %v1890 = vpack.c.bf16 %v1870, %v1869
        %v1891 = vpack.c.bf16 %v1872, %v1871
        %v1892 = vpack.c.bf16 %v1874, %v1873
        %v1893 = vpack.c.bf16 %v1876, %v1875
        %v1894 = vpack.c.bf16 %v1878, %v1877
        %v1895 = vmax.bf16 %v390, 0
        %v1896 = vmax.bf16 %v391, 0
        %v1897 = vmax.bf16 %v392, 0
        %v1898 = vmax.bf16 %v393, 0
        %v1899 = vmax.bf16 %v394, 0
        %v1900 = vmax.bf16 %v395, 0
        %v1901 = vmax.bf16 %v396, 0
        %v1902 = vmax.bf16 %v397, 0
        %v1903 = vmax.bf16 %v398, 0
        %v1904 = vmax.bf16 %v399, 0
        %v1905 = vmax.bf16 %v400, 0
        %v1906 = vmax.bf16 %v401, 0
        %v1907 = vmax.bf16 %v402, 0
        %v1908 = vmax.bf16 %v403, 0
        %v1909 = vmax.bf16 %v404, 0
        %v1910 = vmax.bf16 %v405, 0
        %v1911 = vmax.bf16 %v406, 0
        %v1912 = vmax.bf16 %v407, 0
        %v1913 = vmax.bf16 %v408, 0
        %v1914 = vmax.bf16 %v409, 0
        %v1915 = vmax.bf16 %v410, 0
        %v1916 = vmax.bf16 %v411, 0
        %v1917 = vmax.bf16 %v412, 0
        %v1918 = vmax.bf16 %v413, 0
        %v1919 = vmax.bf16 %v414, 0
        %v1920 = vmax.bf16 %v415, 0
        %v1921 = vmax.bf16 %v416, 0
        %v1922 = vmax.bf16 %v417, 0
        %v1923 = vmax.bf16 %v418, 0
        %v1924 = vmax.bf16 %v419, 0
        %v1925 = vmax.bf16 %v420, 0
        %v1926 = vmax.bf16 %v421, 0
        %v1927 = vld [vmem:[%s4] sm:$0xf]
        %v1928 = vld [vmem:[%s4 + $0x4] sm:$0xf]
        %v1929 = vld [vmem:[%s4 + $0x8] sm:$0xf]
        %v1930 = vld [vmem:[%s4 + $0xc] sm:$0xf]
        %v1931 = vld [vmem:[%s4 + $0x10] sm:$0xf]
        %v1932 = vld [vmem:[%s4 + $0x14] sm:$0xf]
        %v1933 = vld [vmem:[%s4 + $0x18] sm:$0xf]
        %v1934 = vld [vmem:[%s4 + $0x1c] sm:$0xf]
        %v1935 = vld [vmem:[%s4 + $0x20] sm:$0xf]
        %v1936 = vld [vmem:[%s4 + $0x24] sm:$0xf]
        %v1937 = vld [vmem:[%s4 + $0x28] sm:$0xf]
        %v1938 = vld [vmem:[%s4 + $0x2c] sm:$0xf]
        %v1939 = vld [vmem:[%s4 + $0x30] sm:$0xf]
        %v1940 = vld [vmem:[%s4 + $0x34] sm:$0xf]
        %v1941 = vld [vmem:[%s4 + $0x38] sm:$0xf]
        %v1942 = vld [vmem:[%s4 + $0x3c] sm:$0xf]
        %v1943 = vld [vmem:[%s4 + $0x40] sm:$0xf]
        %v1944 = vld [vmem:[%s4 + $0x44] sm:$0xf]
        %v1977 = vunpack.c.l.b16 %v1895
        %v1978 = vunpack.c.l.b16 %v1896
        %v1979 = vunpack.c.l.b16 %v1897
        %v1980 = vunpack.c.l.b16 %v1898
        %v1981 = vunpack.c.l.b16 %v1899
        %v1982 = vunpack.c.l.b16 %v1900
        %v1983 = vunpack.c.l.b16 %v1901
        %v1984 = vunpack.c.l.b16 %v1902
        %v1985 = vunpack.c.l.b16 %v1903
        %v1986 = vunpack.c.l.b16 %v1904
        %v1987 = vunpack.c.l.b16 %v1905
        %v1988 = vunpack.c.l.b16 %v1906
        %v1989 = vunpack.c.l.b16 %v1907
        %v1990 = vunpack.c.l.b16 %v1908
        %v1991 = vunpack.c.l.b16 %v1909
        %v1992 = vunpack.c.l.b16 %v1910
        %v1993 = vunpack.c.l.b16 %v1911
        %v1994 = vunpack.c.l.b16 %v1912
        %v1995 = vunpack.c.l.b16 %v1913
        %v1996 = vunpack.c.l.b16 %v1914
        %v1997 = vunpack.c.l.b16 %v1915
        %v1998 = vunpack.c.l.b16 %v1916
        %v1999 = vunpack.c.l.b16 %v1917
        %v2000 = vunpack.c.l.b16 %v1918
        %v2001 = vunpack.c.l.b16 %v1919
        %v2002 = vunpack.c.l.b16 %v1920
        %v2003 = vunpack.c.l.b16 %v1921
        %v2004 = vunpack.c.l.b16 %v1922
        %v2005 = vunpack.c.l.b16 %v1923
        %v2006 = vunpack.c.l.b16 %v1924
        %v2007 = vunpack.c.l.b16 %v1925
        %v2008 = vunpack.c.l.b16 %v1926
        %v2009 = vpack.c.b16 %v1978, %v1977
        %v2010 = vpack.c.b16 %v1980, %v1979
        %v2011 = vpack.c.b16 %v1982, %v1981
        %v2012 = vpack.c.b16 %v1984, %v1983
        %v2013 = vpack.c.b16 %v1986, %v1985
        %v2014 = vpack.c.b16 %v1988, %v1987
        %v2015 = vpack.c.b16 %v1990, %v1989
        %v2016 = vpack.c.b16 %v1992, %v1991
        %v2017 = vpack.c.b16 %v1994, %v1993
        %v2018 = vpack.c.b16 %v1996, %v1995
        %v2019 = vpack.c.b16 %v1998, %v1997
        %v2020 = vpack.c.b16 %v2000, %v1999
        %v2021 = vpack.c.b16 %v2002, %v2001
        %v2022 = vpack.c.b16 %v2004, %v2003
        %v2023 = vpack.c.b16 %v2006, %v2005
        %v2024 = vpack.c.b16 %v2008, %v2007
        %v2027 = vunpack.c.l.b16 %v1943
        %v2028 = vunpack.c.l.b16 %v1944
        %v2029 = vpack.c.b16 %v2028, %v2027
        %v2032 = vsel %vm486, %v2009, 0
        %v2035 = vsel %vm486, %v2010, 0
        %v2038 = vsel %vm486, %v2011, 0
        %v2041 = vsel %vm486, %v2012, 0
        %v2044 = vsel %vm486, %v2013, 0
        %v2047 = vsel %vm486, %v2014, 0
        %v2050 = vsel %vm486, %v2015, 0
        %v2053 = vsel %vm486, %v2016, 0
        %v2056 = vsel %vm486, %v2017, 0
        %v2059 = vsel %vm486, %v2018, 0
        %v2062 = vsel %vm486, %v2019, 0
        %v2065 = vsel %vm486, %v2020, 0
        %v2068 = vsel %vm486, %v2021, 0
        %v2071 = vsel %vm486, %v2022, 0
        %v2074 = vsel %vm486, %v2023, 0
        %v2077 = vsel %vm486, %v2024, 0
        %2079 = vmatprep.subr.bf16.mxu0 0
        %2080 = vmatpush1.bf16.msra.mxu0 %v2029
        %2081 = vmatprep.subr.bf16.mxu0 0
        %2082 = vmatpush1.bf16.msra.mxu0 0
        %2083 = vmatprep.subr.bf16.mxu0 0
        %2084 = vmatpush1.bf16.msra.mxu0 0
        %2085 = vmatprep.subr.bf16.mxu0 0
        %2086 = vmatpush1.bf16.msra.mxu0 0
        %2087 = vmatprep.subr.bf16.mxu0 0
        %2088 = vmatpush1.bf16.msra.mxu0 0
        %2089 = vmatprep.subr.bf16.mxu0 0
        %2090 = vmatpush1.bf16.msra.mxu0 0
        %2091 = vmatprep.subr.bf16.mxu0 0
        %2092 = vmatpush1.bf16.msra.mxu0 0
        %2093 = vmatprep.subr.bf16.mxu0 0
        %2094 = vmatpush1.bf16.msra.mxu0 0
        %2095 = vmatprep.subr.bf16.mxu0 0
        %2096 = vmatpush1.bf16.msra.mxu0 0
        %2097 = vmatprep.subr.bf16.mxu0 0
        %2098 = vmatpush1.bf16.msra.mxu0 0
        %2099 = vmatprep.subr.bf16.mxu0 0
        %2100 = vmatpush1.bf16.msra.mxu0 0
        %2101 = vmatprep.subr.bf16.mxu0 0
        %2102 = vmatpush1.bf16.msra.mxu0 0
        %2103 = vmatprep.subr.bf16.mxu0 0
        %2104 = vmatpush1.bf16.msra.mxu0 0
        %2105 = vmatprep.subr.bf16.mxu0 0
        %2106 = vmatpush1.bf16.msra.mxu0 0
        %2107 = vmatprep.subr.bf16.mxu0 0
        %2108 = vmatpush1.bf16.msra.mxu0 0
        %2109 = vmatprep.subr.bf16.mxu0 0
        %2110 = vmatpush1.bf16.msra.mxu0 0
        %2111 = vmatprep.mubr.bf16.mxu0 0
        %2112 = vmatmul.mubr.bf16.gmra.mrb[0].mxu0 %v2032
        %v2113 = vpop.f32.mrb[0].mxu0
        %v2114 = vadd.f32 0.0, %v2113
        %v2115 = vpop.f32.mrb[0].mxu0
        %v2116 = vpop.f32.mrb[0].mxu0
        %v2117 = vadd.f32 0.0, %v2116
        %v2118 = vpop.f32.mrb[0].mxu0
        %2119 = vmatprep.mubr.bf16.mxu0 0
        %2120 = vmatmul.mubr.bf16.gmra.mrb[0].mxu0 %v2035
        %v2121 = vpop.f32.mrb[0].mxu0
        %v2122 = vadd.f32 0.0, %v2121
        %v2123 = vpop.f32.mrb[0].mxu0
        %v2124 = vpop.f32.mrb[0].mxu0
        %v2125 = vadd.f32 0.0, %v2124
        %v2126 = vpop.f32.mrb[0].mxu0
        %2127 = vmatprep.mubr.bf16.mxu0 0
        %2128 = vmatmul.mubr.bf16.gmra.mrb[0].mxu0 %v2038
        %v2129 = vpop.f32.mrb[0].mxu0
        %v2130 = vadd.f32 0.0, %v2129
        %v2131 = vpop.f32.mrb[0].mxu0
        %v2132 = vpop.f32.mrb[0].mxu0
        %v2133 = vadd.f32 0.0, %v2132
        %v2134 = vpop.f32.mrb[0].mxu0
        %2135 = vmatprep.mubr.bf16.mxu0 0
        %2136 = vmatmul.mubr.bf16.gmra.mrb[0].mxu0 %v2041
        %v2137 = vpop.f32.mrb[0].mxu0
        %v2138 = vadd.f32 0.0, %v2137
        %v2139 = vpop.f32.mrb[0].mxu0
        %v2140 = vpop.f32.mrb[0].mxu0
        %v2141 = vadd.f32 0.0, %v2140
        %v2142 = vpop.f32.mrb[0].mxu0
        %2143 = vmatprep.mubr.bf16.mxu0 0
        %2144 = vmatmul.mubr.bf16.gmra.mrb[0].mxu0 %v2044
        %v2145 = vpop.f32.mrb[0].mxu0
        %v2146 = vadd.f32 0.0, %v2145
        %v2147 = vpop.f32.mrb[0].mxu0
        %v2148 = vpop.f32.mrb[0].mxu0
        %v2149 = vadd.f32 0.0, %v2148
        %v2150 = vpop.f32.mrb[0].mxu0
        %2151 = vmatprep.mubr.bf16.mxu0 0
        %2152 = vmatmul.mubr.bf16.gmra.mrb[0].mxu0 %v2047
        %v2153 = vpop.f32.mrb[0].mxu0
        %v2154 = vadd.f32 0.0, %v2153
        %v2155 = vpop.f32.mrb[0].mxu0
        %v2156 = vpop.f32.mrb[0].mxu0
        %v2157 = vadd.f32 0.0, %v2156
        %v2158 = vpop.f32.mrb[0].mxu0
        %2159 = vmatprep.mubr.bf16.mxu0 0
        %2160 = vmatmul.mubr.bf16.gmra.mrb[0].mxu0 %v2050
        %v2161 = vpop.f32.mrb[0].mxu0
        %v2162 = vadd.f32 0.0, %v2161
        %v2163 = vpop.f32.mrb[0].mxu0
        %v2164 = vpop.f32.mrb[0].mxu0
        %v2165 = vadd.f32 0.0, %v2164
        %v2166 = vpop.f32.mrb[0].mxu0
        %2167 = vmatprep.mubr.bf16.mxu0 0
        %2168 = vmatmul.mubr.bf16.gmra.mrb[0].mxu0 %v2053
        %v2169 = vpop.f32.mrb[0].mxu0
        %v2170 = vadd.f32 0.0, %v2169
        %v2171 = vpop.f32.mrb[0].mxu0
        %v2172 = vpop.f32.mrb[0].mxu0
        %v2173 = vadd.f32 0.0, %v2172
        %v2174 = vpop.f32.mrb[0].mxu0
        %2175 = vmatprep.mubr.bf16.mxu0 0
        %2176 = vmatmul.mubr.bf16.gmra.mrb[0].mxu0 %v2056
        %v2177 = vpop.f32.mrb[0].mxu0
        %v2178 = vadd.f32 0.0, %v2177
        %v2179 = vpop.f32.mrb[0].mxu0
        %v2180 = vpop.f32.mrb[0].mxu0
        %v2181 = vadd.f32 0.0, %v2180
        %v2182 = vpop.f32.mrb[0].mxu0
        %2183 = vmatprep.mubr.bf16.mxu0 0
        %2184 = vmatmul.mubr.bf16.gmra.mrb[0].mxu0 %v2059
        %v2185 = vpop.f32.mrb[0].mxu0
        %v2186 = vadd.f32 0.0, %v2185
        %v2187 = vpop.f32.mrb[0].mxu0
        %v2188 = vpop.f32.mrb[0].mxu0
        %v2189 = vadd.f32 0.0, %v2188
        %v2190 = vpop.f32.mrb[0].mxu0
        %2191 = vmatprep.mubr.bf16.mxu0 0
        %2192 = vmatmul.mubr.bf16.gmra.mrb[0].mxu0 %v2062
        %v2193 = vpop.f32.mrb[0].mxu0
        %v2194 = vadd.f32 0.0, %v2193
        %v2195 = vpop.f32.mrb[0].mxu0
        %v2196 = vpop.f32.mrb[0].mxu0
        %v2197 = vadd.f32 0.0, %v2196
        %v2198 = vpop.f32.mrb[0].mxu0
        %2199 = vmatprep.mubr.bf16.mxu0 0
        %2200 = vmatmul.mubr.bf16.gmra.mrb[0].mxu0 %v2065
        %v2201 = vpop.f32.mrb[0].mxu0
        %v2202 = vadd.f32 0.0, %v2201
        %v2203 = vpop.f32.mrb[0].mxu0
        %v2204 = vpop.f32.mrb[0].mxu0
        %v2205 = vadd.f32 0.0, %v2204
        %v2206 = vpop.f32.mrb[0].mxu0
        %2207 = vmatprep.mubr.bf16.mxu0 0
        %2208 = vmatmul.mubr.bf16.gmra.mrb[0].mxu0 %v2068
        %v2209 = vpop.f32.mrb[0].mxu0
        %v2210 = vadd.f32 0.0, %v2209
        %v2211 = vpop.f32.mrb[0].mxu0
        %v2212 = vpop.f32.mrb[0].mxu0
        %v2213 = vadd.f32 0.0, %v2212
        %v2214 = vpop.f32.mrb[0].mxu0
        %2215 = vmatprep.mubr.bf16.mxu0 0
        %2216 = vmatmul.mubr.bf16.gmra.mrb[0].mxu0 %v2071
        %v2217 = vpop.f32.mrb[0].mxu0
        %v2218 = vadd.f32 0.0, %v2217
        %v2219 = vpop.f32.mrb[0].mxu0
        %v2220 = vpop.f32.mrb[0].mxu0
        %v2221 = vadd.f32 0.0, %v2220
        %v2222 = vpop.f32.mrb[0].mxu0
        %2223 = vmatprep.mubr.bf16.mxu0 0
        %2224 = vmatmul.mubr.bf16.gmra.mrb[0].mxu0 %v2074
        %v2225 = vpop.f32.mrb[0].mxu0
        %v2226 = vadd.f32 0.0, %v2225
        %v2227 = vpop.f32.mrb[0].mxu0
        %v2228 = vpop.f32.mrb[0].mxu0
        %v2229 = vadd.f32 0.0, %v2228
        %v2230 = vpop.f32.mrb[0].mxu0
        %2231 = vmatprep.mubr.bf16.mxu0 0
        %2232 = vmatmul.mubr.bf16.gmra.mrb[0].mxu0 %v2077
        %v2233 = vpop.f32.mrb[0].mxu0
        %v2234 = vadd.f32 0.0, %v2233
        %v2235 = vpop.f32.mrb[0].mxu0
        %v2236 = vpop.f32.mrb[0].mxu0
        %v2237 = vadd.f32 0.0, %v2236
        %v2238 = vpop.f32.mrb[0].mxu0
        %2239 = vdwg.mxu0
        %v2256 = vunpack.c.l.b16 %v1927
        %v2257 = vunpack.c.l.b16 %v1928
        %v2258 = vunpack.c.l.b16 %v1929
        %v2259 = vunpack.c.l.b16 %v1930
        %v2260 = vunpack.c.l.b16 %v1931
        %v2261 = vunpack.c.l.b16 %v1932
        %v2262 = vunpack.c.l.b16 %v1933
        %v2263 = vunpack.c.l.b16 %v1934
        %v2264 = vunpack.c.l.b16 %v1935
        %v2265 = vunpack.c.l.b16 %v1936
        %v2266 = vunpack.c.l.b16 %v1937
        %v2267 = vunpack.c.l.b16 %v1938
        %v2268 = vunpack.c.l.b16 %v1939
        %v2269 = vunpack.c.l.b16 %v1940
        %v2270 = vunpack.c.l.b16 %v1941
        %v2271 = vunpack.c.l.b16 %v1942
        %v2272 = vpack.c.b16 %v2257, %v2256
        %v2273 = vpack.c.b16 %v2259, %v2258
        %v2274 = vpack.c.b16 %v2261, %v2260
        %v2275 = vpack.c.b16 %v2263, %v2262
        %v2276 = vpack.c.b16 %v2265, %v2264
        %v2277 = vpack.c.b16 %v2267, %v2266
        %v2278 = vpack.c.b16 %v2269, %v2268
        %v2279 = vpack.c.b16 %v2271, %v2270
        %2288 = vmatprep.subr.bf16.mxu0 0
        %2289 = vmatpush1.bf16.msra.mxu0 %v2272
        %2290 = vmatprep.subr.bf16.mxu0 0
        %2291 = vmatpush1.bf16.msra.mxu0 %v2273
        %2292 = vmatprep.subr.bf16.mxu0 0
        %2293 = vmatpush1.bf16.msra.mxu0 %v2274
        %2294 = vmatprep.subr.bf16.mxu0 0
        %2295 = vmatpush1.bf16.msra.mxu0 %v2275
        %2296 = vmatprep.subr.bf16.mxu0 0
        %2297 = vmatpush1.bf16.msra.mxu0 %v2276
        %2298 = vmatprep.subr.bf16.mxu0 0
        %2299 = vmatpush1.bf16.msra.mxu0 %v2277
        %2300 = vmatprep.subr.bf16.mxu0 0
        %2301 = vmatpush1.bf16.msra.mxu0 %v2278
        %2302 = vmatprep.subr.bf16.mxu0 0
        %2303 = vmatpush1.bf16.msra.mxu0 %v2279
        %2304 = vmatprep.subr.bf16.mxu0 0
        %2305 = vmatpush1.bf16.msra.mxu0 0
        %2306 = vmatprep.subr.bf16.mxu0 0
        %2307 = vmatpush1.bf16.msra.mxu0 0
        %2308 = vmatprep.subr.bf16.mxu0 0
        %2309 = vmatpush1.bf16.msra.mxu0 0
        %2310 = vmatprep.subr.bf16.mxu0 0
        %2311 = vmatpush1.bf16.msra.mxu0 0
        %2312 = vmatprep.subr.bf16.mxu0 0
        %2313 = vmatpush1.bf16.msra.mxu0 0
        %2314 = vmatprep.subr.bf16.mxu0 0
        %2315 = vmatpush1.bf16.msra.mxu0 0
        %2316 = vmatprep.subr.bf16.mxu0 0
        %2317 = vmatpush1.bf16.msra.mxu0 0
        %2318 = vmatprep.subr.bf16.mxu0 0
        %2319 = vmatpush1.bf16.msra.mxu0 0
        %2320 = vmatprep.mubr.bf16.mxu0 0
        %2321 = vmatmul.mubr.bf16.gmra.mrb[0].mxu0 %v1879
        %v2322 = vpop.f32.mrb[0].mxu0
        %v2323 = vadd.f32 %v2114, %v2322
        %v2324 = vpop.f32.mrb[0].mxu0
        %v2325 = vpop.f32.mrb[0].mxu0
        %v2326 = vadd.f32 %v2117, %v2325
        %v2327 = vpop.f32.mrb[0].mxu0
        %2328 = vmatprep.mubr.bf16.mxu0 0
        %2329 = vmatmul.mubr.bf16.gmra.mrb[0].mxu0 %v1880
        %v2330 = vpop.f32.mrb[0].mxu0
        %v2331 = vadd.f32 %v2122, %v2330
        %v2332 = vpop.f32.mrb[0].mxu0
        %v2333 = vpop.f32.mrb[0].mxu0
        %v2334 = vadd.f32 %v2125, %v2333
        %v2335 = vpop.f32.mrb[0].mxu0
        %2336 = vmatprep.mubr.bf16.mxu0 0
        %2337 = vmatmul.mubr.bf16.gmra.mrb[0].mxu0 %v1881
        %v2338 = vpop.f32.mrb[0].mxu0
        %v2339 = vadd.f32 %v2130, %v2338
        %v2340 = vpop.f32.mrb[0].mxu0
        %v2341 = vpop.f32.mrb[0].mxu0
        %v2342 = vadd.f32 %v2133, %v2341
        %v2343 = vpop.f32.mrb[0].mxu0
        %2344 = vmatprep.mubr.bf16.mxu0 0
        %2345 = vmatmul.mubr.bf16.gmra.mrb[0].mxu0 %v1882
        %v2346 = vpop.f32.mrb[0].mxu0
        %v2347 = vadd.f32 %v2138, %v2346
        %v2348 = vpop.f32.mrb[0].mxu0
        %v2349 = vpop.f32.mrb[0].mxu0
        %v2350 = vadd.f32 %v2141, %v2349
        %v2351 = vpop.f32.mrb[0].mxu0
        %2352 = vmatprep.mubr.bf16.mxu0 0
        %2353 = vmatmul.mubr.bf16.gmra.mrb[0].mxu0 %v1883
        %v2354 = vpop.f32.mrb[0].mxu0
        %v2355 = vadd.f32 %v2146, %v2354
        %v2356 = vpop.f32.mrb[0].mxu0
        %v2357 = vpop.f32.mrb[0].mxu0
        %v2358 = vadd.f32 %v2149, %v2357
        %v2359 = vpop.f32.mrb[0].mxu0
        %2360 = vmatprep.mubr.bf16.mxu0 0
        %2361 = vmatmul.mubr.bf16.gmra.mrb[0].mxu0 %v1884
        %v2362 = vpop.f32.mrb[0].mxu0
        %v2363 = vadd.f32 %v2154, %v2362
        %v2364 = vpop.f32.mrb[0].mxu0
        %v2365 = vpop.f32.mrb[0].mxu0
        %v2366 = vadd.f32 %v2157, %v2365
        %v2367 = vpop.f32.mrb[0].mxu0
        %2368 = vmatprep.mubr.bf16.mxu0 0
        %2369 = vmatmul.mubr.bf16.gmra.mrb[0].mxu0 %v1885
        %v2370 = vpop.f32.mrb[0].mxu0
        %v2371 = vadd.f32 %v2162, %v2370
        %v2372 = vpop.f32.mrb[0].mxu0
        %v2373 = vpop.f32.mrb[0].mxu0
        %v2374 = vadd.f32 %v2165, %v2373
        %v2375 = vpop.f32.mrb[0].mxu0
        %2376 = vmatprep.mubr.bf16.mxu0 0
        %2377 = vmatmul.mubr.bf16.gmra.mrb[0].mxu0 %v1886
        %v2378 = vpop.f32.mrb[0].mxu0
        %v2379 = vadd.f32 %v2170, %v2378
        %v2380 = vpop.f32.mrb[0].mxu0
        %v2381 = vpop.f32.mrb[0].mxu0
        %v2382 = vadd.f32 %v2173, %v2381
        %v2383 = vpop.f32.mrb[0].mxu0
        %2384 = vmatprep.mubr.bf16.mxu0 0
        %2385 = vmatmul.mubr.bf16.gmra.mrb[0].mxu0 %v1887
        %v2386 = vpop.f32.mrb[0].mxu0
        %v2387 = vadd.f32 %v2178, %v2386
        %v2388 = vpop.f32.mrb[0].mxu0
        %v2389 = vpop.f32.mrb[0].mxu0
        %v2390 = vadd.f32 %v2181, %v2389
        %v2391 = vpop.f32.mrb[0].mxu0
        %2392 = vmatprep.mubr.bf16.mxu0 0
        %2393 = vmatmul.mubr.bf16.gmra.mrb[0].mxu0 %v1888
        %v2394 = vpop.f32.mrb[0].mxu0
        %v2395 = vadd.f32 %v2186, %v2394
        %v2396 = vpop.f32.mrb[0].mxu0
        %v2397 = vpop.f32.mrb[0].mxu0
        %v2398 = vadd.f32 %v2189, %v2397
        %v2399 = vpop.f32.mrb[0].mxu0
        %2400 = vmatprep.mubr.bf16.mxu0 0
        %2401 = vmatmul.mubr.bf16.gmra.mrb[0].mxu0 %v1889
        %v2402 = vpop.f32.mrb[0].mxu0
        %v2403 = vadd.f32 %v2194, %v2402
        %v2404 = vpop.f32.mrb[0].mxu0
        %v2405 = vpop.f32.mrb[0].mxu0
        %v2406 = vadd.f32 %v2197, %v2405
        %v2407 = vpop.f32.mrb[0].mxu0
        %2408 = vmatprep.mubr.bf16.mxu0 0
        %2409 = vmatmul.mubr.bf16.gmra.mrb[0].mxu0 %v1890
        %v2410 = vpop.f32.mrb[0].mxu0
        %v2411 = vadd.f32 %v2202, %v2410
        %v2412 = vpop.f32.mrb[0].mxu0
        %v2413 = vpop.f32.mrb[0].mxu0
        %v2414 = vadd.f32 %v2205, %v2413
        %v2415 = vpop.f32.mrb[0].mxu0
        %2416 = vmatprep.mubr.bf16.mxu0 0
        %2417 = vmatmul.mubr.bf16.gmra.mrb[0].mxu0 %v1891
        %v2418 = vpop.f32.mrb[0].mxu0
        %v2419 = vadd.f32 %v2210, %v2418
        %v2420 = vpop.f32.mrb[0].mxu0
        %v2421 = vpop.f32.mrb[0].mxu0
        %v2422 = vadd.f32 %v2213, %v2421
        %v2423 = vpop.f32.mrb[0].mxu0
        %2424 = vmatprep.mubr.bf16.mxu0 0
        %2425 = vmatmul.mubr.bf16.gmra.mrb[0].mxu0 %v1892
        %v2426 = vpop.f32.mrb[0].mxu0
        %v2427 = vadd.f32 %v2218, %v2426
        %v2428 = vpop.f32.mrb[0].mxu0
        %v2429 = vpop.f32.mrb[0].mxu0
        %v2430 = vadd.f32 %v2221, %v2429
        %v2431 = vpop.f32.mrb[0].mxu0
        %2432 = vmatprep.mubr.bf16.mxu0 0
        %2433 = vmatmul.mubr.bf16.gmra.mrb[0].mxu0 %v1893
        %v2434 = vpop.f32.mrb[0].mxu0
        %v2435 = vadd.f32 %v2226, %v2434
        %v2436 = vpop.f32.mrb[0].mxu0
        %v2437 = vpop.f32.mrb[0].mxu0
        %v2438 = vadd.f32 %v2229, %v2437
        %v2439 = vpop.f32.mrb[0].mxu0
        %2440 = vmatprep.mubr.bf16.mxu0 0
        %2441 = vmatmul.mubr.bf16.gmra.mrb[0].mxu0 %v1894
        %v2442 = vpop.f32.mrb[0].mxu0
        %v2443 = vadd.f32 %v2234, %v2442
        %v2444 = vpop.f32.mrb[0].mxu0
        %v2445 = vpop.f32.mrb[0].mxu0
        %v2446 = vadd.f32 %v2237, %v2445
        %v2447 = vpop.f32.mrb[0].mxu0
        %2448 = vdwg.mxu0
        %v2449 = vld [vmem:[%s5] sm:$0x1]
        %v2451 = vlaneseq
        %v2452 = vshrl.u32 %v2451, 7
        %v2453 = vsub.s32 0, %v2452
        %v2454 = vrot.slane %v2449, %v2453
        %v2456 = vadd.f32 %v2323, %v2454
        %v2457 = vadd.f32 %v2326, %v2454
        %v2458 = vadd.f32 %v2331, %v2454
        %v2459 = vadd.f32 %v2334, %v2454
        %v2460 = vadd.f32 %v2339, %v2454
        %v2461 = vadd.f32 %v2342, %v2454
        %v2462 = vadd.f32 %v2347, %v2454
        %v2463 = vadd.f32 %v2350, %v2454
        %v2464 = vadd.f32 %v2355, %v2454
        %v2465 = vadd.f32 %v2358, %v2454
        %v2466 = vadd.f32 %v2363, %v2454
        %v2467 = vadd.f32 %v2366, %v2454
        %v2468 = vadd.f32 %v2371, %v2454
        %v2469 = vadd.f32 %v2374, %v2454
        %v2470 = vadd.f32 %v2379, %v2454
        %v2471 = vadd.f32 %v2382, %v2454
        %v2472 = vadd.f32 %v2387, %v2454
        %v2473 = vadd.f32 %v2390, %v2454
        %v2474 = vadd.f32 %v2395, %v2454
        %v2475 = vadd.f32 %v2398, %v2454
        %v2476 = vadd.f32 %v2403, %v2454
        %v2477 = vadd.f32 %v2406, %v2454
        %v2478 = vadd.f32 %v2411, %v2454
        %v2479 = vadd.f32 %v2414, %v2454
        %v2480 = vadd.f32 %v2419, %v2454
        %v2481 = vadd.f32 %v2422, %v2454
        %v2482 = vadd.f32 %v2427, %v2454
        %v2483 = vadd.f32 %v2430, %v2454
        %v2484 = vadd.f32 %v2435, %v2454
        %v2485 = vadd.f32 %v2438, %v2454
        %v2486 = vadd.f32 %v2443, %v2454
        %v2487 = vadd.f32 %v2446, %v2454
        %v2488 = vmax.f32 %v2456, 0.0
        %v2489 = vmax.f32 %v2457, 0.0
        %v2490 = vmax.f32 %v2458, 0.0
        %v2491 = vmax.f32 %v2459, 0.0
        %v2492 = vmax.f32 %v2460, 0.0
        %v2493 = vmax.f32 %v2461, 0.0
        %v2494 = vmax.f32 %v2462, 0.0
        %v2495 = vmax.f32 %v2463, 0.0
        %v2496 = vmax.f32 %v2464, 0.0
        %v2497 = vmax.f32 %v2465, 0.0
        %v2498 = vmax.f32 %v2466, 0.0
        %v2499 = vmax.f32 %v2467, 0.0
        %v2500 = vmax.f32 %v2468, 0.0
        %v2501 = vmax.f32 %v2469, 0.0
        %v2502 = vmax.f32 %v2470, 0.0
        %v2503 = vmax.f32 %v2471, 0.0
        %v2504 = vmax.f32 %v2472, 0.0
        %v2505 = vmax.f32 %v2473, 0.0
        %v2506 = vmax.f32 %v2474, 0.0
        %v2507 = vmax.f32 %v2475, 0.0
        %v2508 = vmax.f32 %v2476, 0.0
        %v2509 = vmax.f32 %v2477, 0.0
        %v2510 = vmax.f32 %v2478, 0.0
        %v2511 = vmax.f32 %v2479, 0.0
        %v2512 = vmax.f32 %v2480, 0.0
        %v2513 = vmax.f32 %v2481, 0.0
        %v2514 = vmax.f32 %v2482, 0.0
        %v2515 = vmax.f32 %v2483, 0.0
        %v2516 = vmax.f32 %v2484, 0.0
        %v2517 = vmax.f32 %v2485, 0.0
        %v2518 = vmax.f32 %v2486, 0.0
        %v2519 = vmax.f32 %v2487, 0.0
        %v2520 = vpack.c.bf16 %v2489, %v2488
        %v2521 = vpack.c.bf16 %v2491, %v2490
        %v2522 = vpack.c.bf16 %v2493, %v2492
        %v2523 = vpack.c.bf16 %v2495, %v2494
        %v2524 = vpack.c.bf16 %v2497, %v2496
        %v2525 = vpack.c.bf16 %v2499, %v2498
        %v2526 = vpack.c.bf16 %v2501, %v2500
        %v2527 = vpack.c.bf16 %v2503, %v2502
        %v2528 = vpack.c.bf16 %v2505, %v2504
        %v2529 = vpack.c.bf16 %v2507, %v2506
        %v2530 = vpack.c.bf16 %v2509, %v2508
        %v2531 = vpack.c.bf16 %v2511, %v2510
        %v2532 = vpack.c.bf16 %v2513, %v2512
        %v2533 = vpack.c.bf16 %v2515, %v2514
        %v2534 = vpack.c.bf16 %v2517, %v2516
        %v2535 = vpack.c.bf16 %v2519, %v2518
        %v2536 = vld [vmem:[%s6] sm:$0xf]
        %v2537 = vld [vmem:[%s6 + $0x4] sm:$0xf]
        %v2538 = vld [vmem:[%s6 + $0x8] sm:$0xf]
        %v2539 = vld [vmem:[%s6 + $0xc] sm:$0xf]
        %v2540 = vld [vmem:[%s6 + $0x10] sm:$0xf]
        %v2541 = vld [vmem:[%s6 + $0x14] sm:$0xf]
        %v2542 = vld [vmem:[%s6 + $0x18] sm:$0xf]
        %v2543 = vld [vmem:[%s6 + $0x1c] sm:$0xf]
        %v2544 = vld [vmem:[%s6 + $0x20] sm:$0xf]
        %v2545 = vld [vmem:[%s6 + $0x24] sm:$0xf]
        %v2546 = vld [vmem:[%s6 + $0x28] sm:$0xf]
        %v2547 = vld [vmem:[%s6 + $0x2c] sm:$0xf]
        %v2548 = vld [vmem:[%s6 + $0x30] sm:$0xf]
        %v2549 = vld [vmem:[%s6 + $0x34] sm:$0xf]
        %v2550 = vld [vmem:[%s6 + $0x38] sm:$0xf]
        %v2551 = vld [vmem:[%s6 + $0x3c] sm:$0xf]
        %v2568 = vunpack.c.l.b16 %v2536
        %v2569 = vunpack.c.l.b16 %v2537
        %v2570 = vunpack.c.l.b16 %v2538
        %v2571 = vunpack.c.l.b16 %v2539
        %v2572 = vunpack.c.l.b16 %v2540
        %v2573 = vunpack.c.l.b16 %v2541
        %v2574 = vunpack.c.l.b16 %v2542
        %v2575 = vunpack.c.l.b16 %v2543
        %v2576 = vunpack.c.l.b16 %v2544
        %v2577 = vunpack.c.l.b16 %v2545
        %v2578 = vunpack.c.l.b16 %v2546
        %v2579 = vunpack.c.l.b16 %v2547
        %v2580 = vunpack.c.l.b16 %v2548
        %v2581 = vunpack.c.l.b16 %v2549
        %v2582 = vunpack.c.l.b16 %v2550
        %v2583 = vunpack.c.l.b16 %v2551
        %v2584 = vpack.c.b16 %v2569, %v2568
        %v2585 = vpack.c.b16 %v2571, %v2570
        %v2586 = vpack.c.b16 %v2573, %v2572
        %v2587 = vpack.c.b16 %v2575, %v2574
        %v2588 = vpack.c.b16 %v2577, %v2576
        %v2589 = vpack.c.b16 %v2579, %v2578
        %v2590 = vpack.c.b16 %v2581, %v2580
        %v2591 = vpack.c.b16 %v2583, %v2582
        %2600 = vmatprep.subr.bf16.mxu0 0
        %2601 = vmatpush1.bf16.msra.mxu0 %v2584
        %2602 = vmatprep.subr.bf16.mxu0 0
        %2603 = vmatpush1.bf16.msra.mxu0 %v2585
        %2604 = vmatprep.subr.bf16.mxu0 0
        %2605 = vmatpush1.bf16.msra.mxu0 %v2586
        %2606 = vmatprep.subr.bf16.mxu0 0
        %2607 = vmatpush1.bf16.msra.mxu0 %v2587
        %2608 = vmatprep.subr.bf16.mxu0 0
        %2609 = vmatpush1.bf16.msra.mxu0 %v2588
        %2610 = vmatprep.subr.bf16.mxu0 0
        %2611 = vmatpush1.bf16.msra.mxu0 %v2589
        %2612 = vmatprep.subr.bf16.mxu0 0
        %2613 = vmatpush1.bf16.msra.mxu0 %v2590
        %2614 = vmatprep.subr.bf16.mxu0 0
        %2615 = vmatpush1.bf16.msra.mxu0 %v2591
        %2616 = vmatprep.subr.bf16.mxu0 0
        %2617 = vmatpush1.bf16.msra.mxu0 0
        %2618 = vmatprep.subr.bf16.mxu0 0
        %2619 = vmatpush1.bf16.msra.mxu0 0
        %2620 = vmatprep.subr.bf16.mxu0 0
        %2621 = vmatpush1.bf16.msra.mxu0 0
        %2622 = vmatprep.subr.bf16.mxu0 0
        %2623 = vmatpush1.bf16.msra.mxu0 0
        %2624 = vmatprep.subr.bf16.mxu0 0
        %2625 = vmatpush1.bf16.msra.mxu0 0
        %2626 = vmatprep.subr.bf16.mxu0 0
        %2627 = vmatpush1.bf16.msra.mxu0 0
        %2628 = vmatprep.subr.bf16.mxu0 0
        %2629 = vmatpush1.bf16.msra.mxu0 0
        %2630 = vmatprep.subr.bf16.mxu0 0
        %2631 = vmatpush1.bf16.msra.mxu0 0
        %2632 = vmatprep.mubr.bf16.mxu0 0
        %2633 = vmatmul.mubr.bf16.gmra.mrb[0].mxu0 %v2520
        %v2634 = vpop.f32.mrb[0].mxu0
        %v2635 = vadd.f32 0.0, %v2634
        %v2636 = vpop.f32.mrb[0].mxu0
        %v2637 = vpop.f32.mrb[0].mxu0
        %v2638 = vadd.f32 0.0, %v2637
        %v2639 = vpop.f32.mrb[0].mxu0
        %2640 = vmatprep.mubr.bf16.mxu0 0
        %2641 = vmatmul.mubr.bf16.gmra.mrb[0].mxu0 %v2521
        %v2642 = vpop.f32.mrb[0].mxu0
        %v2643 = vadd.f32 0.0, %v2642
        %v2644 = vpop.f32.mrb[0].mxu0
        %v2645 = vpop.f32.mrb[0].mxu0
        %v2646 = vadd.f32 0.0, %v2645
        %v2647 = vpop.f32.mrb[0].mxu0
        %2648 = vmatprep.mubr.bf16.mxu0 0
        %2649 = vmatmul.mubr.bf16.gmra.mrb[0].mxu0 %v2522
        %v2650 = vpop.f32.mrb[0].mxu0
        %v2651 = vadd.f32 0.0, %v2650
        %v2652 = vpop.f32.mrb[0].mxu0
        %v2653 = vpop.f32.mrb[0].mxu0
        %v2654 = vadd.f32 0.0, %v2653
        %v2655 = vpop.f32.mrb[0].mxu0
        %2656 = vmatprep.mubr.bf16.mxu0 0
        %2657 = vmatmul.mubr.bf16.gmra.mrb[0].mxu0 %v2523
        %v2658 = vpop.f32.mrb[0].mxu0
        %v2659 = vadd.f32 0.0, %v2658
        %v2660 = vpop.f32.mrb[0].mxu0
        %v2661 = vpop.f32.mrb[0].mxu0
        %v2662 = vadd.f32 0.0, %v2661
        %v2663 = vpop.f32.mrb[0].mxu0
        %2664 = vmatprep.mubr.bf16.mxu0 0
        %2665 = vmatmul.mubr.bf16.gmra.mrb[0].mxu0 %v2524
        %v2666 = vpop.f32.mrb[0].mxu0
        %v2667 = vadd.f32 0.0, %v2666
        %v2668 = vpop.f32.mrb[0].mxu0
        %v2669 = vpop.f32.mrb[0].mxu0
        %v2670 = vadd.f32 0.0, %v2669
        %v2671 = vpop.f32.mrb[0].mxu0
        %2672 = vmatprep.mubr.bf16.mxu0 0
        %2673 = vmatmul.mubr.bf16.gmra.mrb[0].mxu0 %v2525
        %v2674 = vpop.f32.mrb[0].mxu0
        %v2675 = vadd.f32 0.0, %v2674
        %v2676 = vpop.f32.mrb[0].mxu0
        %v2677 = vpop.f32.mrb[0].mxu0
        %v2678 = vadd.f32 0.0, %v2677
        %v2679 = vpop.f32.mrb[0].mxu0
        %2680 = vmatprep.mubr.bf16.mxu0 0
        %2681 = vmatmul.mubr.bf16.gmra.mrb[0].mxu0 %v2526
        %v2682 = vpop.f32.mrb[0].mxu0
        %v2683 = vadd.f32 0.0, %v2682
        %v2684 = vpop.f32.mrb[0].mxu0
        %v2685 = vpop.f32.mrb[0].mxu0
        %v2686 = vadd.f32 0.0, %v2685
        %v2687 = vpop.f32.mrb[0].mxu0
        %2688 = vmatprep.mubr.bf16.mxu0 0
        %2689 = vmatmul.mubr.bf16.gmra.mrb[0].mxu0 %v2527
        %v2690 = vpop.f32.mrb[0].mxu0
        %v2691 = vadd.f32 0.0, %v2690
        %v2692 = vpop.f32.mrb[0].mxu0
        %v2693 = vpop.f32.mrb[0].mxu0
        %v2694 = vadd.f32 0.0, %v2693
        %v2695 = vpop.f32.mrb[0].mxu0
        %2696 = vmatprep.mubr.bf16.mxu0 0
        %2697 = vmatmul.mubr.bf16.gmra.mrb[0].mxu0 %v2528
        %v2698 = vpop.f32.mrb[0].mxu0
        %v2699 = vadd.f32 0.0, %v2698
        %v2700 = vpop.f32.mrb[0].mxu0
        %v2701 = vpop.f32.mrb[0].mxu0
        %v2702 = vadd.f32 0.0, %v2701
        %v2703 = vpop.f32.mrb[0].mxu0
        %2704 = vmatprep.mubr.bf16.mxu0 0
        %2705 = vmatmul.mubr.bf16.gmra.mrb[0].mxu0 %v2529
        %v2706 = vpop.f32.mrb[0].mxu0
        %v2707 = vadd.f32 0.0, %v2706
        %v2708 = vpop.f32.mrb[0].mxu0
        %v2709 = vpop.f32.mrb[0].mxu0
        %v2710 = vadd.f32 0.0, %v2709
        %v2711 = vpop.f32.mrb[0].mxu0
        %2712 = vmatprep.mubr.bf16.mxu0 0
        %2713 = vmatmul.mubr.bf16.gmra.mrb[0].mxu0 %v2530
        %v2714 = vpop.f32.mrb[0].mxu0
        %v2715 = vadd.f32 0.0, %v2714
        %v2716 = vpop.f32.mrb[0].mxu0
        %v2717 = vpop.f32.mrb[0].mxu0
        %v2718 = vadd.f32 0.0, %v2717
        %v2719 = vpop.f32.mrb[0].mxu0
        %2720 = vmatprep.mubr.bf16.mxu0 0
        %2721 = vmatmul.mubr.bf16.gmra.mrb[0].mxu0 %v2531
        %v2722 = vpop.f32.mrb[0].mxu0
        %v2723 = vadd.f32 0.0, %v2722
        %v2724 = vpop.f32.mrb[0].mxu0
        %v2725 = vpop.f32.mrb[0].mxu0
        %v2726 = vadd.f32 0.0, %v2725
        %v2727 = vpop.f32.mrb[0].mxu0
        %2728 = vmatprep.mubr.bf16.mxu0 0
        %2729 = vmatmul.mubr.bf16.gmra.mrb[0].mxu0 %v2532
        %v2730 = vpop.f32.mrb[0].mxu0
        %v2731 = vadd.f32 0.0, %v2730
        %v2732 = vpop.f32.mrb[0].mxu0
        %v2733 = vpop.f32.mrb[0].mxu0
        %v2734 = vadd.f32 0.0, %v2733
        %v2735 = vpop.f32.mrb[0].mxu0
        %2736 = vmatprep.mubr.bf16.mxu0 0
        %2737 = vmatmul.mubr.bf16.gmra.mrb[0].mxu0 %v2533
        %v2738 = vpop.f32.mrb[0].mxu0
        %v2739 = vadd.f32 0.0, %v2738
        %v2740 = vpop.f32.mrb[0].mxu0
        %v2741 = vpop.f32.mrb[0].mxu0
        %v2742 = vadd.f32 0.0, %v2741
        %v2743 = vpop.f32.mrb[0].mxu0
        %2744 = vmatprep.mubr.bf16.mxu0 0
        %2745 = vmatmul.mubr.bf16.gmra.mrb[0].mxu0 %v2534
        %v2746 = vpop.f32.mrb[0].mxu0
        %v2747 = vadd.f32 0.0, %v2746
        %v2748 = vpop.f32.mrb[0].mxu0
        %v2749 = vpop.f32.mrb[0].mxu0
        %v2750 = vadd.f32 0.0, %v2749
        %v2751 = vpop.f32.mrb[0].mxu0
        %2752 = vmatprep.mubr.bf16.mxu0 0
        %2753 = vmatmul.mubr.bf16.gmra.mrb[0].mxu0 %v2535
        %v2754 = vpop.f32.mrb[0].mxu0
        %v2755 = vadd.f32 0.0, %v2754
        %v2756 = vpop.f32.mrb[0].mxu0
        %v2757 = vpop.f32.mrb[0].mxu0
        %v2758 = vadd.f32 0.0, %v2757
        %v2759 = vpop.f32.mrb[0].mxu0
        %2760 = vdwg.mxu0
        %v2761 = vmul.f32 %v615, %v2635
        %v2762 = vmul.f32 %v616, %v2638
        %v2763 = vmul.f32 %v617, %v2643
        %v2764 = vmul.f32 %v618, %v2646
        %v2765 = vmul.f32 %v619, %v2651
        %v2766 = vmul.f32 %v620, %v2654
        %v2767 = vmul.f32 %v621, %v2659
        %v2768 = vmul.f32 %v622, %v2662
        %v2769 = vmul.f32 %v623, %v2667
        %v2770 = vmul.f32 %v624, %v2670
        %v2771 = vmul.f32 %v625, %v2675
        %v2772 = vmul.f32 %v626, %v2678
        %v2773 = vmul.f32 %v627, %v2683
        %v2774 = vmul.f32 %v628, %v2686
        %v2775 = vmul.f32 %v629, %v2691
        %v2776 = vmul.f32 %v630, %v2694
        %v2777 = vmul.f32 %v631, %v2699
        %v2778 = vmul.f32 %v632, %v2702
        %v2779 = vmul.f32 %v633, %v2707
        %v2780 = vmul.f32 %v634, %v2710
        %v2781 = vmul.f32 %v635, %v2715
        %v2782 = vmul.f32 %v636, %v2718
        %v2783 = vmul.f32 %v637, %v2723
        %v2784 = vmul.f32 %v638, %v2726
        %v2785 = vmul.f32 %v639, %v2731
        %v2786 = vmul.f32 %v640, %v2734
        %v2787 = vmul.f32 %v641, %v2739
        %v2788 = vmul.f32 %v642, %v2742
        %v2789 = vmul.f32 %v643, %v2747
        %v2790 = vmul.f32 %v644, %v2750
        %v2791 = vmul.f32 %v645, %v2755
        %v2792 = vmul.f32 %v646, %v2758
        %v2793 = vpack.c.bf16 %v2762, %v2761
        %v2794 = vpack.c.bf16 %v2764, %v2763
        %v2795 = vpack.c.bf16 %v2766, %v2765
        %v2796 = vpack.c.bf16 %v2768, %v2767
        %v2797 = vpack.c.bf16 %v2770, %v2769
        %v2798 = vpack.c.bf16 %v2772, %v2771
        %v2799 = vpack.c.bf16 %v2774, %v2773
        %v2800 = vpack.c.bf16 %v2776, %v2775
        %v2801 = vpack.c.bf16 %v2778, %v2777
        %v2802 = vpack.c.bf16 %v2780, %v2779
        %v2803 = vpack.c.bf16 %v2782, %v2781
        %v2804 = vpack.c.bf16 %v2784, %v2783
        %v2805 = vpack.c.bf16 %v2786, %v2785
        %v2806 = vpack.c.bf16 %v2788, %v2787
        %v2807 = vpack.c.bf16 %v2790, %v2789
        %v2808 = vpack.c.bf16 %v2792, %v2791
        %2809 = vmatprep.subr.bf16.mxu0 0
        %2810 = vmatpush1.bf16.msra.mxu0 %v2793
        %2811 = vmatprep.subr.bf16.mxu0 0
        %2812 = vmatpush1.bf16.msra.mxu0 0
        %2813 = vmatprep.subr.bf16.mxu0 0
        %2814 = vmatpush1.bf16.msra.mxu0 0
        %2815 = vmatprep.subr.bf16.mxu0 0
        %2816 = vmatpush1.bf16.msra.mxu0 0
        %2817 = vmatprep.subr.bf16.mxu0 0
        %2818 = vmatpush1.bf16.msra.mxu0 0
        %2819 = vmatprep.subr.bf16.mxu0 0
        %2820 = vmatpush1.bf16.msra.mxu0 0
        %2821 = vmatprep.subr.bf16.mxu0 0
        %2822 = vmatpush1.bf16.msra.mxu0 0
        %2823 = vmatprep.subr.bf16.mxu0 0
        %2824 = vmatpush1.bf16.msra.mxu0 0
        %2825 = vmatprep.subr.bf16.mxu0 0
        %2826 = vmatpush1.bf16.msra.mxu0 0
        %2827 = vmatprep.subr.bf16.mxu0 0
        %2828 = vmatpush1.bf16.msra.mxu0 0
        %2829 = vmatprep.subr.bf16.mxu0 0
        %2830 = vmatpush1.bf16.msra.mxu0 0
        %2831 = vmatprep.subr.bf16.mxu0 0
        %2832 = vmatpush1.bf16.msra.mxu0 0
        %2833 = vmatprep.subr.bf16.mxu0 0
        %2834 = vmatpush1.bf16.msra.mxu0 0
        %2835 = vmatprep.subr.bf16.mxu0 0
        %2836 = vmatpush1.bf16.msra.mxu0 0
        %2837 = vmatprep.subr.bf16.mxu0 0
        %2838 = vmatpush1.bf16.msra.mxu0 0
        %2839 = vmatprep.subr.bf16.mxu0 0
        %2840 = vmatpush1.bf16.msra.mxu0 0
        %2841 = vmatprep.mubr.bf16.mxu0 0
        %2842 = vmatmul.mubr.bf16.gmra.mrb[0].mxu0 %v998
        %v2843 = vpop.f32.mrb[0].mxu0
        %v2844 = vadd.f32 0.0, %v2843
        %v2845 = vpop.f32.mrb[0].mxu0
        %v2846 = vpop.f32.mrb[0].mxu0
        %v2847 = vadd.f32 0.0, %v2846
        %v2848 = vpop.f32.mrb[0].mxu0
        %2849 = vdwg.mxu0
        %2850 = vmatprep.subr.bf16.mxu0 0
        %2851 = vmatpush1.bf16.msra.mxu0 %v2794
        %2852 = vmatprep.subr.bf16.mxu0 0
        %2853 = vmatpush1.bf16.msra.mxu0 0
        %2854 = vmatprep.subr.bf16.mxu0 0
        %2855 = vmatpush1.bf16.msra.mxu0 0
        %2856 = vmatprep.subr.bf16.mxu0 0
        %2857 = vmatpush1.bf16.msra.mxu0 0
        %2858 = vmatprep.subr.bf16.mxu0 0
        %2859 = vmatpush1.bf16.msra.mxu0 0
        %2860 = vmatprep.subr.bf16.mxu0 0
        %2861 = vmatpush1.bf16.msra.mxu0 0
        %2862 = vmatprep.subr.bf16.mxu0 0
        %2863 = vmatpush1.bf16.msra.mxu0 0
        %2864 = vmatprep.subr.bf16.mxu0 0
        %2865 = vmatpush1.bf16.msra.mxu0 0
        %2866 = vmatprep.subr.bf16.mxu0 0
        %2867 = vmatpush1.bf16.msra.mxu0 0
        %2868 = vmatprep.subr.bf16.mxu0 0
        %2869 = vmatpush1.bf16.msra.mxu0 0
        %2870 = vmatprep.subr.bf16.mxu0 0
        %2871 = vmatpush1.bf16.msra.mxu0 0
        %2872 = vmatprep.subr.bf16.mxu0 0
        %2873 = vmatpush1.bf16.msra.mxu0 0
        %2874 = vmatprep.subr.bf16.mxu0 0
        %2875 = vmatpush1.bf16.msra.mxu0 0
        %2876 = vmatprep.subr.bf16.mxu0 0
        %2877 = vmatpush1.bf16.msra.mxu0 0
        %2878 = vmatprep.subr.bf16.mxu0 0
        %2879 = vmatpush1.bf16.msra.mxu0 0
        %2880 = vmatprep.subr.bf16.mxu0 0
        %2881 = vmatpush1.bf16.msra.mxu0 0
        %2882 = vmatprep.mubr.bf16.mxu0 0
        %2883 = vmatmul.mubr.bf16.gmra.mrb[0].mxu0 %v1047
        %v2884 = vpop.f32.mrb[0].mxu0
        %v2885 = vadd.f32 0.0, %v2884
        %v2886 = vpop.f32.mrb[0].mxu0
        %v2887 = vpop.f32.mrb[0].mxu0
        %v2888 = vadd.f32 0.0, %v2887
        %v2889 = vpop.f32.mrb[0].mxu0
        %2890 = vdwg.mxu0
        %2891 = vmatprep.subr.bf16.mxu0 0
        %2892 = vmatpush1.bf16.msra.mxu0 %v2795
        %2893 = vmatprep.subr.bf16.mxu0 0
        %2894 = vmatpush1.bf16.msra.mxu0 0
        %2895 = vmatprep.subr.bf16.mxu0 0
        %2896 = vmatpush1.bf16.msra.mxu0 0
        %2897 = vmatprep.subr.bf16.mxu0 0
        %2898 = vmatpush1.bf16.msra.mxu0 0
        %2899 = vmatprep.subr.bf16.mxu0 0
        %2900 = vmatpush1.bf16.msra.mxu0 0
        %2901 = vmatprep.subr.bf16.mxu0 0
        %2902 = vmatpush1.bf16.msra.mxu0 0
        %2903 = vmatprep.subr.bf16.mxu0 0
        %2904 = vmatpush1.bf16.msra.mxu0 0
        %2905 = vmatprep.subr.bf16.mxu0 0
        %2906 = vmatpush1.bf16.msra.mxu0 0
        %2907 = vmatprep.subr.bf16.mxu0 0
        %2908 = vmatpush1.bf16.msra.mxu0 0
        %2909 = vmatprep.subr.bf16.mxu0 0
        %2910 = vmatpush1.bf16.msra.mxu0 0
        %2911 = vmatprep.subr.bf16.mxu0 0
        %2912 = vmatpush1.bf16.msra.mxu0 0
        %2913 = vmatprep.subr.bf16.mxu0 0
        %2914 = vmatpush1.bf16.msra.mxu0 0
        %2915 = vmatprep.subr.bf16.mxu0 0
        %2916 = vmatpush1.bf16.msra.mxu0 0
        %2917 = vmatprep.subr.bf16.mxu0 0
        %2918 = vmatpush1.bf16.msra.mxu0 0
        %2919 = vmatprep.subr.bf16.mxu0 0
        %2920 = vmatpush1.bf16.msra.mxu0 0
        %2921 = vmatprep.subr.bf16.mxu0 0
        %2922 = vmatpush1.bf16.msra.mxu0 0
        %2923 = vmatprep.mubr.bf16.mxu0 0
        %2924 = vmatmul.mubr.bf16.gmra.mrb[0].mxu0 %v1096
        %v2925 = vpop.f32.mrb[0].mxu0
        %v2926 = vadd.f32 0.0, %v2925
        %v2927 = vpop.f32.mrb[0].mxu0
        %v2928 = vpop.f32.mrb[0].mxu0
        %v2929 = vadd.f32 0.0, %v2928
        %v2930 = vpop.f32.mrb[0].mxu0
        %2931 = vdwg.mxu0
        %2932 = vmatprep.subr.bf16.mxu0 0
        %2933 = vmatpush1.bf16.msra.mxu0 %v2796
        %2934 = vmatprep.subr.bf16.mxu0 0
        %2935 = vmatpush1.bf16.msra.mxu0 0
        %2936 = vmatprep.subr.bf16.mxu0 0
        %2937 = vmatpush1.bf16.msra.mxu0 0
        %2938 = vmatprep.subr.bf16.mxu0 0
        %2939 = vmatpush1.bf16.msra.mxu0 0
        %2940 = vmatprep.subr.bf16.mxu0 0
        %2941 = vmatpush1.bf16.msra.mxu0 0
        %2942 = vmatprep.subr.bf16.mxu0 0
        %2943 = vmatpush1.bf16.msra.mxu0 0
        %2944 = vmatprep.subr.bf16.mxu0 0
        %2945 = vmatpush1.bf16.msra.mxu0 0
        %2946 = vmatprep.subr.bf16.mxu0 0
        %2947 = vmatpush1.bf16.msra.mxu0 0
        %2948 = vmatprep.subr.bf16.mxu0 0
        %2949 = vmatpush1.bf16.msra.mxu0 0
        %2950 = vmatprep.subr.bf16.mxu0 0
        %2951 = vmatpush1.bf16.msra.mxu0 0
        %2952 = vmatprep.subr.bf16.mxu0 0
        %2953 = vmatpush1.bf16.msra.mxu0 0
        %2954 = vmatprep.subr.bf16.mxu0 0
        %2955 = vmatpush1.bf16.msra.mxu0 0
        %2956 = vmatprep.subr.bf16.mxu0 0
        %2957 = vmatpush1.bf16.msra.mxu0 0
        %2958 = vmatprep.subr.bf16.mxu0 0
        %2959 = vmatpush1.bf16.msra.mxu0 0
        %2960 = vmatprep.subr.bf16.mxu0 0
        %2961 = vmatpush1.bf16.msra.mxu0 0
        %2962 = vmatprep.subr.bf16.mxu0 0
        %2963 = vmatpush1.bf16.msra.mxu0 0
        %2964 = vmatprep.mubr.bf16.mxu0 0
        %2965 = vmatmul.mubr.bf16.gmra.mrb[0].mxu0 %v1145
        %v2966 = vpop.f32.mrb[0].mxu0
        %v2967 = vadd.f32 0.0, %v2966
        %v2968 = vpop.f32.mrb[0].mxu0
        %v2969 = vpop.f32.mrb[0].mxu0
        %v2970 = vadd.f32 0.0, %v2969
        %v2971 = vpop.f32.mrb[0].mxu0
        %2972 = vdwg.mxu0
        %2973 = vmatprep.subr.bf16.mxu0 0
        %2974 = vmatpush1.bf16.msra.mxu0 %v2797
        %2975 = vmatprep.subr.bf16.mxu0 0
        %2976 = vmatpush1.bf16.msra.mxu0 0
        %2977 = vmatprep.subr.bf16.mxu0 0
        %2978 = vmatpush1.bf16.msra.mxu0 0
        %2979 = vmatprep.subr.bf16.mxu0 0
        %2980 = vmatpush1.bf16.msra.mxu0 0
        %2981 = vmatprep.subr.bf16.mxu0 0
        %2982 = vmatpush1.bf16.msra.mxu0 0
        %2983 = vmatprep.subr.bf16.mxu0 0
        %2984 = vmatpush1.bf16.msra.mxu0 0
        %2985 = vmatprep.subr.bf16.mxu0 0
        %2986 = vmatpush1.bf16.msra.mxu0 0
        %2987 = vmatprep.subr.bf16.mxu0 0
        %2988 = vmatpush1.bf16.msra.mxu0 0
        %2989 = vmatprep.subr.bf16.mxu0 0
        %2990 = vmatpush1.bf16.msra.mxu0 0
        %2991 = vmatprep.subr.bf16.mxu0 0
        %2992 = vmatpush1.bf16.msra.mxu0 0
        %2993 = vmatprep.subr.bf16.mxu0 0
        %2994 = vmatpush1.bf16.msra.mxu0 0
        %2995 = vmatprep.subr.bf16.mxu0 0
        %2996 = vmatpush1.bf16.msra.mxu0 0
        %2997 = vmatprep.subr.bf16.mxu0 0
        %2998 = vmatpush1.bf16.msra.mxu0 0
        %2999 = vmatprep.subr.bf16.mxu0 0
        %3000 = vmatpush1.bf16.msra.mxu0 0
        %3001 = vmatprep.subr.bf16.mxu0 0
        %3002 = vmatpush1.bf16.msra.mxu0 0
        %3003 = vmatprep.subr.bf16.mxu0 0
        %3004 = vmatpush1.bf16.msra.mxu0 0
        %3005 = vmatprep.mubr.bf16.mxu0 0
        %3006 = vmatmul.mubr.bf16.gmra.mrb[0].mxu0 %v1194
        %v3007 = vpop.f32.mrb[0].mxu0
        %v3008 = vadd.f32 0.0, %v3007
        %v3009 = vpop.f32.mrb[0].mxu0
        %v3010 = vpop.f32.mrb[0].mxu0
        %v3011 = vadd.f32 0.0, %v3010
        %v3012 = vpop.f32.mrb[0].mxu0
        %3013 = vdwg.mxu0
        %3014 = vmatprep.subr.bf16.mxu0 0
        %3015 = vmatpush1.bf16.msra.mxu0 %v2798
        %3016 = vmatprep.subr.bf16.mxu0 0
        %3017 = vmatpush1.bf16.msra.mxu0 0
        %3018 = vmatprep.subr.bf16.mxu0 0
        %3019 = vmatpush1.bf16.msra.mxu0 0
        %3020 = vmatprep.subr.bf16.mxu0 0
        %3021 = vmatpush1.bf16.msra.mxu0 0
        %3022 = vmatprep.subr.bf16.mxu0 0
        %3023 = vmatpush1.bf16.msra.mxu0 0
        %3024 = vmatprep.subr.bf16.mxu0 0
        %3025 = vmatpush1.bf16.msra.mxu0 0
        %3026 = vmatprep.subr.bf16.mxu0 0
        %3027 = vmatpush1.bf16.msra.mxu0 0
        %3028 = vmatprep.subr.bf16.mxu0 0
        %3029 = vmatpush1.bf16.msra.mxu0 0
        %3030 = vmatprep.subr.bf16.mxu0 0
        %3031 = vmatpush1.bf16.msra.mxu0 0
        %3032 = vmatprep.subr.bf16.mxu0 0
        %3033 = vmatpush1.bf16.msra.mxu0 0
        %3034 = vmatprep.subr.bf16.mxu0 0
        %3035 = vmatpush1.bf16.msra.mxu0 0
        %3036 = vmatprep.subr.bf16.mxu0 0
        %3037 = vmatpush1.bf16.msra.mxu0 0
        %3038 = vmatprep.subr.bf16.mxu0 0
        %3039 = vmatpush1.bf16.msra.mxu0 0
        %3040 = vmatprep.subr.bf16.mxu0 0
        %3041 = vmatpush1.bf16.msra.mxu0 0
        %3042 = vmatprep.subr.bf16.mxu0 0
        %3043 = vmatpush1.bf16.msra.mxu0 0
        %3044 = vmatprep.subr.bf16.mxu0 0
        %3045 = vmatpush1.bf16.msra.mxu0 0
        %3046 = vmatprep.mubr.bf16.mxu0 0
        %3047 = vmatmul.mubr.bf16.gmra.mrb[0].mxu0 %v1243
        %v3048 = vpop.f32.mrb[0].mxu0
        %v3049 = vadd.f32 0.0, %v3048
        %v3050 = vpop.f32.mrb[0].mxu0
        %v3051 = vpop.f32.mrb[0].mxu0
        %v3052 = vadd.f32 0.0, %v3051
        %v3053 = vpop.f32.mrb[0].mxu0
        %3054 = vdwg.mxu0
        %3055 = vmatprep.subr.bf16.mxu0 0
        %3056 = vmatpush1.bf16.msra.mxu0 %v2799
        %3057 = vmatprep.subr.bf16.mxu0 0
        %3058 = vmatpush1.bf16.msra.mxu0 0
        %3059 = vmatprep.subr.bf16.mxu0 0
        %3060 = vmatpush1.bf16.msra.mxu0 0
        %3061 = vmatprep.subr.bf16.mxu0 0
        %3062 = vmatpush1.bf16.msra.mxu0 0
        %3063 = vmatprep.subr.bf16.mxu0 0
        %3064 = vmatpush1.bf16.msra.mxu0 0
        %3065 = vmatprep.subr.bf16.mxu0 0
        %3066 = vmatpush1.bf16.msra.mxu0 0
        %3067 = vmatprep.subr.bf16.mxu0 0
        %3068 = vmatpush1.bf16.msra.mxu0 0
        %3069 = vmatprep.subr.bf16.mxu0 0
        %3070 = vmatpush1.bf16.msra.mxu0 0
        %3071 = vmatprep.subr.bf16.mxu0 0
        %3072 = vmatpush1.bf16.msra.mxu0 0
        %3073 = vmatprep.subr.bf16.mxu0 0
        %3074 = vmatpush1.bf16.msra.mxu0 0
        %3075 = vmatprep.subr.bf16.mxu0 0
        %3076 = vmatpush1.bf16.msra.mxu0 0
        %3077 = vmatprep.subr.bf16.mxu0 0
        %3078 = vmatpush1.bf16.msra.mxu0 0
        %3079 = vmatprep.subr.bf16.mxu0 0
        %3080 = vmatpush1.bf16.msra.mxu0 0
        %3081 = vmatprep.subr.bf16.mxu0 0
        %3082 = vmatpush1.bf16.msra.mxu0 0
        %3083 = vmatprep.subr.bf16.mxu0 0
        %3084 = vmatpush1.bf16.msra.mxu0 0
        %3085 = vmatprep.subr.bf16.mxu0 0
        %3086 = vmatpush1.bf16.msra.mxu0 0
        %3087 = vmatprep.mubr.bf16.mxu0 0
        %3088 = vmatmul.mubr.bf16.gmra.mrb[0].mxu0 %v1292
        %v3089 = vpop.f32.mrb[0].mxu0
        %v3090 = vadd.f32 0.0, %v3089
        %v3091 = vpop.f32.mrb[0].mxu0
        %v3092 = vpop.f32.mrb[0].mxu0
        %v3093 = vadd.f32 0.0, %v3092
        %v3094 = vpop.f32.mrb[0].mxu0
        %3095 = vdwg.mxu0
        %3096 = vmatprep.subr.bf16.mxu0 0
        %3097 = vmatpush1.bf16.msra.mxu0 %v2800
        %3098 = vmatprep.subr.bf16.mxu0 0
        %3099 = vmatpush1.bf16.msra.mxu0 0
        %3100 = vmatprep.subr.bf16.mxu0 0
        %3101 = vmatpush1.bf16.msra.mxu0 0
        %3102 = vmatprep.subr.bf16.mxu0 0
        %3103 = vmatpush1.bf16.msra.mxu0 0
        %3104 = vmatprep.subr.bf16.mxu0 0
        %3105 = vmatpush1.bf16.msra.mxu0 0
        %3106 = vmatprep.subr.bf16.mxu0 0
        %3107 = vmatpush1.bf16.msra.mxu0 0
        %3108 = vmatprep.subr.bf16.mxu0 0
        %3109 = vmatpush1.bf16.msra.mxu0 0
        %3110 = vmatprep.subr.bf16.mxu0 0
        %3111 = vmatpush1.bf16.msra.mxu0 0
        %3112 = vmatprep.subr.bf16.mxu0 0
        %3113 = vmatpush1.bf16.msra.mxu0 0
        %3114 = vmatprep.subr.bf16.mxu0 0
        %3115 = vmatpush1.bf16.msra.mxu0 0
        %3116 = vmatprep.subr.bf16.mxu0 0
        %3117 = vmatpush1.bf16.msra.mxu0 0
        %3118 = vmatprep.subr.bf16.mxu0 0
        %3119 = vmatpush1.bf16.msra.mxu0 0
        %3120 = vmatprep.subr.bf16.mxu0 0
        %3121 = vmatpush1.bf16.msra.mxu0 0
        %3122 = vmatprep.subr.bf16.mxu0 0
        %3123 = vmatpush1.bf16.msra.mxu0 0
        %3124 = vmatprep.subr.bf16.mxu0 0
        %3125 = vmatpush1.bf16.msra.mxu0 0
        %3126 = vmatprep.subr.bf16.mxu0 0
        %3127 = vmatpush1.bf16.msra.mxu0 0
        %3128 = vmatprep.mubr.bf16.mxu0 0
        %3129 = vmatmul.mubr.bf16.gmra.mrb[0].mxu0 %v1341
        %v3130 = vpop.f32.mrb[0].mxu0
        %v3131 = vadd.f32 0.0, %v3130
        %v3132 = vpop.f32.mrb[0].mxu0
        %v3133 = vpop.f32.mrb[0].mxu0
        %v3134 = vadd.f32 0.0, %v3133
        %v3135 = vpop.f32.mrb[0].mxu0
        %3136 = vdwg.mxu0
        %3137 = vmatprep.subr.bf16.mxu0 0
        %3138 = vmatpush1.bf16.msra.mxu0 %v2801
        %3139 = vmatprep.subr.bf16.mxu0 0
        %3140 = vmatpush1.bf16.msra.mxu0 0
        %3141 = vmatprep.subr.bf16.mxu0 0
        %3142 = vmatpush1.bf16.msra.mxu0 0
        %3143 = vmatprep.subr.bf16.mxu0 0
        %3144 = vmatpush1.bf16.msra.mxu0 0
        %3145 = vmatprep.subr.bf16.mxu0 0
        %3146 = vmatpush1.bf16.msra.mxu0 0
        %3147 = vmatprep.subr.bf16.mxu0 0
        %3148 = vmatpush1.bf16.msra.mxu0 0
        %3149 = vmatprep.subr.bf16.mxu0 0
        %3150 = vmatpush1.bf16.msra.mxu0 0
        %3151 = vmatprep.subr.bf16.mxu0 0
        %3152 = vmatpush1.bf16.msra.mxu0 0
        %3153 = vmatprep.subr.bf16.mxu0 0
        %3154 = vmatpush1.bf16.msra.mxu0 0
        %3155 = vmatprep.subr.bf16.mxu0 0
        %3156 = vmatpush1.bf16.msra.mxu0 0
        %3157 = vmatprep.subr.bf16.mxu0 0
        %3158 = vmatpush1.bf16.msra.mxu0 0
        %3159 = vmatprep.subr.bf16.mxu0 0
        %3160 = vmatpush1.bf16.msra.mxu0 0
        %3161 = vmatprep.subr.bf16.mxu0 0
        %3162 = vmatpush1.bf16.msra.mxu0 0
        %3163 = vmatprep.subr.bf16.mxu0 0
        %3164 = vmatpush1.bf16.msra.mxu0 0
        %3165 = vmatprep.subr.bf16.mxu0 0
        %3166 = vmatpush1.bf16.msra.mxu0 0
        %3167 = vmatprep.subr.bf16.mxu0 0
        %3168 = vmatpush1.bf16.msra.mxu0 0
        %3169 = vmatprep.mubr.bf16.mxu0 0
        %3170 = vmatmul.mubr.bf16.gmra.mrb[0].mxu0 %v1390
        %v3171 = vpop.f32.mrb[0].mxu0
        %v3172 = vadd.f32 0.0, %v3171
        %v3173 = vpop.f32.mrb[0].mxu0
        %v3174 = vpop.f32.mrb[0].mxu0
        %v3175 = vadd.f32 0.0, %v3174
        %v3176 = vpop.f32.mrb[0].mxu0
        %3177 = vdwg.mxu0
        %3178 = vmatprep.subr.bf16.mxu0 0
        %3179 = vmatpush1.bf16.msra.mxu0 %v2802
        %3180 = vmatprep.subr.bf16.mxu0 0
        %3181 = vmatpush1.bf16.msra.mxu0 0
        %3182 = vmatprep.subr.bf16.mxu0 0
        %3183 = vmatpush1.bf16.msra.mxu0 0
        %3184 = vmatprep.subr.bf16.mxu0 0
        %3185 = vmatpush1.bf16.msra.mxu0 0
        %3186 = vmatprep.subr.bf16.mxu0 0
        %3187 = vmatpush1.bf16.msra.mxu0 0
        %3188 = vmatprep.subr.bf16.mxu0 0
        %3189 = vmatpush1.bf16.msra.mxu0 0
        %3190 = vmatprep.subr.bf16.mxu0 0
        %3191 = vmatpush1.bf16.msra.mxu0 0
        %3192 = vmatprep.subr.bf16.mxu0 0
        %3193 = vmatpush1.bf16.msra.mxu0 0
        %3194 = vmatprep.subr.bf16.mxu0 0
        %3195 = vmatpush1.bf16.msra.mxu0 0
        %3196 = vmatprep.subr.bf16.mxu0 0
        %3197 = vmatpush1.bf16.msra.mxu0 0
        %3198 = vmatprep.subr.bf16.mxu0 0
        %3199 = vmatpush1.bf16.msra.mxu0 0
        %3200 = vmatprep.subr.bf16.mxu0 0
        %3201 = vmatpush1.bf16.msra.mxu0 0
        %3202 = vmatprep.subr.bf16.mxu0 0
        %3203 = vmatpush1.bf16.msra.mxu0 0
        %3204 = vmatprep.subr.bf16.mxu0 0
        %3205 = vmatpush1.bf16.msra.mxu0 0
        %3206 = vmatprep.subr.bf16.mxu0 0
        %3207 = vmatpush1.bf16.msra.mxu0 0
        %3208 = vmatprep.subr.bf16.mxu0 0
        %3209 = vmatpush1.bf16.msra.mxu0 0
        %3210 = vmatprep.mubr.bf16.mxu0 0
        %3211 = vmatmul.mubr.bf16.gmra.mrb[0].mxu0 %v1439
        %v3212 = vpop.f32.mrb[0].mxu0
        %v3213 = vadd.f32 0.0, %v3212
        %v3214 = vpop.f32.mrb[0].mxu0
        %v3215 = vpop.f32.mrb[0].mxu0
        %v3216 = vadd.f32 0.0, %v3215
        %v3217 = vpop.f32.mrb[0].mxu0
        %3218 = vdwg.mxu0
        %3219 = vmatprep.subr.bf16.mxu0 0
        %3220 = vmatpush1.bf16.msra.mxu0 %v2803
        %3221 = vmatprep.subr.bf16.mxu0 0
        %3222 = vmatpush1.bf16.msra.mxu0 0
        %3223 = vmatprep.subr.bf16.mxu0 0
        %3224 = vmatpush1.bf16.msra.mxu0 0
        %3225 = vmatprep.subr.bf16.mxu0 0
        %3226 = vmatpush1.bf16.msra.mxu0 0
        %3227 = vmatprep.subr.bf16.mxu0 0
        %3228 = vmatpush1.bf16.msra.mxu0 0
        %3229 = vmatprep.subr.bf16.mxu0 0
        %3230 = vmatpush1.bf16.msra.mxu0 0
        %3231 = vmatprep.subr.bf16.mxu0 0
        %3232 = vmatpush1.bf16.msra.mxu0 0
        %3233 = vmatprep.subr.bf16.mxu0 0
        %3234 = vmatpush1.bf16.msra.mxu0 0
        %3235 = vmatprep.subr.bf16.mxu0 0
        %3236 = vmatpush1.bf16.msra.mxu0 0
        %3237 = vmatprep.subr.bf16.mxu0 0
        %3238 = vmatpush1.bf16.msra.mxu0 0
        %3239 = vmatprep.subr.bf16.mxu0 0
        %3240 = vmatpush1.bf16.msra.mxu0 0
        %3241 = vmatprep.subr.bf16.mxu0 0
        %3242 = vmatpush1.bf16.msra.mxu0 0
        %3243 = vmatprep.subr.bf16.mxu0 0
        %3244 = vmatpush1.bf16.msra.mxu0 0
        %3245 = vmatprep.subr.bf16.mxu0 0
        %3246 = vmatpush1.bf16.msra.mxu0 0
        %3247 = vmatprep.subr.bf16.mxu0 0
        %3248 = vmatpush1.bf16.msra.mxu0 0
        %3249 = vmatprep.subr.bf16.mxu0 0
        %3250 = vmatpush1.bf16.msra.mxu0 0
        %3251 = vmatprep.mubr.bf16.mxu0 0
        %3252 = vmatmul.mubr.bf16.gmra.mrb[0].mxu0 %v1488
        %v3253 = vpop.f32.mrb[0].mxu0
        %v3254 = vadd.f32 0.0, %v3253
        %v3255 = vpop.f32.mrb[0].mxu0
        %v3256 = vpop.f32.mrb[0].mxu0
        %v3257 = vadd.f32 0.0, %v3256
        %v3258 = vpop.f32.mrb[0].mxu0
        %3259 = vdwg.mxu0
        %3260 = vmatprep.subr.bf16.mxu0 0
        %3261 = vmatpush1.bf16.msra.mxu0 %v2804
        %3262 = vmatprep.subr.bf16.mxu0 0
        %3263 = vmatpush1.bf16.msra.mxu0 0
        %3264 = vmatprep.subr.bf16.mxu0 0
        %3265 = vmatpush1.bf16.msra.mxu0 0
        %3266 = vmatprep.subr.bf16.mxu0 0
        %3267 = vmatpush1.bf16.msra.mxu0 0
        %3268 = vmatprep.subr.bf16.mxu0 0
        %3269 = vmatpush1.bf16.msra.mxu0 0
        %3270 = vmatprep.subr.bf16.mxu0 0
        %3271 = vmatpush1.bf16.msra.mxu0 0
        %3272 = vmatprep.subr.bf16.mxu0 0
        %3273 = vmatpush1.bf16.msra.mxu0 0
        %3274 = vmatprep.subr.bf16.mxu0 0
        %3275 = vmatpush1.bf16.msra.mxu0 0
        %3276 = vmatprep.subr.bf16.mxu0 0
        %3277 = vmatpush1.bf16.msra.mxu0 0
        %3278 = vmatprep.subr.bf16.mxu0 0
        %3279 = vmatpush1.bf16.msra.mxu0 0
        %3280 = vmatprep.subr.bf16.mxu0 0
        %3281 = vmatpush1.bf16.msra.mxu0 0
        %3282 = vmatprep.subr.bf16.mxu0 0
        %3283 = vmatpush1.bf16.msra.mxu0 0
        %3284 = vmatprep.subr.bf16.mxu0 0
        %3285 = vmatpush1.bf16.msra.mxu0 0
        %3286 = vmatprep.subr.bf16.mxu0 0
        %3287 = vmatpush1.bf16.msra.mxu0 0
        %3288 = vmatprep.subr.bf16.mxu0 0
        %3289 = vmatpush1.bf16.msra.mxu0 0
        %3290 = vmatprep.subr.bf16.mxu0 0
        %3291 = vmatpush1.bf16.msra.mxu0 0
        %3292 = vmatprep.mubr.bf16.mxu0 0
        %3293 = vmatmul.mubr.bf16.gmra.mrb[0].mxu0 %v1537
        %v3294 = vpop.f32.mrb[0].mxu0
        %v3295 = vadd.f32 0.0, %v3294
        %v3296 = vpop.f32.mrb[0].mxu0
        %v3297 = vpop.f32.mrb[0].mxu0
        %v3298 = vadd.f32 0.0, %v3297
        %v3299 = vpop.f32.mrb[0].mxu0
        %3300 = vdwg.mxu0
        %3301 = vmatprep.subr.bf16.mxu0 0
        %3302 = vmatpush1.bf16.msra.mxu0 %v2805
        %3303 = vmatprep.subr.bf16.mxu0 0
        %3304 = vmatpush1.bf16.msra.mxu0 0
        %3305 = vmatprep.subr.bf16.mxu0 0
        %3306 = vmatpush1.bf16.msra.mxu0 0
        %3307 = vmatprep.subr.bf16.mxu0 0
        %3308 = vmatpush1.bf16.msra.mxu0 0
        %3309 = vmatprep.subr.bf16.mxu0 0
        %3310 = vmatpush1.bf16.msra.mxu0 0
        %3311 = vmatprep.subr.bf16.mxu0 0
        %3312 = vmatpush1.bf16.msra.mxu0 0
        %3313 = vmatprep.subr.bf16.mxu0 0
        %3314 = vmatpush1.bf16.msra.mxu0 0
        %3315 = vmatprep.subr.bf16.mxu0 0
        %3316 = vmatpush1.bf16.msra.mxu0 0
        %3317 = vmatprep.subr.bf16.mxu0 0
        %3318 = vmatpush1.bf16.msra.mxu0 0
        %3319 = vmatprep.subr.bf16.mxu0 0
        %3320 = vmatpush1.bf16.msra.mxu0 0
        %3321 = vmatprep.subr.bf16.mxu0 0
        %3322 = vmatpush1.bf16.msra.mxu0 0
        %3323 = vmatprep.subr.bf16.mxu0 0
        %3324 = vmatpush1.bf16.msra.mxu0 0
        %3325 = vmatprep.subr.bf16.mxu0 0
        %3326 = vmatpush1.bf16.msra.mxu0 0
        %3327 = vmatprep.subr.bf16.mxu0 0
        %3328 = vmatpush1.bf16.msra.mxu0 0
        %3329 = vmatprep.subr.bf16.mxu0 0
        %3330 = vmatpush1.bf16.msra.mxu0 0
        %3331 = vmatprep.subr.bf16.mxu0 0
        %3332 = vmatpush1.bf16.msra.mxu0 0
        %3333 = vmatprep.mubr.bf16.mxu0 0
        %3334 = vmatmul.mubr.bf16.gmra.mrb[0].mxu0 %v1586
        %v3335 = vpop.f32.mrb[0].mxu0
        %v3336 = vadd.f32 0.0, %v3335
        %v3337 = vpop.f32.mrb[0].mxu0
        %v3338 = vpop.f32.mrb[0].mxu0
        %v3339 = vadd.f32 0.0, %v3338
        %v3340 = vpop.f32.mrb[0].mxu0
        %3341 = vdwg.mxu0
        %3342 = vmatprep.subr.bf16.mxu0 0
        %3343 = vmatpush1.bf16.msra.mxu0 %v2806
        %3344 = vmatprep.subr.bf16.mxu0 0
        %3345 = vmatpush1.bf16.msra.mxu0 0
        %3346 = vmatprep.subr.bf16.mxu0 0
        %3347 = vmatpush1.bf16.msra.mxu0 0
        %3348 = vmatprep.subr.bf16.mxu0 0
        %3349 = vmatpush1.bf16.msra.mxu0 0
        %3350 = vmatprep.subr.bf16.mxu0 0
        %3351 = vmatpush1.bf16.msra.mxu0 0
        %3352 = vmatprep.subr.bf16.mxu0 0
        %3353 = vmatpush1.bf16.msra.mxu0 0
        %3354 = vmatprep.subr.bf16.mxu0 0
        %3355 = vmatpush1.bf16.msra.mxu0 0
        %3356 = vmatprep.subr.bf16.mxu0 0
        %3357 = vmatpush1.bf16.msra.mxu0 0
        %3358 = vmatprep.subr.bf16.mxu0 0
        %3359 = vmatpush1.bf16.msra.mxu0 0
        %3360 = vmatprep.subr.bf16.mxu0 0
        %3361 = vmatpush1.bf16.msra.mxu0 0
        %3362 = vmatprep.subr.bf16.mxu0 0
        %3363 = vmatpush1.bf16.msra.mxu0 0
        %3364 = vmatprep.subr.bf16.mxu0 0
        %3365 = vmatpush1.bf16.msra.mxu0 0
        %3366 = vmatprep.subr.bf16.mxu0 0
        %3367 = vmatpush1.bf16.msra.mxu0 0
        %3368 = vmatprep.subr.bf16.mxu0 0
        %3369 = vmatpush1.bf16.msra.mxu0 0
        %3370 = vmatprep.subr.bf16.mxu0 0
        %3371 = vmatpush1.bf16.msra.mxu0 0
        %3372 = vmatprep.subr.bf16.mxu0 0
        %3373 = vmatpush1.bf16.msra.mxu0 0
        %3374 = vmatprep.mubr.bf16.mxu0 0
        %3375 = vmatmul.mubr.bf16.gmra.mrb[0].mxu0 %v1635
        %v3376 = vpop.f32.mrb[0].mxu0
        %v3377 = vadd.f32 0.0, %v3376
        %v3378 = vpop.f32.mrb[0].mxu0
        %v3379 = vpop.f32.mrb[0].mxu0
        %v3380 = vadd.f32 0.0, %v3379
        %v3381 = vpop.f32.mrb[0].mxu0
        %3382 = vdwg.mxu0
        %3383 = vmatprep.subr.bf16.mxu0 0
        %3384 = vmatpush1.bf16.msra.mxu0 %v2807
        %3385 = vmatprep.subr.bf16.mxu0 0
        %3386 = vmatpush1.bf16.msra.mxu0 0
        %3387 = vmatprep.subr.bf16.mxu0 0
        %3388 = vmatpush1.bf16.msra.mxu0 0
        %3389 = vmatprep.subr.bf16.mxu0 0
        %3390 = vmatpush1.bf16.msra.mxu0 0
        %3391 = vmatprep.subr.bf16.mxu0 0
        %3392 = vmatpush1.bf16.msra.mxu0 0
        %3393 = vmatprep.subr.bf16.mxu0 0
        %3394 = vmatpush1.bf16.msra.mxu0 0
        %3395 = vmatprep.subr.bf16.mxu0 0
        %3396 = vmatpush1.bf16.msra.mxu0 0
        %3397 = vmatprep.subr.bf16.mxu0 0
        %3398 = vmatpush1.bf16.msra.mxu0 0
        %3399 = vmatprep.subr.bf16.mxu0 0
        %3400 = vmatpush1.bf16.msra.mxu0 0
        %3401 = vmatprep.subr.bf16.mxu0 0
        %3402 = vmatpush1.bf16.msra.mxu0 0
        %3403 = vmatprep.subr.bf16.mxu0 0
        %3404 = vmatpush1.bf16.msra.mxu0 0
        %3405 = vmatprep.subr.bf16.mxu0 0
        %3406 = vmatpush1.bf16.msra.mxu0 0
        %3407 = vmatprep.subr.bf16.mxu0 0
        %3408 = vmatpush1.bf16.msra.mxu0 0
        %3409 = vmatprep.subr.bf16.mxu0 0
        %3410 = vmatpush1.bf16.msra.mxu0 0
        %3411 = vmatprep.subr.bf16.mxu0 0
        %3412 = vmatpush1.bf16.msra.mxu0 0
        %3413 = vmatprep.subr.bf16.mxu0 0
        %3414 = vmatpush1.bf16.msra.mxu0 0
        %3415 = vmatprep.mubr.bf16.mxu0 0
        %3416 = vmatmul.mubr.bf16.gmra.mrb[0].mxu0 %v1684
        %v3417 = vpop.f32.mrb[0].mxu0
        %v3418 = vadd.f32 0.0, %v3417
        %v3419 = vpop.f32.mrb[0].mxu0
        %v3420 = vpop.f32.mrb[0].mxu0
        %v3421 = vadd.f32 0.0, %v3420
        %v3422 = vpop.f32.mrb[0].mxu0
        %3423 = vdwg.mxu0
        %3424 = vmatprep.subr.bf16.mxu0 0
        %3425 = vmatpush1.bf16.msra.mxu0 %v2808
        %3426 = vmatprep.subr.bf16.mxu0 0
        %3427 = vmatpush1.bf16.msra.mxu0 0
        %3428 = vmatprep.subr.bf16.mxu0 0
        %3429 = vmatpush1.bf16.msra.mxu0 0
        %3430 = vmatprep.subr.bf16.mxu0 0
        %3431 = vmatpush1.bf16.msra.mxu0 0
        %3432 = vmatprep.subr.bf16.mxu0 0
        %3433 = vmatpush1.bf16.msra.mxu0 0
        %3434 = vmatprep.subr.bf16.mxu0 0
        %3435 = vmatpush1.bf16.msra.mxu0 0
        %3436 = vmatprep.subr.bf16.mxu0 0
        %3437 = vmatpush1.bf16.msra.mxu0 0
        %3438 = vmatprep.subr.bf16.mxu0 0
        %3439 = vmatpush1.bf16.msra.mxu0 0
        %3440 = vmatprep.subr.bf16.mxu0 0
        %3441 = vmatpush1.bf16.msra.mxu0 0
        %3442 = vmatprep.subr.bf16.mxu0 0
        %3443 = vmatpush1.bf16.msra.mxu0 0
        %3444 = vmatprep.subr.bf16.mxu0 0
        %3445 = vmatpush1.bf16.msra.mxu0 0
        %3446 = vmatprep.subr.bf16.mxu0 0
        %3447 = vmatpush1.bf16.msra.mxu0 0
        %3448 = vmatprep.subr.bf16.mxu0 0
        %3449 = vmatpush1.bf16.msra.mxu0 0
        %3450 = vmatprep.subr.bf16.mxu0 0
        %3451 = vmatpush1.bf16.msra.mxu0 0
        %3452 = vmatprep.subr.bf16.mxu0 0
        %3453 = vmatpush1.bf16.msra.mxu0 0
        %3454 = vmatprep.subr.bf16.mxu0 0
        %3455 = vmatpush1.bf16.msra.mxu0 0
        %3456 = vmatprep.mubr.bf16.mxu0 0
        %3457 = vmatmul.mubr.bf16.gmra.mrb[0].mxu0 %v1733
        %v3458 = vpop.f32.mrb[0].mxu0
        %v3459 = vadd.f32 0.0, %v3458
        %v3460 = vpop.f32.mrb[0].mxu0
        %v3461 = vpop.f32.mrb[0].mxu0
        %v3462 = vadd.f32 0.0, %v3461
        %v3463 = vpop.f32.mrb[0].mxu0
        %3464 = vdwg.mxu0
        %v3465 = vmul.f32 %v615, %v2844
        %v3466 = vmul.f32 %v616, %v2847
        %v3467 = vmul.f32 %v617, %v2885
        %v3468 = vmul.f32 %v618, %v2888
        %v3469 = vmul.f32 %v619, %v2926
        %v3470 = vmul.f32 %v620, %v2929
        %v3471 = vmul.f32 %v621, %v2967
        %v3472 = vmul.f32 %v622, %v2970
        %v3473 = vmul.f32 %v623, %v3008
        %v3474 = vmul.f32 %v624, %v3011
        %v3475 = vmul.f32 %v625, %v3049
        %v3476 = vmul.f32 %v626, %v3052
        %v3477 = vmul.f32 %v627, %v3090
        %v3478 = vmul.f32 %v628, %v3093
        %v3479 = vmul.f32 %v629, %v3131
        %v3480 = vmul.f32 %v630, %v3134
        %v3481 = vmul.f32 %v631, %v3172
        %v3482 = vmul.f32 %v632, %v3175
        %v3483 = vmul.f32 %v633, %v3213
        %v3484 = vmul.f32 %v634, %v3216
        %v3485 = vmul.f32 %v635, %v3254
        %v3486 = vmul.f32 %v636, %v3257
        %v3487 = vmul.f32 %v637, %v3295
        %v3488 = vmul.f32 %v638, %v3298
        %v3489 = vmul.f32 %v639, %v3336
        %v3490 = vmul.f32 %v640, %v3339
        %v3491 = vmul.f32 %v641, %v3377
        %v3492 = vmul.f32 %v642, %v3380
        %v3493 = vmul.f32 %v643, %v3418
        %v3494 = vmul.f32 %v644, %v3421
        %v3495 = vmul.f32 %v645, %v3459
        %v3496 = vmul.f32 %v646, %v3462
        %v3497 = vld [vmem:[%s7] sm:$0x1]
        %v3499 = vlaneseq
        %v3500 = vshrl.u32 %v3499, 7
        %v3501 = vsub.s32 0, %v3500
        %v3502 = vrot.slane %v3497, %v3501
        %v3504 = vadd.f32 %v3465, %v3502
        %v3505 = vadd.f32 %v3466, %v3502
        %v3506 = vadd.f32 %v3467, %v3502
        %v3507 = vadd.f32 %v3468, %v3502
        %v3508 = vadd.f32 %v3469, %v3502
        %v3509 = vadd.f32 %v3470, %v3502
        %v3510 = vadd.f32 %v3471, %v3502
        %v3511 = vadd.f32 %v3472, %v3502
        %v3512 = vadd.f32 %v3473, %v3502
        %v3513 = vadd.f32 %v3474, %v3502
        %v3514 = vadd.f32 %v3475, %v3502
        %v3515 = vadd.f32 %v3476, %v3502
        %v3516 = vadd.f32 %v3477, %v3502
        %v3517 = vadd.f32 %v3478, %v3502
        %v3518 = vadd.f32 %v3479, %v3502
        %v3519 = vadd.f32 %v3480, %v3502
        %v3520 = vadd.f32 %v3481, %v3502
        %v3521 = vadd.f32 %v3482, %v3502
        %v3522 = vadd.f32 %v3483, %v3502
        %v3523 = vadd.f32 %v3484, %v3502
        %v3524 = vadd.f32 %v3485, %v3502
        %v3525 = vadd.f32 %v3486, %v3502
        %v3526 = vadd.f32 %v3487, %v3502
        %v3527 = vadd.f32 %v3488, %v3502
        %v3528 = vadd.f32 %v3489, %v3502
        %v3529 = vadd.f32 %v3490, %v3502
        %v3530 = vadd.f32 %v3491, %v3502
        %v3531 = vadd.f32 %v3492, %v3502
        %v3532 = vadd.f32 %v3493, %v3502
        %v3533 = vadd.f32 %v3494, %v3502
        %v3534 = vadd.f32 %v3495, %v3502
        %v3535 = vadd.f32 %v3496, %v3502
        %v3536 = vmax.f32 %v3504, 0.0
        %v3537 = vmax.f32 %v3505, 0.0
        %v3538 = vmax.f32 %v3506, 0.0
        %v3539 = vmax.f32 %v3507, 0.0
        %v3540 = vmax.f32 %v3508, 0.0
        %v3541 = vmax.f32 %v3509, 0.0
        %v3542 = vmax.f32 %v3510, 0.0
        %v3543 = vmax.f32 %v3511, 0.0
        %v3544 = vmax.f32 %v3512, 0.0
        %v3545 = vmax.f32 %v3513, 0.0
        %v3546 = vmax.f32 %v3514, 0.0
        %v3547 = vmax.f32 %v3515, 0.0
        %v3548 = vmax.f32 %v3516, 0.0
        %v3549 = vmax.f32 %v3517, 0.0
        %v3550 = vmax.f32 %v3518, 0.0
        %v3551 = vmax.f32 %v3519, 0.0
        %v3552 = vmax.f32 %v3520, 0.0
        %v3553 = vmax.f32 %v3521, 0.0
        %v3554 = vmax.f32 %v3522, 0.0
        %v3555 = vmax.f32 %v3523, 0.0
        %v3556 = vmax.f32 %v3524, 0.0
        %v3557 = vmax.f32 %v3525, 0.0
        %v3558 = vmax.f32 %v3526, 0.0
        %v3559 = vmax.f32 %v3527, 0.0
        %v3560 = vmax.f32 %v3528, 0.0
        %v3561 = vmax.f32 %v3529, 0.0
        %v3562 = vmax.f32 %v3530, 0.0
        %v3563 = vmax.f32 %v3531, 0.0
        %v3564 = vmax.f32 %v3532, 0.0
        %v3565 = vmax.f32 %v3533, 0.0
        %v3566 = vmax.f32 %v3534, 0.0
        %v3567 = vmax.f32 %v3535, 0.0
        %v3568 = vpack.c.bf16 %v3537, %v3536
        %v3569 = vpack.c.bf16 %v3539, %v3538
        %v3570 = vpack.c.bf16 %v3541, %v3540
        %v3571 = vpack.c.bf16 %v3543, %v3542
        %v3572 = vpack.c.bf16 %v3545, %v3544
        %v3573 = vpack.c.bf16 %v3547, %v3546
        %v3574 = vpack.c.bf16 %v3549, %v3548
        %v3575 = vpack.c.bf16 %v3551, %v3550
        %v3576 = vpack.c.bf16 %v3553, %v3552
        %v3577 = vpack.c.bf16 %v3555, %v3554
        %v3578 = vpack.c.bf16 %v3557, %v3556
        %v3579 = vpack.c.bf16 %v3559, %v3558
        %v3580 = vpack.c.bf16 %v3561, %v3560
        %v3581 = vpack.c.bf16 %v3563, %v3562
        %v3582 = vpack.c.bf16 %v3565, %v3564
        %v3583 = vpack.c.bf16 %v3567, %v3566
        %3584 = vst [vmem:[#allocation2] sm:$0xff] %v3568
        %3585 = vst [vmem:[#allocation2 + $0x10] sm:$0xff] %v3569
        %3586 = vst [vmem:[#allocation2 + $0x20] sm:$0xff] %v3570
        %3587 = vst [vmem:[#allocation2 + $0x30] sm:$0xff] %v3571
        %3588 = vst [vmem:[#allocation2 + $0x40] sm:$0xff] %v3572
        %3589 = vst [vmem:[#allocation2 + $0x50] sm:$0xff] %v3573
        %3590 = vst [vmem:[#allocation2 + $0x60] sm:$0xff] %v3574
        %3591 = vst [vmem:[#allocation2 + $0x70] sm:$0xff] %v3575
        %3592 = vst [vmem:[#allocation2 + $0x80] sm:$0xff] %v3576
        %3593 = vst [vmem:[#allocation2 + $0x90] sm:$0xff] %v3577
        %3594 = vst [vmem:[#allocation2 + $0xa0] sm:$0xff] %v3578
        %3595 = vst [vmem:[#allocation2 + $0xb0] sm:$0xff] %v3579
        %3596 = vst [vmem:[#allocation2 + $0xc0] sm:$0xff] %v3580
        %3597 = vst [vmem:[#allocation2 + $0xd0] sm:$0xff] %v3581
        %3598 = vst [vmem:[#allocation2 + $0xe0] sm:$0xff] %v3582
        %3599 = vst [vmem:[#allocation2 + $0xf0] sm:$0xff] %v3583
        %3600 = vst [vmem:[#allocation2 + $0x8] sm:$0xff] %v2520
        %3601 = vst [vmem:[#allocation2 + $0x18] sm:$0xff] %v2521
        %3602 = vst [vmem:[#allocation2 + $0x28] sm:$0xff] %v2522
        %3603 = vst [vmem:[#allocation2 + $0x38] sm:$0xff] %v2523
        %3604 = vst [vmem:[#allocation2 + $0x48] sm:$0xff] %v2524
        %3605 = vst [vmem:[#allocation2 + $0x58] sm:$0xff] %v2525
        %3606 = vst [vmem:[#allocation2 + $0x68] sm:$0xff] %v2526
        %3607 = vst [vmem:[#allocation2 + $0x78] sm:$0xff] %v2527
        %3608 = vst [vmem:[#allocation2 + $0x88] sm:$0xff] %v2528
        %3609 = vst [vmem:[#allocation2 + $0x98] sm:$0xff] %v2529
        %3610 = vst [vmem:[#allocation2 + $0xa8] sm:$0xff] %v2530
        %3611 = vst [vmem:[#allocation2 + $0xb8] sm:$0xff] %v2531
        %3612 = vst [vmem:[#allocation2 + $0xc8] sm:$0xff] %v2532
        %3613 = vst [vmem:[#allocation2 + $0xd8] sm:$0xff] %v2533
        %3614 = vst [vmem:[#allocation2 + $0xe8] sm:$0xff] %v2534
        %3615 = vst [vmem:[#allocation2 + $0xf8] sm:$0xff] %v2535
        %v3616 = vld [vmem:[#allocation2] sm:$0xff]
        %v3617 = vld [vmem:[#allocation2 + $0x8] sm:$0xff]
        %v3618 = vld [vmem:[#allocation2 + $0x10] sm:$0xff]
        %v3619 = vld [vmem:[#allocation2 + $0x18] sm:$0xff]
        %v3620 = vld [vmem:[#allocation2 + $0x20] sm:$0xff]
        %v3621 = vld [vmem:[#allocation2 + $0x28] sm:$0xff]
        %v3622 = vld [vmem:[#allocation2 + $0x30] sm:$0xff]
        %v3623 = vld [vmem:[#allocation2 + $0x38] sm:$0xff]
        %v3624 = vld [vmem:[#allocation2 + $0x40] sm:$0xff]
        %v3625 = vld [vmem:[#allocation2 + $0x48] sm:$0xff]
        %v3626 = vld [vmem:[#allocation2 + $0x50] sm:$0xff]
        %v3627 = vld [vmem:[#allocation2 + $0x58] sm:$0xff]
        %v3628 = vld [vmem:[#allocation2 + $0x60] sm:$0xff]
        %v3629 = vld [vmem:[#allocation2 + $0x68] sm:$0xff]
        %v3630 = vld [vmem:[#allocation2 + $0x70] sm:$0xff]
        %v3631 = vld [vmem:[#allocation2 + $0x78] sm:$0xff]
        %v3632 = vld [vmem:[#allocation2 + $0x80] sm:$0xff]
        %v3633 = vld [vmem:[#allocation2 + $0x88] sm:$0xff]
        %v3634 = vld [vmem:[#allocation2 + $0x90] sm:$0xff]
        %v3635 = vld [vmem:[#allocation2 + $0x98] sm:$0xff]
        %v3636 = vld [vmem:[#allocation2 + $0xa0] sm:$0xff]
        %v3637 = vld [vmem:[#allocation2 + $0xa8] sm:$0xff]
        %v3638 = vld [vmem:[#allocation2 + $0xb0] sm:$0xff]
        %v3639 = vld [vmem:[#allocation2 + $0xb8] sm:$0xff]
        %v3640 = vld [vmem:[#allocation2 + $0xc0] sm:$0xff]
        %v3641 = vld [vmem:[#allocation2 + $0xc8] sm:$0xff]
        %v3642 = vld [vmem:[#allocation2 + $0xd0] sm:$0xff]
        %v3643 = vld [vmem:[#allocation2 + $0xd8] sm:$0xff]
        %v3644 = vld [vmem:[#allocation2 + $0xe0] sm:$0xff]
        %v3645 = vld [vmem:[#allocation2 + $0xe8] sm:$0xff]
        %v3646 = vld [vmem:[#allocation2 + $0xf0] sm:$0xff]
        %v3647 = vld [vmem:[#allocation2 + $0xf8] sm:$0xff]
        %v3648 = vld [vmem:[%s8] sm:$0xf]
        %v3649 = vld [vmem:[%s8 + $0x4] sm:$0xf]
        %v3650 = vld [vmem:[%s8 + $0x8] sm:$0xf]
        %v3651 = vld [vmem:[%s8 + $0xc] sm:$0xf]
        %v3652 = vld [vmem:[%s8 + $0x10] sm:$0xf]
        %v3653 = vld [vmem:[%s8 + $0x14] sm:$0xf]
        %v3654 = vld [vmem:[%s8 + $0x18] sm:$0xf]
        %v3655 = vld [vmem:[%s8 + $0x1c] sm:$0xf]
        %v3656 = vld [vmem:[%s8 + $0x20] sm:$0xf]
        %v3657 = vld [vmem:[%s8 + $0x24] sm:$0xf]
        %v3658 = vld [vmem:[%s8 + $0x28] sm:$0xf]
        %v3659 = vld [vmem:[%s8 + $0x2c] sm:$0xf]
        %v3660 = vld [vmem:[%s8 + $0x30] sm:$0xf]
        %v3661 = vld [vmem:[%s8 + $0x34] sm:$0xf]
        %v3662 = vld [vmem:[%s8 + $0x38] sm:$0xf]
        %v3663 = vld [vmem:[%s8 + $0x3c] sm:$0xf]
        %v3664 = vld [vmem:[%s8 + $0x40] sm:$0xf]
        %v3665 = vld [vmem:[%s8 + $0x44] sm:$0xf]
        %v3666 = vld [vmem:[%s8 + $0x48] sm:$0xf]
        %v3667 = vld [vmem:[%s8 + $0x4c] sm:$0xf]
        %v3668 = vld [vmem:[%s8 + $0x50] sm:$0xf]
        %v3669 = vld [vmem:[%s8 + $0x54] sm:$0xf]
        %v3670 = vld [vmem:[%s8 + $0x58] sm:$0xf]
        %v3671 = vld [vmem:[%s8 + $0x5c] sm:$0xf]
        %v3672 = vld [vmem:[%s8 + $0x60] sm:$0xf]
        %v3673 = vld [vmem:[%s8 + $0x64] sm:$0xf]
        %v3674 = vld [vmem:[%s8 + $0x68] sm:$0xf]
        %v3675 = vld [vmem:[%s8 + $0x6c] sm:$0xf]
        %v3676 = vld [vmem:[%s8 + $0x70] sm:$0xf]
        %v3677 = vld [vmem:[%s8 + $0x74] sm:$0xf]
        %v3678 = vld [vmem:[%s8 + $0x78] sm:$0xf]
        %v3679 = vld [vmem:[%s8 + $0x7c] sm:$0xf]
        %v3680 = vld [vmem:[%s9] sm:$0x1]
        %v3682 = vlaneseq
        %v3683 = vshrl.u32 %v3682, 7
        %v3684 = vsub.s32 0, %v3683
        %v3685 = vrot.slane %v3680, %v3684
        %v3719 = vunpack.c.l.b16 %v3648
        %v3720 = vunpack.c.l.b16 %v3649
        %v3721 = vunpack.c.l.b16 %v3650
        %v3722 = vunpack.c.l.b16 %v3651
        %v3723 = vunpack.c.l.b16 %v3652
        %v3724 = vunpack.c.l.b16 %v3653
        %v3725 = vunpack.c.l.b16 %v3654
        %v3726 = vunpack.c.l.b16 %v3655
        %v3727 = vunpack.c.l.b16 %v3656
        %v3728 = vunpack.c.l.b16 %v3657
        %v3729 = vunpack.c.l.b16 %v3658
        %v3730 = vunpack.c.l.b16 %v3659
        %v3731 = vunpack.c.l.b16 %v3660
        %v3732 = vunpack.c.l.b16 %v3661
        %v3733 = vunpack.c.l.b16 %v3662
        %v3734 = vunpack.c.l.b16 %v3663
        %v3735 = vunpack.c.l.b16 %v3664
        %v3736 = vunpack.c.l.b16 %v3665
        %v3737 = vunpack.c.l.b16 %v3666
        %v3738 = vunpack.c.l.b16 %v3667
        %v3739 = vunpack.c.l.b16 %v3668
        %v3740 = vunpack.c.l.b16 %v3669
        %v3741 = vunpack.c.l.b16 %v3670
        %v3742 = vunpack.c.l.b16 %v3671
        %v3743 = vunpack.c.l.b16 %v3672
        %v3744 = vunpack.c.l.b16 %v3673
        %v3745 = vunpack.c.l.b16 %v3674
        %v3746 = vunpack.c.l.b16 %v3675
        %v3747 = vunpack.c.l.b16 %v3676
        %v3748 = vunpack.c.l.b16 %v3677
        %v3749 = vunpack.c.l.b16 %v3678
        %v3750 = vunpack.c.l.b16 %v3679
        %v3751 = vpack.c.b16 %v3720, %v3719
        %v3752 = vpack.c.b16 %v3722, %v3721
        %v3753 = vpack.c.b16 %v3724, %v3723
        %v3754 = vpack.c.b16 %v3726, %v3725
        %v3755 = vpack.c.b16 %v3728, %v3727
        %v3756 = vpack.c.b16 %v3730, %v3729
        %v3757 = vpack.c.b16 %v3732, %v3731
        %v3758 = vpack.c.b16 %v3734, %v3733
        %v3759 = vpack.c.b16 %v3736, %v3735
        %v3760 = vpack.c.b16 %v3738, %v3737
        %v3761 = vpack.c.b16 %v3740, %v3739
        %v3762 = vpack.c.b16 %v3742, %v3741
        %v3763 = vpack.c.b16 %v3744, %v3743
        %v3764 = vpack.c.b16 %v3746, %v3745
        %v3765 = vpack.c.b16 %v3748, %v3747
        %v3766 = vpack.c.b16 %v3750, %v3749
        %3783 = vmatprep.subr.bf16.mxu0 0
        %3784 = vmatpush1.bf16.msra.mxu0 %v3751
        %3785 = vmatprep.subr.bf16.mxu0 0
        %3786 = vmatpush1.bf16.msra.mxu0 %v3752
        %3787 = vmatprep.subr.bf16.mxu0 0
        %3788 = vmatpush1.bf16.msra.mxu0 %v3753
        %3789 = vmatprep.subr.bf16.mxu0 0
        %3790 = vmatpush1.bf16.msra.mxu0 %v3754
        %3791 = vmatprep.subr.bf16.mxu0 0
        %3792 = vmatpush1.bf16.msra.mxu0 %v3755
        %3793 = vmatprep.subr.bf16.mxu0 0
        %3794 = vmatpush1.bf16.msra.mxu0 %v3756
        %3795 = vmatprep.subr.bf16.mxu0 0
        %3796 = vmatpush1.bf16.msra.mxu0 %v3757
        %3797 = vmatprep.subr.bf16.mxu0 0
        %3798 = vmatpush1.bf16.msra.mxu0 %v3758
        %3799 = vmatprep.subr.bf16.mxu0 0
        %3800 = vmatpush1.bf16.msra.mxu0 %v3759
        %3801 = vmatprep.subr.bf16.mxu0 0
        %3802 = vmatpush1.bf16.msra.mxu0 %v3760
        %3803 = vmatprep.subr.bf16.mxu0 0
        %3804 = vmatpush1.bf16.msra.mxu0 %v3761
        %3805 = vmatprep.subr.bf16.mxu0 0
        %3806 = vmatpush1.bf16.msra.mxu0 %v3762
        %3807 = vmatprep.subr.bf16.mxu0 0
        %3808 = vmatpush1.bf16.msra.mxu0 %v3763
        %3809 = vmatprep.subr.bf16.mxu0 0
        %3810 = vmatpush1.bf16.msra.mxu0 %v3764
        %3811 = vmatprep.subr.bf16.mxu0 0
        %3812 = vmatpush1.bf16.msra.mxu0 %v3765
        %3813 = vmatprep.subr.bf16.mxu0 0
        %3814 = vmatpush1.bf16.msra.mxu0 %v3766
        %3815 = vmatprep.mubr.bf16.mxu0 %v3617
        %3816 = vmatmul.mubr.bf16.gmra.mrb[0].mxu0 %v3616
        %v3817 = vpop.f32.mrb[0].mxu0
        %v3818 = vadd.f32 %v3685, %v3817
        %v3819 = vpop.f32.mrb[0].mxu0
        %v3820 = vpop.f32.mrb[0].mxu0
        %v3821 = vadd.f32 %v3685, %v3820
        %v3822 = vpop.f32.mrb[0].mxu0
        %3823 = vmatprep.mubr.bf16.mxu0 %v3619
        %3824 = vmatmul.mubr.bf16.gmra.mrb[0].mxu0 %v3618
        %v3825 = vpop.f32.mrb[0].mxu0
        %v3826 = vadd.f32 %v3685, %v3825
        %v3827 = vpop.f32.mrb[0].mxu0
        %v3828 = vpop.f32.mrb[0].mxu0
        %v3829 = vadd.f32 %v3685, %v3828
        %v3830 = vpop.f32.mrb[0].mxu0
        %3831 = vmatprep.mubr.bf16.mxu0 %v3621
        %3832 = vmatmul.mubr.bf16.gmra.mrb[0].mxu0 %v3620
        %v3833 = vpop.f32.mrb[0].mxu0
        %v3834 = vadd.f32 %v3685, %v3833
        %v3835 = vpop.f32.mrb[0].mxu0
        %v3836 = vpop.f32.mrb[0].mxu0
        %v3837 = vadd.f32 %v3685, %v3836
        %v3838 = vpop.f32.mrb[0].mxu0
        %3839 = vmatprep.mubr.bf16.mxu0 %v3623
        %3840 = vmatmul.mubr.bf16.gmra.mrb[0].mxu0 %v3622
        %v3841 = vpop.f32.mrb[0].mxu0
        %v3842 = vadd.f32 %v3685, %v3841
        %v3843 = vpop.f32.mrb[0].mxu0
        %v3844 = vpop.f32.mrb[0].mxu0
        %v3845 = vadd.f32 %v3685, %v3844
        %v3846 = vpop.f32.mrb[0].mxu0
        %3847 = vmatprep.mubr.bf16.mxu0 %v3625
        %3848 = vmatmul.mubr.bf16.gmra.mrb[0].mxu0 %v3624
        %v3849 = vpop.f32.mrb[0].mxu0
        %v3850 = vadd.f32 %v3685, %v3849
        %v3851 = vpop.f32.mrb[0].mxu0
        %v3852 = vpop.f32.mrb[0].mxu0
        %v3853 = vadd.f32 %v3685, %v3852
        %v3854 = vpop.f32.mrb[0].mxu0
        %3855 = vmatprep.mubr.bf16.mxu0 %v3627
        %3856 = vmatmul.mubr.bf16.gmra.mrb[0].mxu0 %v3626
        %v3857 = vpop.f32.mrb[0].mxu0
        %v3858 = vadd.f32 %v3685, %v3857
        %v3859 = vpop.f32.mrb[0].mxu0
        %v3860 = vpop.f32.mrb[0].mxu0
        %v3861 = vadd.f32 %v3685, %v3860
        %v3862 = vpop.f32.mrb[0].mxu0
        %3863 = vmatprep.mubr.bf16.mxu0 %v3629
        %3864 = vmatmul.mubr.bf16.gmra.mrb[0].mxu0 %v3628
        %v3865 = vpop.f32.mrb[0].mxu0
        %v3866 = vadd.f32 %v3685, %v3865
        %v3867 = vpop.f32.mrb[0].mxu0
        %v3868 = vpop.f32.mrb[0].mxu0
        %v3869 = vadd.f32 %v3685, %v3868
        %v3870 = vpop.f32.mrb[0].mxu0
        %3871 = vmatprep.mubr.bf16.mxu0 %v3631
        %3872 = vmatmul.mubr.bf16.gmra.mrb[0].mxu0 %v3630
        %v3873 = vpop.f32.mrb[0].mxu0
        %v3874 = vadd.f32 %v3685, %v3873
        %v3875 = vpop.f32.mrb[0].mxu0
        %v3876 = vpop.f32.mrb[0].mxu0
        %v3877 = vadd.f32 %v3685, %v3876
        %v3878 = vpop.f32.mrb[0].mxu0
        %3879 = vmatprep.mubr.bf16.mxu0 %v3633
        %3880 = vmatmul.mubr.bf16.gmra.mrb[0].mxu0 %v3632
        %v3881 = vpop.f32.mrb[0].mxu0
        %v3882 = vadd.f32 %v3685, %v3881
        %v3883 = vpop.f32.mrb[0].mxu0
        %v3884 = vpop.f32.mrb[0].mxu0
        %v3885 = vadd.f32 %v3685, %v3884
        %v3886 = vpop.f32.mrb[0].mxu0
        %3887 = vmatprep.mubr.bf16.mxu0 %v3635
        %3888 = vmatmul.mubr.bf16.gmra.mrb[0].mxu0 %v3634
        %v3889 = vpop.f32.mrb[0].mxu0
        %v3890 = vadd.f32 %v3685, %v3889
        %v3891 = vpop.f32.mrb[0].mxu0
        %v3892 = vpop.f32.mrb[0].mxu0
        %v3893 = vadd.f32 %v3685, %v3892
        %v3894 = vpop.f32.mrb[0].mxu0
        %3895 = vmatprep.mubr.bf16.mxu0 %v3637
        %3896 = vmatmul.mubr.bf16.gmra.mrb[0].mxu0 %v3636
        %v3897 = vpop.f32.mrb[0].mxu0
        %v3898 = vadd.f32 %v3685, %v3897
        %v3899 = vpop.f32.mrb[0].mxu0
        %v3900 = vpop.f32.mrb[0].mxu0
        %v3901 = vadd.f32 %v3685, %v3900
        %v3902 = vpop.f32.mrb[0].mxu0
        %3903 = vmatprep.mubr.bf16.mxu0 %v3639
        %3904 = vmatmul.mubr.bf16.gmra.mrb[0].mxu0 %v3638
        %v3905 = vpop.f32.mrb[0].mxu0
        %v3906 = vadd.f32 %v3685, %v3905
        %v3907 = vpop.f32.mrb[0].mxu0
        %v3908 = vpop.f32.mrb[0].mxu0
        %v3909 = vadd.f32 %v3685, %v3908
        %v3910 = vpop.f32.mrb[0].mxu0
        %3911 = vmatprep.mubr.bf16.mxu0 %v3641
        %3912 = vmatmul.mubr.bf16.gmra.mrb[0].mxu0 %v3640
        %v3913 = vpop.f32.mrb[0].mxu0
        %v3914 = vadd.f32 %v3685, %v3913
        %v3915 = vpop.f32.mrb[0].mxu0
        %v3916 = vpop.f32.mrb[0].mxu0
        %v3917 = vadd.f32 %v3685, %v3916
        %v3918 = vpop.f32.mrb[0].mxu0
        %3919 = vmatprep.mubr.bf16.mxu0 %v3643
        %3920 = vmatmul.mubr.bf16.gmra.mrb[0].mxu0 %v3642
        %v3921 = vpop.f32.mrb[0].mxu0
        %v3922 = vadd.f32 %v3685, %v3921
        %v3923 = vpop.f32.mrb[0].mxu0
        %v3924 = vpop.f32.mrb[0].mxu0
        %v3925 = vadd.f32 %v3685, %v3924
        %v3926 = vpop.f32.mrb[0].mxu0
        %3927 = vmatprep.mubr.bf16.mxu0 %v3645
        %3928 = vmatmul.mubr.bf16.gmra.mrb[0].mxu0 %v3644
        %v3929 = vpop.f32.mrb[0].mxu0
        %v3930 = vadd.f32 %v3685, %v3929
        %v3931 = vpop.f32.mrb[0].mxu0
        %v3932 = vpop.f32.mrb[0].mxu0
        %v3933 = vadd.f32 %v3685, %v3932
        %v3934 = vpop.f32.mrb[0].mxu0
        %3935 = vmatprep.mubr.bf16.mxu0 %v3647
        %3936 = vmatmul.mubr.bf16.gmra.mrb[0].mxu0 %v3646
        %v3937 = vpop.f32.mrb[0].mxu0
        %v3938 = vadd.f32 %v3685, %v3937
        %v3939 = vpop.f32.mrb[0].mxu0
        %v3940 = vpop.f32.mrb[0].mxu0
        %v3941 = vadd.f32 %v3685, %v3940
        %v3942 = vpop.f32.mrb[0].mxu0
        %3943 = vdwg.mxu0
        %3944 = vst [vmem:[%s373] sm:$0xff] %v3818
        %3945 = vst [vmem:[%s373 + $0x8] sm:$0xff] %v3821
        %3946 = vst [vmem:[%s373 + $0x10] sm:$0xff] %v3826
        %3947 = vst [vmem:[%s373 + $0x18] sm:$0xff] %v3829
        %3948 = vst [vmem:[%s373 + $0x20] sm:$0xff] %v3834
        %3949 = vst [vmem:[%s373 + $0x28] sm:$0xff] %v3837
        %3950 = vst [vmem:[%s373 + $0x30] sm:$0xff] %v3842
        %3951 = vst [vmem:[%s373 + $0x38] sm:$0xff] %v3845
        %3952 = vst [vmem:[%s373 + $0x40] sm:$0xff] %v3850
        %3953 = vst [vmem:[%s373 + $0x48] sm:$0xff] %v3853
        %3954 = vst [vmem:[%s373 + $0x50] sm:$0xff] %v3858
        %3955 = vst [vmem:[%s373 + $0x58] sm:$0xff] %v3861
        %3956 = vst [vmem:[%s373 + $0x60] sm:$0xff] %v3866
        %3957 = vst [vmem:[%s373 + $0x68] sm:$0xff] %v3869
        %3958 = vst [vmem:[%s373 + $0x70] sm:$0xff] %v3874
        %3959 = vst [vmem:[%s373 + $0x78] sm:$0xff] %v3877
        %3960 = vst [vmem:[%s373 + $0x80] sm:$0xff] %v3882
        %3961 = vst [vmem:[%s373 + $0x88] sm:$0xff] %v3885
        %3962 = vst [vmem:[%s373 + $0x90] sm:$0xff] %v3890
        %3963 = vst [vmem:[%s373 + $0x98] sm:$0xff] %v3893
        %3964 = vst [vmem:[%s373 + $0xa0] sm:$0xff] %v3898
        %3965 = vst [vmem:[%s373 + $0xa8] sm:$0xff] %v3901
        %3966 = vst [vmem:[%s373 + $0xb0] sm:$0xff] %v3906
        %3967 = vst [vmem:[%s373 + $0xb8] sm:$0xff] %v3909
        %3968 = vst [vmem:[%s373 + $0xc0] sm:$0xff] %v3914
        %3969 = vst [vmem:[%s373 + $0xc8] sm:$0xff] %v3917
        %3970 = vst [vmem:[%s373 + $0xd0] sm:$0xff] %v3922
        %3971 = vst [vmem:[%s373 + $0xd8] sm:$0xff] %v3925
        %3972 = vst [vmem:[%s373 + $0xe0] sm:$0xff] %v3930
        %3973 = vst [vmem:[%s373 + $0xe8] sm:$0xff] %v3933
        %3974 = vst [vmem:[%s373 + $0xf0] sm:$0xff] %v3938
        %3975 = vst [vmem:[%s373 + $0xf8] sm:$0xff] %v3941
        %s3976 = sand.u32 %s252, 1
        %s3977 = scalar_lea.sflag [#allocation4], %s3976
        %s3978 = sand.u32 %s252, 1
        %s3979 = smul.addr %s3978, 256
        %s3980 = scalar_lea.vmem [#allocation3], %s3979
        // Predicated region
        $region61: #{tpu_custom_call.1} parent=59 // pred_check
          %p3981 = pneg %p262
        $region62: #{tpu_custom_call.1} parent=59 // pred_check_branch
          %3983 = sbr.rel (%p3981) target = $region64
        $region63: #{tpu_custom_call.1} parent=59 // pred_region
          %s3984 = smul.u32 16, %s24
          %s3986 = ssub.s32 4096, 4096
          %3987 = vsyncadd %s3977, %s3986
          %s3988 = smul.addr %s3984, 2
          %s3989 = smul.addr %s3988, 128
          %s3990 = scalar_lea.hbm %s10, %s3989
          %s3991 = sshll.u32 %s3980, 4
          %s3992 = int_to_ptr.vmem [resolvable:$true] %s3991
          %3997 = dma.vmem_to_hbm [thread:$0]  %s3992, 4096, %s3990, %s3977, 128, 128, 8
        $region64: #{tpu_custom_call.1} parent=59 // pred_fallthru
          _
      $region60: #{tpu_custom_call.1} parent=5 // pred_fallthru
        _
      %p3998 = scmp.le.s32.totalorder 2, %s19
      // Predicated region
      $region65: #{tpu_custom_call.1} parent=5 // pred_check
        %p3999 = pneg %p3998
      $region66: #{tpu_custom_call.1} parent=5 // pred_check_branch
        %4001 = sbr.rel (%p3999) target = $region68
      $region67: #{tpu_custom_call.1} parent=5 // pred_region
        %s4002 = ssub.s32 %s19, 2
        // Predicated region
        $region69: #{tpu_custom_call.1} parent=67 // pred_check
          %p4003 = pneg %p268
        $region70: #{tpu_custom_call.1} parent=67 // pred_check_branch
          %4005 = sbr.rel (%p4003) target = $region72
        $region71: #{tpu_custom_call.1} parent=67 // pred_region
          %s4006 = sand.u32 %s253, 1
          %s4007 = scalar_lea.sflag [#allocation4], %s4006
          %s4008 = sand.u32 %s253, 1
          %s4009 = smul.addr %s4008, 256
          %s4010 = scalar_lea.vmem [#allocation3], %s4009
          %4011 = dma.done %s4007, 4096
        $region72: #{tpu_custom_call.1} parent=67 // pred_fallthru
          _
      $region68: #{tpu_custom_call.1} parent=5 // pred_fallthru
        _
    $region6: #{tpu_custom_call.1} parent=1 // loop_footer
      %s23 = sadd.s32 1, %s19
    $region7: #{tpu_custom_call.1} parent=1 // loop_footer_branch
      %18 = sbr.rel target = $region3
    $region8: #{tpu_custom_call.1} parent=1 // loop_exit
      _
    %4012 = vsyncpa [#allocation4], 1
    %s4013 = scalar_lea.sflag [#allocation4], 1
    %4014 = vsyncpa %s4013, 1

</llo_original>
